<compile_context>
chip_gen: v7x
topology: tpu7x:2x2x1
jax: 0.10.0
libtpu: 0.0.40
codegen_flags: <defaults>
</compile_context>

<pallas_src>
import jax
import jax.numpy as jnp
import numpy as np
from jax.experimental import pallas as pl
from jax.experimental.pallas import tpu as pltpu

_LANE = 128
_SUBLANE = 8


def _round_up(x, m):
    return (x + m - 1) // m * m


def _lane_pad(n):
    """Pad n to a multiple of 128 only when the inflation stays <= 2x."""
    n128 = _round_up(n, _LANE)
    return n128 if n128 <= 2 * n else n


def _pad_to(x, shape):
    pads = tuple((0, t - s) for s, t in zip(x.shape, shape))
    if any(hi for _, hi in pads):
        return jnp.pad(x, pads)
    return x


def _matrix_attn_kernel(elen_ref,   # (BB, 1, 1)       int32
                        dec_ref,    # (BB, Tdp, linin) f32
                        wt_ref,     # (linin, LOb)     f32  (W^T, maybe padded)
                        b_ref,      # (1, LOb)         f32
                        emb_ref,    # (BB, Teb, LOb)   f32
                        out_ref,    # (BB, Tdp, LOb)
                        attn_ref):  # (BB, Tdp, Teb)
    BB, Tdp, linin = dec_ref.shape
    _, Teb, LOb = emb_ref.shape

    # Shared linear projection as one flattened, well-shaped MXU matmul.
    # (Tdp is a multiple of 8, so this reshape is a pure layout no-op.)
    dec2 = dec_ref[...].reshape(BB * Tdp, linin)
    decsmall = jnp.dot(dec2, wt_ref[...],
                       preferred_element_type=jnp.float32) + b_ref[...]
    decsmall = decsmall.reshape(BB, Tdp, LOb)

    emb = emb_ref[...]                                   # (BB, Teb, LOb)

    # scores[b,t,e] = sum_d decsmall[b,t,d] * emb[b,e,d]  (no transpose)
    scores = jax.lax.dot_general(
        decsmall, emb,
        dimension_numbers=(((2,), (2,)), ((0,), (0,))),
        preferred_element_type=jnp.float32)              # (BB, Tdp, Teb)

    # Fused length mask + softmax over the (possibly padded) Te axis.
    elen = elen_ref[...]                                           # (BB,1,1)
    col = jax.lax.broadcasted_iota(jnp.int32, (1, 1, Teb), 2)      # (1,1,Teb)
    valid = col < elen                                             # (BB,1,Teb)

    masked = jnp.where(valid, scores, jnp.float32(-3.0e38))
    m = jnp.max(masked, axis=-1, keepdims=True)
    p = jnp.where(valid, jnp.exp(scores - m), 0.0)
    denom = jnp.sum(p, axis=-1, keepdims=True)
    attn = p * pl.reciprocal(denom, approx=False)

    # out[b,t,d] = sum_e attn[b,t,e] * emb[b,e,d]
    out = jax.lax.dot_general(
        attn, emb,
        dimension_numbers=(((2,), (1,)), ((0,), (0,))),
        preferred_element_type=jnp.float32)              # (BB, Tdp, LOb)

    attn_ref[...] = attn.astype(attn_ref.dtype)
    out_ref[...] = out.astype(out_ref.dtype)


def _choose_block_b(B, Tdp, Teb, LOb, linin):
    """Pick the per-step batch block and estimate the VMEM footprint (bytes)."""
    # Streamed tiles (dec, emb, out, attn) are double-buffered by the Pallas
    # pipeline; the intermediates (decsmall, scores, p) are live once.
    per_b = 4 * (2 * (Tdp * linin + Teb * LOb + Tdp * LOb + Tdp * Teb)
                 + Tdp * LOb + 2 * Tdp * Teb)
    fixed = 4 * (linin * LOb + LOb)          # weight + bias (single-buffered)
    budget = 36 * 1024 * 1024                # fits v7x 64 MiB/TC with headroom

    # Keep at least two grid steps when the batch allows it, so the "parallel"
    # grid axis can be sharded across v7x's two TensorCores.
    b8 = _round_up(max(B, 1), _SUBLANE)
    if b8 >= 2 * _SUBLANE:
        max_bb = max(_SUBLANE, (b8 // 2) // _SUBLANE * _SUBLANE)
    else:
        max_bb = _SUBLANE
    max_bb = min(max_bb, 512)

    bb = _SUBLANE
    while bb * 2 <= max_bb and fixed + 2 * bb * per_b <= budget:
        bb *= 2
    footprint = fixed + bb * per_b
    return bb, footprint


def matrix_attn(dec, emb, elen, weight, bias):
    """Pallas implementation of MatrixAttn.forward.

    dec:    (B, Td, linin) or (B, linin) f32
    emb:    (B, Te, linout) f32
    elen:   (B,) int lengths
    weight: (linout, linin) f32   (PyTorch nn.Linear weight)
    bias:   (linout,) f32
    returns (out, attn): (B, Td, linout), (B, Td, Te)
    """
    if dec.ndim == 2:
        dec = dec[:, None, :]
    B, Td, linin = dec.shape
    _, Te, linout = emb.shape
    out_dtype = dec.dtype
    f32 = jnp.float32

    Tdp = _round_up(Td, _SUBLANE)   # keeps the in-kernel flatten layout-clean
    Teb = _lane_pad(Te)             # lane-dense stores only if <= 2x inflation
    LOb = _lane_pad(linout)

    bb, footprint = _choose_block_b(B, Tdp, Teb, LOb, linin)
    steps = -(-B // bb)
    if steps > 1 and steps % 2 == 1:
        steps += 1                   # even step count -> both v7x TCs stay busy
    Bp = steps * bb

    # Wrapper-side pads are skipped when already aligned.
    dec_p = _pad_to(dec.astype(f32), (Bp, Tdp, linin))
    emb_p = _pad_to(emb.astype(f32), (Bp, Teb, LOb))
    # TODO(synk): weight.T / bias reshape could be hoisted by the caller when
    # the parameters are static across calls.
    wt_p = _pad_to(weight.astype(f32).T, (linin, LOb))
    b_p = _pad_to(bias.astype(f32).reshape(1, linout), (1, LOb))
    elen_p = jnp.full((Bp,), Te, jnp.int32).at[:B].set(
        elen.astype(jnp.int32)).reshape(Bp, 1, 1)

    vmem_limit = int(min(56 * 1024 * 1024,
                         max(2 * footprint, 16 * 1024 * 1024)))

    def run(single_buffer_weights):
        wkw = ({"pipeline_mode": pl.Buffered(1)}
               if single_buffer_weights else {})
        grid_spec = pltpu.PrefetchScalarGridSpec(
            num_scalar_prefetch=0,
            grid=(Bp // bb,),
            in_specs=[
                pl.BlockSpec((bb, 1, 1), lambda i: (i, 0, 0)),
                pl.BlockSpec((bb, Tdp, linin), lambda i: (i, 0, 0)),
                pl.BlockSpec((linin, LOb), lambda i: (0, 0), **wkw),
                pl.BlockSpec((1, LOb), lambda i: (0, 0), **wkw),
                pl.BlockSpec((bb, Teb, LOb), lambda i: (i, 0, 0)),
            ],
            out_specs=[
                pl.BlockSpec((bb, Tdp, LOb), lambda i: (i, 0, 0)),
                pl.BlockSpec((bb, Tdp, Teb), lambda i: (i, 0, 0)),
            ],
        )
        return pl.pallas_call(
            _matrix_attn_kernel,
            grid_spec=grid_spec,
            out_shape=(
                jax.ShapeDtypeStruct((Bp, Tdp, LOb), f32),
                jax.ShapeDtypeStruct((Bp, Tdp, Teb), f32),
            ),
            compiler_params=pltpu.CompilerParams(
                dimension_semantics=("parallel",),
                vmem_limit_bytes=vmem_limit),
        )(elen_p, dec_p, wt_p, b_p, emb_p)

    try:
        out_p, attn_p = run(True)
    except Exception:
        # Older JAX versions may reject Buffered(1) on the main pipeline.
        out_p, attn_p = run(False)

    out = out_p[:B, :Td, :linout].astype(out_dtype)
    attn = attn_p[:B, :Td, :Te].astype(out_dtype)
    return out, attn


def matrix_attn_reference(dec, emb, elen, weight, bias):
    """Pure-JAX reference mirroring the PyTorch forward."""
    if dec.ndim == 2:
        dec = dec[:, None, :]
    Te = emb.shape[1]
    emask = (jnp.arange(Te)[None, :] >= elen[:, None])[:, None, :]   # (B,1,Te)
    decsmall = dec @ weight.T + bias
    unnorm = jnp.einsum('btd,bed->bte', decsmall, emb)
    unnorm = jnp.where(emask, -jnp.inf, unnorm)
    attn = jax.nn.softmax(unnorm, axis=2)
    out = jnp.einsum('bte,bed->btd', attn, emb)
    return out, attn


if __name__ == "__main__":
    B, Td, Te = 2, 8, 8
    linin, linout = 32, 16

    key = jax.random.PRNGKey(0)
    k_dec, k_emb, k_w, k_b = jax.random.split(key, 4)

    dec = jax.random.normal(k_dec, (B, Td, linin), dtype=jnp.float32)
    emb = jax.random.normal(k_emb, (B, Te, linout), dtype=jnp.float32)
    elen = jnp.array([5, 8], dtype=jnp.int32)

    # Deterministic nn.Linear(linin, linout)-style init.
    bound = 1.0 / np.sqrt(linin)
    weight = jax.random.uniform(k_w, (linout, linin), jnp.float32, -bound, bound)
    bias = jax.random.uniform(k_b, (linout,), jnp.float32, -bound, bound)

    out, attn = matrix_attn(dec, emb, elen, weight, bias)
    jax.block_until_ready((out, attn))

    out_ref, attn_ref = matrix_attn_reference(dec, emb, elen, weight, bias)
    np.testing.assert_allclose(np.asarray(out), np.asarray(out_ref),
                               rtol=1e-5, atol=1e-5)
    np.testing.assert_allclose(np.asarray(attn), np.asarray(attn_ref),
                               rtol=1e-5, atol=1e-5)

    print("KERNEL_OK")
</pallas_src>

<mosaic_0001>
module attributes {stable_mosaic.version = 11 : i64} {
  func.func @_matrix_attn_kernel(%arg0: i32, %arg1: memref<8x1x1xi32, #tpu.memory_space<vmem>>, %arg2: memref<8x8x32xf32, #tpu.memory_space<vmem>>, %arg3: memref<32x16xf32, #tpu.memory_space<vmem>>, %arg4: memref<1x16xf32, #tpu.memory_space<vmem>>, %arg5: memref<8x8x16xf32, #tpu.memory_space<vmem>>, %arg6: memref<8x8x16xf32, #tpu.memory_space<vmem>>, %arg7: memref<8x8x8xf32, #tpu.memory_space<vmem>>) attributes {dimension_semantics = [#tpu.dimension_semantics<parallel>], iteration_bounds = array<i64: 1>, scalar_prefetch = 0 : i64, scratch_operands = 0 : i64, tpu.core_type = #tpu.core_type<tc>, window_params = [{transform_indices = @transform_0, window_bounds = array<i64: 8, 1, 1>}, {transform_indices = @transform_1, window_bounds = array<i64: 8, 8, 32>}, {pipeline_mode = #tpu.pipeline_mode<synchronous>, transform_indices = @transform_2, window_bounds = array<i64: 32, 16>}, {pipeline_mode = #tpu.pipeline_mode<synchronous>, transform_indices = @transform_3, window_bounds = array<i64: 1, 16>}, {transform_indices = @transform_4, window_bounds = array<i64: 8, 8, 16>}, {transform_indices = @transform_5, window_bounds = array<i64: 8, 8, 16>}, {transform_indices = @transform_6, window_bounds = array<i64: 8, 8, 8>}]} {
    %c0 = arith.constant 0 : index
    %c0_0 = arith.constant 0 : index
    %c0_1 = arith.constant 0 : index
    %0 = vector.load %arg2[%c0, %c0_0, %c0_1] : memref<8x8x32xf32, #tpu.memory_space<vmem>>, vector<8x8x32xf32>
    %1 = vector.shape_cast %0 : vector<8x8x32xf32> to vector<64x32xf32>
    %c0_2 = arith.constant 0 : index
    %c0_3 = arith.constant 0 : index
    %2 = vector.load %arg3[%c0_2, %c0_3] : memref<32x16xf32, #tpu.memory_space<vmem>>, vector<32x16xf32>
    %cst = arith.constant dense<0.000000e+00> : vector<64x16xf32>
    %3 = tpu.matmul %1, %2, %cst {dimension_numbers = #tpu.dot_dimension_numbers<[1], [0], [0], [1], [0, 0, 1, 1], [], []>} : vector<64x32xf32>, vector<32x16xf32>, vector<64x16xf32> -> vector<64x16xf32>
    %c0_4 = arith.constant 0 : index
    %c0_5 = arith.constant 0 : index
    %4 = vector.load %arg4[%c0_4, %c0_5] : memref<1x16xf32, #tpu.memory_space<vmem>>, vector<1x16xf32>
    %5 = vector.broadcast %4 : vector<1x16xf32> to vector<64x16xf32>
    %6 = arith.addf %3, %5 : vector<64x16xf32>
    %7 = vector.shape_cast %6 : vector<64x16xf32> to vector<8x8x16xf32>
    %c0_6 = arith.constant 0 : index
    %c0_7 = arith.constant 0 : index
    %c0_8 = arith.constant 0 : index
    %8 = vector.load %arg5[%c0_6, %c0_7, %c0_8] : memref<8x8x16xf32, #tpu.memory_space<vmem>>, vector<8x8x16xf32>
    %cst_9 = arith.constant dense<0.000000e+00> : vector<8x8x8xf32>
    %9 = tpu.matmul %7, %8, %cst_9 {dimension_numbers = #tpu.dot_dimension_numbers<[2], [2], [1], [1], [0, 0, 0, 1, 1, 1], [0], [0]>} : vector<8x8x16xf32>, vector<8x8x16xf32>, vector<8x8x8xf32> -> vector<8x8x8xf32>
    %c0_10 = arith.constant 0 : index
    %c0_11 = arith.constant 0 : index
    %c0_12 = arith.constant 0 : index
    %10 = vector.load %arg1[%c0_10, %c0_11, %c0_12] : memref<8x1x1xi32, #tpu.memory_space<vmem>>, vector<8x1x1xi32>
    %11 = tpu.iota {dimensions = array<i32: 2>} : vector<1x1x8xi32>
    %12 = vector.broadcast %11 : vector<1x1x8xi32> to vector<8x1x8xi32>
    %13 = vector.broadcast %10 : vector<8x1x1xi32> to vector<8x1x8xi32>
    %14 = arith.cmpi slt, %12, %13 : vector<8x1x8xi32>
    %cst_13 = arith.constant -3.000000e+38 : f32
    %15 = vector.shape_cast %14 : vector<8x1x8xi1> to vector<8x1x8xi1>
    %16 = vector.broadcast %15 : vector<8x1x8xi1> to vector<8x8x8xi1>
    %17 = vector.broadcast %cst_13 : f32 to vector<8x8x8xf32>
    %18 = arith.select %16, %9, %17 : vector<8x8x8xi1>, vector<8x8x8xf32>
    %cst_14 = arith.constant dense<0xFF800000> : vector<8x8xf32>
    %19 = vector.multi_reduction <maximumf>, %18, %cst_14 [2] : vector<8x8x8xf32> to vector<8x8xf32>
    %20 = vector.shape_cast %19 : vector<8x8xf32> to vector<8x8x1xf32>
    %21 = vector.broadcast %20 : vector<8x8x1xf32> to vector<8x8x8xf32>
    %22 = arith.subf %9, %21 : vector<8x8x8xf32>
    %23 = math.exp %22 : vector<8x8x8xf32>
    %cst_15 = arith.constant 0.000000e+00 : f32
    %24 = vector.shape_cast %14 : vector<8x1x8xi1> to vector<8x1x8xi1>
    %25 = vector.broadcast %24 : vector<8x1x8xi1> to vector<8x8x8xi1>
    %26 = vector.broadcast %cst_15 : f32 to vector<8x8x8xf32>
    %27 = arith.select %25, %23, %26 : vector<8x8x8xi1>, vector<8x8x8xf32>
    %cst_16 = arith.constant dense<0.000000e+00> : vector<8x8xf32>
    %28 = vector.multi_reduction <add>, %27, %cst_16 [2] : vector<8x8x8xf32> to vector<8x8xf32>
    %29 = vector.shape_cast %28 : vector<8x8xf32> to vector<8x8x1xf32>
    %30 = tpu.reciprocal %29 : vector<8x8x1xf32> -> vector<8x8x1xf32>
    %31 = vector.broadcast %30 : vector<8x8x1xf32> to vector<8x8x8xf32>
    %32 = arith.mulf %27, %31 : vector<8x8x8xf32>
    %cst_17 = arith.constant dense<0.000000e+00> : vector<8x8x16xf32>
    %33 = tpu.matmul %32, %8, %cst_17 {dimension_numbers = #tpu.dot_dimension_numbers<[2], [1], [1], [2], [0, 0, 0, 1, 1, 2], [0], [0]>} : vector<8x8x8xf32>, vector<8x8x16xf32>, vector<8x8x16xf32> -> vector<8x8x16xf32>
    %c0_18 = arith.constant 0 : index
    %c0_19 = arith.constant 0 : index
    %c0_20 = arith.constant 0 : index
    %34 = vector.load %arg7[%c0_18, %c0_19, %c0_20] : memref<8x8x8xf32, #tpu.memory_space<vmem>>, vector<8x8x8xf32>
    tpu.vector_store %arg7[%c0_18, %c0_19, %c0_20], %32 {strides = array<i32>} : memref<8x8x8xf32, #tpu.memory_space<vmem>>, vector<8x8x8xf32>,
    %c0_21 = arith.constant 0 : index
    %c0_22 = arith.constant 0 : index
    %c0_23 = arith.constant 0 : index
    %35 = vector.load %arg6[%c0_21, %c0_22, %c0_23] : memref<8x8x16xf32, #tpu.memory_space<vmem>>, vector<8x8x16xf32>
    tpu.vector_store %arg6[%c0_21, %c0_22, %c0_23], %33 {strides = array<i32>} : memref<8x8x16xf32, #tpu.memory_space<vmem>>, vector<8x8x16xf32>,
    return
  }
  func.func @transform_0(%arg0: i32) -> (i32, i32, i32) {
    %c0_i32 = arith.constant 0 : i32
    %c0_i32_0 = arith.constant 0 : i32
    %c0_i32_1 = arith.constant 0 : i32
    return %arg0, %c0_i32, %c0_i32_0 : i32, i32, i32
  }
  func.func @transform_1(%arg0: i32) -> (i32, i32, i32) {
    %c0_i32 = arith.constant 0 : i32
    %c0_i32_0 = arith.constant 0 : i32
    %c0_i32_1 = arith.constant 0 : i32
    return %arg0, %c0_i32, %c0_i32_0 : i32, i32, i32
  }
  func.func @transform_2(%arg0: i32) -> (i32, i32) {
    %c0_i32 = arith.constant 0 : i32
    %c0_i32_0 = arith.constant 0 : i32
    %c0_i32_1 = arith.constant 0 : i32
    return %c0_i32, %c0_i32_0 : i32, i32
  }
  func.func @transform_3(%arg0: i32) -> (i32, i32) {
    %c0_i32 = arith.constant 0 : i32
    %c0_i32_0 = arith.constant 0 : i32
    %c0_i32_1 = arith.constant 0 : i32
    return %c0_i32, %c0_i32_0 : i32, i32
  }
  func.func @transform_4(%arg0: i32) -> (i32, i32, i32) {
    %c0_i32 = arith.constant 0 : i32
    %c0_i32_0 = arith.constant 0 : i32
    %c0_i32_1 = arith.constant 0 : i32
    return %arg0, %c0_i32, %c0_i32_0 : i32, i32, i32
  }
  func.func @transform_5(%arg0: i32) -> (i32, i32, i32) {
    %c0_i32 = arith.constant 0 : i32
    %c0_i32_0 = arith.constant 0 : i32
    %c0_i32_1 = arith.constant 0 : i32
    return %arg0, %c0_i32, %c0_i32_0 : i32, i32, i32
  }
  func.func @transform_6(%arg0: i32) -> (i32, i32, i32) {
    %c0_i32 = arith.constant 0 : i32
    %c0_i32_0 = arith.constant 0 : i32
    %c0_i32_1 = arith.constant 0 : i32
    return %arg0, %c0_i32, %c0_i32_0 : i32, i32, i32
  }
}

module attributes {stable_mosaic.version = 11 : i64} {
  func.func @_matrix_attn_kernel(%arg0: i32, %arg1: memref<8x1x1xi32, #tpu.memory_space<vmem>>, %arg2: memref<8x8x32xf32, #tpu.memory_space<vmem>>, %arg3: memref<32x16xf32, #tpu.memory_space<vmem>>, %arg4: memref<1x16xf32, #tpu.memory_space<vmem>>, %arg5: memref<8x8x16xf32, #tpu.memory_space<vmem>>, %arg6: memref<8x8x16xf32, #tpu.memory_space<vmem>>, %arg7: memref<8x8x8xf32, #tpu.memory_space<vmem>>) attributes {dimension_semantics = [#tpu.dimension_semantics<parallel>], iteration_bounds = array<i64: 1>, scalar_prefetch = 0 : i64, scratch_operands = 0 : i64, tpu.core_type = #tpu.core_type<tc>, window_params = [{transform_indices = @transform_0, window_bounds = array<i64: 8, 1, 1>}, {transform_indices = @transform_1, window_bounds = array<i64: 8, 8, 32>}, {pipeline_mode = #tpu.pipeline_mode<synchronous>, transform_indices = @transform_2, window_bounds = array<i64: 32, 16>}, {pipeline_mode = #tpu.pipeline_mode<synchronous>, transform_indices = @transform_3, window_bounds = array<i64: 1, 16>}, {transform_indices = @transform_4, window_bounds = array<i64: 8, 8, 16>}, {transform_indices = @transform_5, window_bounds = array<i64: 8, 8, 16>}, {transform_indices = @transform_6, window_bounds = array<i64: 8, 8, 8>}]} {
    %c0 = arith.constant 0 : index
    %c0_0 = arith.constant 0 : index
    %c0_1 = arith.constant 0 : index
    %0 = vector.load %arg2[%c0, %c0_0, %c0_1] : memref<8x8x32xf32, #tpu.memory_space<vmem>>, vector<8x8x32xf32>
    %1 = vector.shape_cast %0 : vector<8x8x32xf32> to vector<64x32xf32>
    %c0_2 = arith.constant 0 : index
    %c0_3 = arith.constant 0 : index
    %2 = vector.load %arg3[%c0_2, %c0_3] : memref<32x16xf32, #tpu.memory_space<vmem>>, vector<32x16xf32>
    %cst = arith.constant dense<0.000000e+00> : vector<64x16xf32>
    %3 = tpu.matmul %1, %2, %cst {dimension_numbers = #tpu.dot_dimension_numbers<[1], [0], [0], [1], [0, 0, 1, 1], [], []>} : vector<64x32xf32>, vector<32x16xf32>, vector<64x16xf32> -> vector<64x16xf32>
    %c0_4 = arith.constant 0 : index
    %c0_5 = arith.constant 0 : index
    %4 = vector.load %arg4[%c0_4, %c0_5] : memref<1x16xf32, #tpu.memory_space<vmem>>, vector<1x16xf32>
    %5 = vector.broadcast %4 : vector<1x16xf32> to vector<64x16xf32>
    %6 = arith.addf %3, %5 : vector<64x16xf32>
    %7 = vector.shape_cast %6 : vector<64x16xf32> to vector<8x8x16xf32>
    %c0_6 = arith.constant 0 : index
    %c0_7 = arith.constant 0 : index
    %c0_8 = arith.constant 0 : index
    %8 = vector.load %arg5[%c0_6, %c0_7, %c0_8] : memref<8x8x16xf32, #tpu.memory_space<vmem>>, vector<8x8x16xf32>
    %cst_9 = arith.constant dense<0.000000e+00> : vector<8x8x8xf32>
    %9 = tpu.matmul %7, %8, %cst_9 {dimension_numbers = #tpu.dot_dimension_numbers<[2], [2], [1], [1], [0, 0, 0, 1, 1, 1], [0], [0]>} : vector<8x8x16xf32>, vector<8x8x16xf32>, vector<8x8x8xf32> -> vector<8x8x8xf32>
    %c0_10 = arith.constant 0 : index
    %c0_11 = arith.constant 0 : index
    %c0_12 = arith.constant 0 : index
    %10 = vector.load %arg1[%c0_10, %c0_11, %c0_12] : memref<8x1x1xi32, #tpu.memory_space<vmem>>, vector<8x1x1xi32>
    %11 = tpu.iota {dimensions = array<i32: 2>} : vector<1x1x8xi32>
    %12 = vector.broadcast %11 : vector<1x1x8xi32> to vector<8x1x8xi32>
    %13 = vector.broadcast %10 : vector<8x1x1xi32> to vector<8x1x8xi32>
    %14 = arith.cmpi slt, %12, %13 : vector<8x1x8xi32>
    %cst_13 = arith.constant -3.000000e+38 : f32
    %15 = vector.shape_cast %14 : vector<8x1x8xi1> to vector<8x1x8xi1>
    %16 = vector.broadcast %15 : vector<8x1x8xi1> to vector<8x8x8xi1>
    %17 = vector.broadcast %cst_13 : f32 to vector<8x8x8xf32>
    %18 = arith.select %16, %9, %17 : vector<8x8x8xi1>, vector<8x8x8xf32>
    %cst_14 = arith.constant dense<0xFF800000> : vector<8x8xf32>
    %19 = vector.multi_reduction <maximumf>, %18, %cst_14 [2] : vector<8x8x8xf32> to vector<8x8xf32>
    %20 = vector.shape_cast %19 : vector<8x8xf32> to vector<8x8x1xf32>
    %21 = vector.broadcast %20 : vector<8x8x1xf32> to vector<8x8x8xf32>
    %22 = arith.subf %9, %21 : vector<8x8x8xf32>
    %23 = math.exp %22 : vector<8x8x8xf32>
    %cst_15 = arith.constant 0.000000e+00 : f32
    %24 = vector.shape_cast %14 : vector<8x1x8xi1> to vector<8x1x8xi1>
    %25 = vector.broadcast %24 : vector<8x1x8xi1> to vector<8x8x8xi1>
    %26 = vector.broadcast %cst_15 : f32 to vector<8x8x8xf32>
    %27 = arith.select %25, %23, %26 : vector<8x8x8xi1>, vector<8x8x8xf32>
    %cst_16 = arith.constant dense<0.000000e+00> : vector<8x8xf32>
    %28 = vector.multi_reduction <add>, %27, %cst_16 [2] : vector<8x8x8xf32> to vector<8x8xf32>
    %29 = vector.shape_cast %28 : vector<8x8xf32> to vector<8x8x1xf32>
    %30 = tpu.reciprocal %29 : vector<8x8x1xf32> -> vector<8x8x1xf32>
    %31 = vector.broadcast %30 : vector<8x8x1xf32> to vector<8x8x8xf32>
    %32 = arith.mulf %27, %31 : vector<8x8x8xf32>
    %cst_17 = arith.constant dense<0.000000e+00> : vector<8x8x16xf32>
    %33 = tpu.matmul %32, %8, %cst_17 {dimension_numbers = #tpu.dot_dimension_numbers<[2], [1], [1], [2], [0, 0, 0, 1, 1, 2], [0], [0]>} : vector<8x8x8xf32>, vector<8x8x16xf32>, vector<8x8x16xf32> -> vector<8x8x16xf32>
    %c0_18 = arith.constant 0 : index
    %c0_19 = arith.constant 0 : index
    %c0_20 = arith.constant 0 : index
    %34 = vector.load %arg7[%c0_18, %c0_19, %c0_20] : memref<8x8x8xf32, #tpu.memory_space<vmem>>, vector<8x8x8xf32>
    tpu.vector_store %arg7[%c0_18, %c0_19, %c0_20], %32 {strides = array<i32>} : memref<8x8x8xf32, #tpu.memory_space<vmem>>, vector<8x8x8xf32>,
    %c0_21 = arith.constant 0 : index
    %c0_22 = arith.constant 0 : index
    %c0_23 = arith.constant 0 : index
    %35 = vector.load %arg6[%c0_21, %c0_22, %c0_23] : memref<8x8x16xf32, #tpu.memory_space<vmem>>, vector<8x8x16xf32>
    tpu.vector_store %arg6[%c0_21, %c0_22, %c0_23], %33 {strides = array<i32>} : memref<8x8x16xf32, #tpu.memory_space<vmem>>, vector<8x8x16xf32>,
    return
  }
  func.func @transform_0(%arg0: i32) -> (i32, i32, i32) {
    %c0_i32 = arith.constant 0 : i32
    %c0_i32_0 = arith.constant 0 : i32
    %c0_i32_1 = arith.constant 0 : i32
    return %arg0, %c0_i32, %c0_i32_0 : i32, i32, i32
  }
  func.func @transform_1(%arg0: i32) -> (i32, i32, i32) {
    %c0_i32 = arith.constant 0 : i32
    %c0_i32_0 = arith.constant 0 : i32
    %c0_i32_1 = arith.constant 0 : i32
    return %arg0, %c0_i32, %c0_i32_0 : i32, i32, i32
  }
  func.func @transform_2(%arg0: i32) -> (i32, i32) {
    %c0_i32 = arith.constant 0 : i32
    %c0_i32_0 = arith.constant 0 : i32
    %c0_i32_1 = arith.constant 0 : i32
    return %c0_i32, %c0_i32_0 : i32, i32
  }
  func.func @transform_3(%arg0: i32) -> (i32, i32) {
    %c0_i32 = arith.constant 0 : i32
    %c0_i32_0 = arith.constant 0 : i32
    %c0_i32_1 = arith.constant 0 : i32
    return %c0_i32, %c0_i32_0 : i32, i32
  }
  func.func @transform_4(%arg0: i32) -> (i32, i32, i32) {
    %c0_i32 = arith.constant 0 : i32
    %c0_i32_0 = arith.constant 0 : i32
    %c0_i32_1 = arith.constant 0 : i32
    return %arg0, %c0_i32, %c0_i32_0 : i32, i32, i32
  }
  func.func @transform_5(%arg0: i32) -> (i32, i32, i32) {
    %c0_i32 = arith.constant 0 : i32
    %c0_i32_0 = arith.constant 0 : i32
    %c0_i32_1 = arith.constant 0 : i32
    return %arg0, %c0_i32, %c0_i32_0 : i32, i32, i32
  }
  func.func @transform_6(%arg0: i32) -> (i32, i32, i32) {
    %c0_i32 = arith.constant 0 : i32
    %c0_i32_0 = arith.constant 0 : i32
    %c0_i32_1 = arith.constant 0 : i32
    return %arg0, %c0_i32, %c0_i32_0 : i32, i32, i32
  }
}

</mosaic_0001>

<llo_original>
// kernel: tpu_custom_call.1
$region0: #{tpu_custom_call.1}
  #allocation0 [shape = 'u32[]', space=smem, size = 0x4, offset = 0x4, fixed_abs, tag = 'smem constant byte address 0x4 - core index']
  #allocation1 [shape = 'u32[144,128]{1,0:T(1,128)}', space=vmem, size = 0x12000, scoped, tag = 'internal scratch']
  %s0 = inlined_call_operand.vmem [shape: s32[8,1,1], index: 0, kind: input, shape index: {}]
  %s1 = inlined_call_operand.hbm [shape: f32[8,8,32], index: 1, kind: input, shape index: {}]
  %s2 = inlined_call_operand.vmem [shape: f32[32,16], index: 2, kind: input, shape index: {}]
  %s3 = inlined_call_operand.vmem [shape: f32[1,16], index: 3, kind: input, shape index: {}]
  %s4 = inlined_call_operand.vmem [shape: f32[8,8,16], index: 4, kind: input, shape index: {}]
  %s5 = inlined_call_operand.hbm [shape: f32[8,8,16], index: 5, kind: output, shape index: {0}]
  %s6 = inlined_call_operand.hbm [shape: f32[8,8,8], index: 6, kind: output, shape index: {1}]
  %7 = xla_tuple %s5, %s6
  %s8 = sld [smem:[#allocation0]]
  $region42: #{tpu_custom_call.1} parent=0
    _
  %s10 = ssub.s32 1, %s8
  %s11 = scalar_select 0, %s10, %s8
  $region1: #{tpu_custom_call.1} parent=0
    #allocation2 [shape = 'u8[32768]{0}', space=vmem, size = 0x8000, scoped, tag = 'input window, operand 1, single buffered']
    #allocation3 [shape = 's32[1]{0}', space=sflag, size = 0x4, scoped, tag = 'scoped memory for tpu_custom_call.1']
    #allocation4 [shape = 's32[1]{0}', space=sflag, size = 0x4, scoped, tag = 'scoped memory for tpu_custom_call.1']
    #allocation5 [shape = 'u8[32768]{0}', space=vmem, size = 0x8000, scoped, tag = 'output window, operand 0, single buffered']
    #allocation6 [shape = 'u8[32768]{0}', space=vmem, size = 0x8000, scoped, tag = 'output window, operand 1, single buffered']
    #allocation7 [shape = 's32[1]{0}', space=sflag, size = 0x4, scoped, tag = 'scoped memory for tpu_custom_call.1']
    %12 = vsyncpa [#allocation3], 0
    %13 = vsyncpa [#allocation4], 0
    %14 = vsyncpa [#allocation7], 0
    // Predicated region
    $region2: #{tpu_custom_call.1} parent=1 // pred_check
      _
    $region3: #{tpu_custom_call.1} parent=1 // pred_check_branch
      %16 = sbr.rel (0) target = $region5
    $region4: #{tpu_custom_call.1} parent=1 // pred_region
      _
    $region5: #{tpu_custom_call.1} parent=1 // pred_fallthru
      _
    // Predicated region
    $region6: #{tpu_custom_call.1} parent=1 // pred_check
      _
    $region7: #{tpu_custom_call.1} parent=1 // pred_check_branch
      %18 = sbr.rel (0) target = $region9
    $region8: #{tpu_custom_call.1} parent=1 // pred_region
      %s20 = ssub.s32 1024, 1024
      %21 = vsyncadd [#allocation3], %s20
      %s22 = sshll.u32 [#allocation2], 4
      %s23 = int_to_ptr.vmem [resolvable:$true] %s22
      %28 = dma.hbm_to_vmem [thread:$0]  %s1, 1024, %s23, [#allocation3], 128, 128, 8
    $region9: #{tpu_custom_call.1} parent=1 // pred_fallthru
      _
    // Predicated region
    $region10: #{tpu_custom_call.1} parent=1 // pred_check
      _
    $region11: #{tpu_custom_call.1} parent=1 // pred_check_branch
      %30 = sbr.rel (0) target = $region13
    $region12: #{tpu_custom_call.1} parent=1 // pred_region
      _
    $region13: #{tpu_custom_call.1} parent=1 // pred_fallthru
      _
    // Predicated region
    $region14: #{tpu_custom_call.1} parent=1 // pred_check
      _
    $region15: #{tpu_custom_call.1} parent=1 // pred_check_branch
      %32 = sbr.rel (0) target = $region17
    $region16: #{tpu_custom_call.1} parent=1 // pred_region
      _
    $region17: #{tpu_custom_call.1} parent=1 // pred_fallthru
      _
    // Predicated region
    $region18: #{tpu_custom_call.1} parent=1 // pred_check
      _
    $region19: #{tpu_custom_call.1} parent=1 // pred_check_branch
      %34 = sbr.rel (0) target = $region21
    $region20: #{tpu_custom_call.1} parent=1 // pred_region
      _
    $region21: #{tpu_custom_call.1} parent=1 // pred_fallthru
      _
    // Predicated region
    $region22: #{tpu_custom_call.1} parent=1 // pred_check
      _
    $region23: #{tpu_custom_call.1} parent=1 // pred_check_branch
      %36 = sbr.rel (0) target = $region25
    $region24: #{tpu_custom_call.1} parent=1 // pred_region
      %37 = dma.done [#allocation3], 1024
    $region25: #{tpu_custom_call.1} parent=1 // pred_fallthru
      _
    %v38 = vld [vmem:[#allocation2] sm:$0xff]
    %v39 = vld [vmem:[#allocation2 + $0x8] sm:$0xff]
    %v40 = vld [vmem:[#allocation2 + $0x10] sm:$0xff]
    %v41 = vld [vmem:[#allocation2 + $0x18] sm:$0xff]
    %v42 = vld [vmem:[#allocation2 + $0x20] sm:$0xff]
    %v43 = vld [vmem:[#allocation2 + $0x28] sm:$0xff]
    %v44 = vld [vmem:[#allocation2 + $0x30] sm:$0xff]
    %v45 = vld [vmem:[#allocation2 + $0x38] sm:$0xff]
    %v46 = vld [vmem:[%s2] sm:$0xff]
    %v47 = vld [vmem:[%s2 + $0x8] sm:$0xff]
    %v48 = vld [vmem:[%s2 + $0x10] sm:$0xff]
    %v49 = vld [vmem:[%s2 + $0x18] sm:$0xff]
    %v50 = vld [vmem:[%s3] sm:$0x1]
    %v52 = vlaneseq
    %v53 = vshrl.u32 %v52, 7
    %v54 = vsub.s32 0, %v53
    %v55 = vrot.slane %v50, %v54
    %vm57 = vcmask 261120
    %v59 = vsel %vm57, %v38, 0
    %v62 = vsel %vm57, %v39, 0
    %v65 = vsel %vm57, %v40, 0
    %v68 = vsel %vm57, %v41, 0
    %v71 = vsel %vm57, %v42, 0
    %v74 = vsel %vm57, %v43, 0
    %v77 = vsel %vm57, %v44, 0
    %v80 = vsel %vm57, %v45, 0
    %82 = vmatprep.subr.mxu0 0.0
    %83 = vmatpush1.msra.mxu0 %v46
    %84 = vmatprep.subr.mxu0 0.0
    %85 = vmatpush1.msra.mxu0 %v47
    %86 = vmatprep.subr.mxu0 0.0
    %87 = vmatpush1.msra.mxu0 %v48
    %88 = vmatprep.subr.mxu0 0.0
    %89 = vmatpush1.msra.mxu0 %v49
    %90 = vmatprep.subr.mxu0 0.0
    %91 = vmatpush1.msra.mxu0 0.0
    %92 = vmatprep.subr.mxu0 0.0
    %93 = vmatpush1.msra.mxu0 0.0
    %94 = vmatprep.subr.mxu0 0.0
    %95 = vmatpush1.msra.mxu0 0.0
    %96 = vmatprep.subr.mxu0 0.0
    %97 = vmatpush1.msra.mxu0 0.0
    %98 = vmatprep.subr.mxu0 0.0
    %99 = vmatpush1.msra.mxu0 0.0
    %100 = vmatprep.subr.mxu0 0.0
    %101 = vmatpush1.msra.mxu0 0.0
    %102 = vmatprep.subr.mxu0 0.0
    %103 = vmatpush1.msra.mxu0 0.0
    %104 = vmatprep.subr.mxu0 0.0
    %105 = vmatpush1.msra.mxu0 0.0
    %106 = vmatprep.subr.mxu0 0.0
    %107 = vmatpush1.msra.mxu0 0.0
    %108 = vmatprep.subr.mxu0 0.0
    %109 = vmatpush1.msra.mxu0 0.0
    %110 = vmatprep.subr.mxu0 0.0
    %111 = vmatpush1.msra.mxu0 0.0
    %112 = vmatprep.subr.mxu0 0.0
    %113 = vmatpush1.msra.mxu0 0.0
    %114 = vmatprep.subr.mxu0 0.0
    %115 = vmatpush1.msra.mxu0 0.0
    %116 = vmatprep.subr.mxu0 0.0
    %117 = vmatpush1.msra.mxu0 0.0
    %118 = vmatprep.subr.mxu0 0.0
    %119 = vmatpush1.msra.mxu0 0.0
    %120 = vmatprep.subr.mxu0 0.0
    %121 = vmatpush1.msra.mxu0 0.0
    %122 = vmatprep.subr.mxu0 0.0
    %123 = vmatpush1.msra.mxu0 0.0
    %124 = vmatprep.subr.mxu0 0.0
    %125 = vmatpush1.msra.mxu0 0.0
    %126 = vmatprep.subr.mxu0 0.0
    %127 = vmatpush1.msra.mxu0 0.0
    %128 = vmatprep.subr.mxu0 0.0
    %129 = vmatpush1.msra.mxu0 0.0
    %130 = vmatprep.subr.mxu0 0.0
    %131 = vmatpush1.msra.mxu0 0.0
    %132 = vmatprep.subr.mxu0 0.0
    %133 = vmatpush1.msra.mxu0 0.0
    %134 = vmatprep.subr.mxu0 0.0
    %135 = vmatpush1.msra.mxu0 0.0
    %136 = vmatprep.subr.mxu0 0.0
    %137 = vmatpush1.msra.mxu0 0.0
    %138 = vmatprep.subr.mxu0 0.0
    %139 = vmatpush1.msra.mxu0 0.0
    %140 = vmatprep.subr.mxu0 0.0
    %141 = vmatpush1.msra.mxu0 0.0
    %142 = vmatprep.subr.mxu0 0.0
    %143 = vmatpush1.msra.mxu0 0.0
    %144 = vmatprep.subr.mxu0 0.0
    %145 = vmatpush1.msra.mxu0 0.0
    %146 = vmatprep.mubr.f32.mxu0 0.0
    %147 = vmatmul.mubr.f32.gmra.mrb[0].mxu0 %v59
    %v148 = vpop.f32.mrb[0].mxu0
    %v149 = vadd.f32 %v55, %v148
    %v150 = vpop.f32.mrb[0].mxu0
    %151 = vmatprep.mubr.f32.mxu0 0.0
    %152 = vmatmul.mubr.f32.gmra.mrb[0].mxu0 %v62
    %v153 = vpop.f32.mrb[0].mxu0
    %v154 = vadd.f32 %v55, %v153
    %v155 = vpop.f32.mrb[0].mxu0
    %156 = vmatprep.mubr.f32.mxu0 0.0
    %157 = vmatmul.mubr.f32.gmra.mrb[0].mxu0 %v65
    %v158 = vpop.f32.mrb[0].mxu0
    %v159 = vadd.f32 %v55, %v158
    %v160 = vpop.f32.mrb[0].mxu0
    %161 = vmatprep.mubr.f32.mxu0 0.0
    %162 = vmatmul.mubr.f32.gmra.mrb[0].mxu0 %v68
    %v163 = vpop.f32.mrb[0].mxu0
    %v164 = vadd.f32 %v55, %v163
    %v165 = vpop.f32.mrb[0].mxu0
    %166 = vmatprep.mubr.f32.mxu0 0.0
    %167 = vmatmul.mubr.f32.gmra.mrb[0].mxu0 %v71
    %v168 = vpop.f32.mrb[0].mxu0
    %v169 = vadd.f32 %v55, %v168
    %v170 = vpop.f32.mrb[0].mxu0
    %171 = vmatprep.mubr.f32.mxu0 0.0
    %172 = vmatmul.mubr.f32.gmra.mrb[0].mxu0 %v74
    %v173 = vpop.f32.mrb[0].mxu0
    %v174 = vadd.f32 %v55, %v173
    %v175 = vpop.f32.mrb[0].mxu0
    %176 = vmatprep.mubr.f32.mxu0 0.0
    %177 = vmatmul.mubr.f32.gmra.mrb[0].mxu0 %v77
    %v178 = vpop.f32.mrb[0].mxu0
    %v179 = vadd.f32 %v55, %v178
    %v180 = vpop.f32.mrb[0].mxu0
    %181 = vmatprep.mubr.f32.mxu0 0.0
    %182 = vmatmul.mubr.f32.gmra.mrb[0].mxu0 %v80
    %v183 = vpop.f32.mrb[0].mxu0
    %v184 = vadd.f32 %v55, %v183
    %v185 = vpop.f32.mrb[0].mxu0
    %186 = vdwg.mxu0
    %v187 = vld [vmem:[%s4] sm:$0xff]
    %v188 = vld [vmem:[%s4 + $0x8] sm:$0xff]
    %v189 = vld [vmem:[%s4 + $0x10] sm:$0xff]
    %v190 = vld [vmem:[%s4 + $0x18] sm:$0xff]
    %v191 = vld [vmem:[%s4 + $0x20] sm:$0xff]
    %v192 = vld [vmem:[%s4 + $0x28] sm:$0xff]
    %v193 = vld [vmem:[%s4 + $0x30] sm:$0xff]
    %v194 = vld [vmem:[%s4 + $0x38] sm:$0xff]
    %vm195 = vcmask 130048
    %v197 = vsel %vm195, %v149, 0
    %v200 = vsel %vm195, %v187, 0
    %202 = vmatprep.subr.mxu0 0.0
    %203 = vmatpush1.xpose.msra.mxu0 %v200
    %204 = vmatprep.subr.mxu0 0.0
    %205 = vmatpush1.xpose.msra.mxu0 0.0
    %206 = vmatprep.subr.mxu0 0.0
    %207 = vmatpush1.xpose.msra.mxu0 0.0
    %208 = vmatprep.subr.mxu0 0.0
    %209 = vmatpush1.xpose.msra.mxu0 0.0
    %210 = vmatprep.subr.mxu0 0.0
    %211 = vmatpush1.xpose.msra.mxu0 0.0
    %212 = vmatprep.subr.mxu0 0.0
    %213 = vmatpush1.xpose.msra.mxu0 0.0
    %214 = vmatprep.subr.mxu0 0.0
    %215 = vmatpush1.xpose.msra.mxu0 0.0
    %216 = vmatprep.subr.mxu0 0.0
    %217 = vmatpush1.xpose.msra.mxu0 0.0
    %218 = vmatprep.subr.mxu0 0.0
    %219 = vmatpush1.xpose.msra.mxu0 0.0
    %220 = vmatprep.subr.mxu0 0.0
    %221 = vmatpush1.xpose.msra.mxu0 0.0
    %222 = vmatprep.subr.mxu0 0.0
    %223 = vmatpush1.xpose.msra.mxu0 0.0
    %224 = vmatprep.subr.mxu0 0.0
    %225 = vmatpush1.xpose.msra.mxu0 0.0
    %226 = vmatprep.subr.mxu0 0.0
    %227 = vmatpush1.xpose.msra.mxu0 0.0
    %228 = vmatprep.subr.mxu0 0.0
    %229 = vmatpush1.xpose.msra.mxu0 0.0
    %230 = vmatprep.subr.mxu0 0.0
    %231 = vmatpush1.xpose.msra.mxu0 0.0
    %232 = vmatprep.subr.mxu0 0.0
    %233 = vmatpush1.xpose.msra.mxu0 0.0
    %234 = vmatprep.subr.mxu0 0.0
    %235 = vmatpush1.xpose.msra.mxu0 0.0
    %236 = vmatprep.subr.mxu0 0.0
    %237 = vmatpush1.xpose.msra.mxu0 0.0
    %238 = vmatprep.subr.mxu0 0.0
    %239 = vmatpush1.xpose.msra.mxu0 0.0
    %240 = vmatprep.subr.mxu0 0.0
    %241 = vmatpush1.xpose.msra.mxu0 0.0
    %242 = vmatprep.subr.mxu0 0.0
    %243 = vmatpush1.xpose.msra.mxu0 0.0
    %244 = vmatprep.subr.mxu0 0.0
    %245 = vmatpush1.xpose.msra.mxu0 0.0
    %246 = vmatprep.subr.mxu0 0.0
    %247 = vmatpush1.xpose.msra.mxu0 0.0
    %248 = vmatprep.subr.mxu0 0.0
    %249 = vmatpush1.xpose.msra.mxu0 0.0
    %250 = vmatprep.subr.mxu0 0.0
    %251 = vmatpush1.xpose.msra.mxu0 0.0
    %252 = vmatprep.subr.mxu0 0.0
    %253 = vmatpush1.xpose.msra.mxu0 0.0
    %254 = vmatprep.subr.mxu0 0.0
    %255 = vmatpush1.xpose.msra.mxu0 0.0
    %256 = vmatprep.subr.mxu0 0.0
    %257 = vmatpush1.xpose.msra.mxu0 0.0
    %258 = vmatprep.subr.mxu0 0.0
    %259 = vmatpush1.xpose.msra.mxu0 0.0
    %260 = vmatprep.subr.mxu0 0.0
    %261 = vmatpush1.xpose.msra.mxu0 0.0
    %262 = vmatprep.subr.mxu0 0.0
    %263 = vmatpush1.xpose.msra.mxu0 0.0
    %264 = vmatprep.subr.mxu0 0.0
    %265 = vmatpush1.xpose.msra.mxu0 0.0
    %266 = vmatprep.mubr.f32.mxu0 0.0
    %267 = vmatmul.mubr.f32.gmra.mrb[0].mxu0 %v197
    %v268 = vpop.f32.mrb[0].mxu0
    %v269 = vadd.f32 0.0, %v268
    %v270 = vpop.f32.mrb[0].mxu0
    %271 = vdwg.mxu0
    %v273 = vsel %vm195, %v154, 0
    %v276 = vsel %vm195, %v188, 0
    %278 = vmatprep.subr.mxu0 0.0
    %279 = vmatpush1.xpose.msra.mxu0 %v276
    %280 = vmatprep.subr.mxu0 0.0
    %281 = vmatpush1.xpose.msra.mxu0 0.0
    %282 = vmatprep.subr.mxu0 0.0
    %283 = vmatpush1.xpose.msra.mxu0 0.0
    %284 = vmatprep.subr.mxu0 0.0
    %285 = vmatpush1.xpose.msra.mxu0 0.0
    %286 = vmatprep.subr.mxu0 0.0
    %287 = vmatpush1.xpose.msra.mxu0 0.0
    %288 = vmatprep.subr.mxu0 0.0
    %289 = vmatpush1.xpose.msra.mxu0 0.0
    %290 = vmatprep.subr.mxu0 0.0
    %291 = vmatpush1.xpose.msra.mxu0 0.0
    %292 = vmatprep.subr.mxu0 0.0
    %293 = vmatpush1.xpose.msra.mxu0 0.0
    %294 = vmatprep.subr.mxu0 0.0
    %295 = vmatpush1.xpose.msra.mxu0 0.0
    %296 = vmatprep.subr.mxu0 0.0
    %297 = vmatpush1.xpose.msra.mxu0 0.0
    %298 = vmatprep.subr.mxu0 0.0
    %299 = vmatpush1.xpose.msra.mxu0 0.0
    %300 = vmatprep.subr.mxu0 0.0
    %301 = vmatpush1.xpose.msra.mxu0 0.0
    %302 = vmatprep.subr.mxu0 0.0
    %303 = vmatpush1.xpose.msra.mxu0 0.0
    %304 = vmatprep.subr.mxu0 0.0
    %305 = vmatpush1.xpose.msra.mxu0 0.0
    %306 = vmatprep.subr.mxu0 0.0
    %307 = vmatpush1.xpose.msra.mxu0 0.0
    %308 = vmatprep.subr.mxu0 0.0
    %309 = vmatpush1.xpose.msra.mxu0 0.0
    %310 = vmatprep.subr.mxu0 0.0
    %311 = vmatpush1.xpose.msra.mxu0 0.0
    %312 = vmatprep.subr.mxu0 0.0
    %313 = vmatpush1.xpose.msra.mxu0 0.0
    %314 = vmatprep.subr.mxu0 0.0
    %315 = vmatpush1.xpose.msra.mxu0 0.0
    %316 = vmatprep.subr.mxu0 0.0
    %317 = vmatpush1.xpose.msra.mxu0 0.0
    %318 = vmatprep.subr.mxu0 0.0
    %319 = vmatpush1.xpose.msra.mxu0 0.0
    %320 = vmatprep.subr.mxu0 0.0
    %321 = vmatpush1.xpose.msra.mxu0 0.0
    %322 = vmatprep.subr.mxu0 0.0
    %323 = vmatpush1.xpose.msra.mxu0 0.0
    %324 = vmatprep.subr.mxu0 0.0
    %325 = vmatpush1.xpose.msra.mxu0 0.0
    %326 = vmatprep.subr.mxu0 0.0
    %327 = vmatpush1.xpose.msra.mxu0 0.0
    %328 = vmatprep.subr.mxu0 0.0
    %329 = vmatpush1.xpose.msra.mxu0 0.0
    %330 = vmatprep.subr.mxu0 0.0
    %331 = vmatpush1.xpose.msra.mxu0 0.0
    %332 = vmatprep.subr.mxu0 0.0
    %333 = vmatpush1.xpose.msra.mxu0 0.0
    %334 = vmatprep.subr.mxu0 0.0
    %335 = vmatpush1.xpose.msra.mxu0 0.0
    %336 = vmatprep.subr.mxu0 0.0
    %337 = vmatpush1.xpose.msra.mxu0 0.0
    %338 = vmatprep.subr.mxu0 0.0
    %339 = vmatpush1.xpose.msra.mxu0 0.0
    %340 = vmatprep.subr.mxu0 0.0
    %341 = vmatpush1.xpose.msra.mxu0 0.0
    %342 = vmatprep.mubr.f32.mxu0 0.0
    %343 = vmatmul.mubr.f32.gmra.mrb[0].mxu0 %v273
    %v344 = vpop.f32.mrb[0].mxu0
    %v345 = vadd.f32 0.0, %v344
    %v346 = vpop.f32.mrb[0].mxu0
    %347 = vdwg.mxu0
    %v349 = vsel %vm195, %v159, 0
    %v352 = vsel %vm195, %v189, 0
    %354 = vmatprep.subr.mxu0 0.0
    %355 = vmatpush1.xpose.msra.mxu0 %v352
    %356 = vmatprep.subr.mxu0 0.0
    %357 = vmatpush1.xpose.msra.mxu0 0.0
    %358 = vmatprep.subr.mxu0 0.0
    %359 = vmatpush1.xpose.msra.mxu0 0.0
    %360 = vmatprep.subr.mxu0 0.0
    %361 = vmatpush1.xpose.msra.mxu0 0.0
    %362 = vmatprep.subr.mxu0 0.0
    %363 = vmatpush1.xpose.msra.mxu0 0.0
    %364 = vmatprep.subr.mxu0 0.0
    %365 = vmatpush1.xpose.msra.mxu0 0.0
    %366 = vmatprep.subr.mxu0 0.0
    %367 = vmatpush1.xpose.msra.mxu0 0.0
    %368 = vmatprep.subr.mxu0 0.0
    %369 = vmatpush1.xpose.msra.mxu0 0.0
    %370 = vmatprep.subr.mxu0 0.0
    %371 = vmatpush1.xpose.msra.mxu0 0.0
    %372 = vmatprep.subr.mxu0 0.0
    %373 = vmatpush1.xpose.msra.mxu0 0.0
    %374 = vmatprep.subr.mxu0 0.0
    %375 = vmatpush1.xpose.msra.mxu0 0.0
    %376 = vmatprep.subr.mxu0 0.0
    %377 = vmatpush1.xpose.msra.mxu0 0.0
    %378 = vmatprep.subr.mxu0 0.0
    %379 = vmatpush1.xpose.msra.mxu0 0.0
    %380 = vmatprep.subr.mxu0 0.0
    %381 = vmatpush1.xpose.msra.mxu0 0.0
    %382 = vmatprep.subr.mxu0 0.0
    %383 = vmatpush1.xpose.msra.mxu0 0.0
    %384 = vmatprep.subr.mxu0 0.0
    %385 = vmatpush1.xpose.msra.mxu0 0.0
    %386 = vmatprep.subr.mxu0 0.0
    %387 = vmatpush1.xpose.msra.mxu0 0.0
    %388 = vmatprep.subr.mxu0 0.0
    %389 = vmatpush1.xpose.msra.mxu0 0.0
    %390 = vmatprep.subr.mxu0 0.0
    %391 = vmatpush1.xpose.msra.mxu0 0.0
    %392 = vmatprep.subr.mxu0 0.0
    %393 = vmatpush1.xpose.msra.mxu0 0.0
    %394 = vmatprep.subr.mxu0 0.0
    %395 = vmatpush1.xpose.msra.mxu0 0.0
    %396 = vmatprep.subr.mxu0 0.0
    %397 = vmatpush1.xpose.msra.mxu0 0.0
    %398 = vmatprep.subr.mxu0 0.0
    %399 = vmatpush1.xpose.msra.mxu0 0.0
    %400 = vmatprep.subr.mxu0 0.0
    %401 = vmatpush1.xpose.msra.mxu0 0.0
    %402 = vmatprep.subr.mxu0 0.0
    %403 = vmatpush1.xpose.msra.mxu0 0.0
    %404 = vmatprep.subr.mxu0 0.0
    %405 = vmatpush1.xpose.msra.mxu0 0.0
    %406 = vmatprep.subr.mxu0 0.0
    %407 = vmatpush1.xpose.msra.mxu0 0.0
    %408 = vmatprep.subr.mxu0 0.0
    %409 = vmatpush1.xpose.msra.mxu0 0.0
    %410 = vmatprep.subr.mxu0 0.0
    %411 = vmatpush1.xpose.msra.mxu0 0.0
    %412 = vmatprep.subr.mxu0 0.0
    %413 = vmatpush1.xpose.msra.mxu0 0.0
    %414 = vmatprep.subr.mxu0 0.0
    %415 = vmatpush1.xpose.msra.mxu0 0.0
    %416 = vmatprep.subr.mxu0 0.0
    %417 = vmatpush1.xpose.msra.mxu0 0.0
    %418 = vmatprep.mubr.f32.mxu0 0.0
    %419 = vmatmul.mubr.f32.gmra.mrb[0].mxu0 %v349
    %v420 = vpop.f32.mrb[0].mxu0
    %v421 = vadd.f32 0.0, %v420
    %v422 = vpop.f32.mrb[0].mxu0
    %423 = vdwg.mxu0
    %v425 = vsel %vm195, %v164, 0
    %v428 = vsel %vm195, %v190, 0
    %430 = vmatprep.subr.mxu0 0.0
    %431 = vmatpush1.xpose.msra.mxu0 %v428
    %432 = vmatprep.subr.mxu0 0.0
    %433 = vmatpush1.xpose.msra.mxu0 0.0
    %434 = vmatprep.subr.mxu0 0.0
    %435 = vmatpush1.xpose.msra.mxu0 0.0
    %436 = vmatprep.subr.mxu0 0.0
    %437 = vmatpush1.xpose.msra.mxu0 0.0
    %438 = vmatprep.subr.mxu0 0.0
    %439 = vmatpush1.xpose.msra.mxu0 0.0
    %440 = vmatprep.subr.mxu0 0.0
    %441 = vmatpush1.xpose.msra.mxu0 0.0
    %442 = vmatprep.subr.mxu0 0.0
    %443 = vmatpush1.xpose.msra.mxu0 0.0
    %444 = vmatprep.subr.mxu0 0.0
    %445 = vmatpush1.xpose.msra.mxu0 0.0
    %446 = vmatprep.subr.mxu0 0.0
    %447 = vmatpush1.xpose.msra.mxu0 0.0
    %448 = vmatprep.subr.mxu0 0.0
    %449 = vmatpush1.xpose.msra.mxu0 0.0
    %450 = vmatprep.subr.mxu0 0.0
    %451 = vmatpush1.xpose.msra.mxu0 0.0
    %452 = vmatprep.subr.mxu0 0.0
    %453 = vmatpush1.xpose.msra.mxu0 0.0
    %454 = vmatprep.subr.mxu0 0.0
    %455 = vmatpush1.xpose.msra.mxu0 0.0
    %456 = vmatprep.subr.mxu0 0.0
    %457 = vmatpush1.xpose.msra.mxu0 0.0
    %458 = vmatprep.subr.mxu0 0.0
    %459 = vmatpush1.xpose.msra.mxu0 0.0
    %460 = vmatprep.subr.mxu0 0.0
    %461 = vmatpush1.xpose.msra.mxu0 0.0
    %462 = vmatprep.subr.mxu0 0.0
    %463 = vmatpush1.xpose.msra.mxu0 0.0
    %464 = vmatprep.subr.mxu0 0.0
    %465 = vmatpush1.xpose.msra.mxu0 0.0
    %466 = vmatprep.subr.mxu0 0.0
    %467 = vmatpush1.xpose.msra.mxu0 0.0
    %468 = vmatprep.subr.mxu0 0.0
    %469 = vmatpush1.xpose.msra.mxu0 0.0
    %470 = vmatprep.subr.mxu0 0.0
    %471 = vmatpush1.xpose.msra.mxu0 0.0
    %472 = vmatprep.subr.mxu0 0.0
    %473 = vmatpush1.xpose.msra.mxu0 0.0
    %474 = vmatprep.subr.mxu0 0.0
    %475 = vmatpush1.xpose.msra.mxu0 0.0
    %476 = vmatprep.subr.mxu0 0.0
    %477 = vmatpush1.xpose.msra.mxu0 0.0
    %478 = vmatprep.subr.mxu0 0.0
    %479 = vmatpush1.xpose.msra.mxu0 0.0
    %480 = vmatprep.subr.mxu0 0.0
    %481 = vmatpush1.xpose.msra.mxu0 0.0
    %482 = vmatprep.subr.mxu0 0.0
    %483 = vmatpush1.xpose.msra.mxu0 0.0
    %484 = vmatprep.subr.mxu0 0.0
    %485 = vmatpush1.xpose.msra.mxu0 0.0
    %486 = vmatprep.subr.mxu0 0.0
    %487 = vmatpush1.xpose.msra.mxu0 0.0
    %488 = vmatprep.subr.mxu0 0.0
    %489 = vmatpush1.xpose.msra.mxu0 0.0
    %490 = vmatprep.subr.mxu0 0.0
    %491 = vmatpush1.xpose.msra.mxu0 0.0
    %492 = vmatprep.subr.mxu0 0.0
    %493 = vmatpush1.xpose.msra.mxu0 0.0
    %494 = vmatprep.mubr.f32.mxu0 0.0
    %495 = vmatmul.mubr.f32.gmra.mrb[0].mxu0 %v425
    %v496 = vpop.f32.mrb[0].mxu0
    %v497 = vadd.f32 0.0, %v496
    %v498 = vpop.f32.mrb[0].mxu0
    %499 = vdwg.mxu0
    %v501 = vsel %vm195, %v169, 0
    %v504 = vsel %vm195, %v191, 0
    %506 = vmatprep.subr.mxu0 0.0
    %507 = vmatpush1.xpose.msra.mxu0 %v504
    %508 = vmatprep.subr.mxu0 0.0
    %509 = vmatpush1.xpose.msra.mxu0 0.0
    %510 = vmatprep.subr.mxu0 0.0
    %511 = vmatpush1.xpose.msra.mxu0 0.0
    %512 = vmatprep.subr.mxu0 0.0
    %513 = vmatpush1.xpose.msra.mxu0 0.0
    %514 = vmatprep.subr.mxu0 0.0
    %515 = vmatpush1.xpose.msra.mxu0 0.0
    %516 = vmatprep.subr.mxu0 0.0
    %517 = vmatpush1.xpose.msra.mxu0 0.0
    %518 = vmatprep.subr.mxu0 0.0
    %519 = vmatpush1.xpose.msra.mxu0 0.0
    %520 = vmatprep.subr.mxu0 0.0
    %521 = vmatpush1.xpose.msra.mxu0 0.0
    %522 = vmatprep.subr.mxu0 0.0
    %523 = vmatpush1.xpose.msra.mxu0 0.0
    %524 = vmatprep.subr.mxu0 0.0
    %525 = vmatpush1.xpose.msra.mxu0 0.0
    %526 = vmatprep.subr.mxu0 0.0
    %527 = vmatpush1.xpose.msra.mxu0 0.0
    %528 = vmatprep.subr.mxu0 0.0
    %529 = vmatpush1.xpose.msra.mxu0 0.0
    %530 = vmatprep.subr.mxu0 0.0
    %531 = vmatpush1.xpose.msra.mxu0 0.0
    %532 = vmatprep.subr.mxu0 0.0
    %533 = vmatpush1.xpose.msra.mxu0 0.0
    %534 = vmatprep.subr.mxu0 0.0
    %535 = vmatpush1.xpose.msra.mxu0 0.0
    %536 = vmatprep.subr.mxu0 0.0
    %537 = vmatpush1.xpose.msra.mxu0 0.0
    %538 = vmatprep.subr.mxu0 0.0
    %539 = vmatpush1.xpose.msra.mxu0 0.0
    %540 = vmatprep.subr.mxu0 0.0
    %541 = vmatpush1.xpose.msra.mxu0 0.0
    %542 = vmatprep.subr.mxu0 0.0
    %543 = vmatpush1.xpose.msra.mxu0 0.0
    %544 = vmatprep.subr.mxu0 0.0
    %545 = vmatpush1.xpose.msra.mxu0 0.0
    %546 = vmatprep.subr.mxu0 0.0
    %547 = vmatpush1.xpose.msra.mxu0 0.0
    %548 = vmatprep.subr.mxu0 0.0
    %549 = vmatpush1.xpose.msra.mxu0 0.0
    %550 = vmatprep.subr.mxu0 0.0
    %551 = vmatpush1.xpose.msra.mxu0 0.0
    %552 = vmatprep.subr.mxu0 0.0
    %553 = vmatpush1.xpose.msra.mxu0 0.0
    %554 = vmatprep.subr.mxu0 0.0
    %555 = vmatpush1.xpose.msra.mxu0 0.0
    %556 = vmatprep.subr.mxu0 0.0
    %557 = vmatpush1.xpose.msra.mxu0 0.0
    %558 = vmatprep.subr.mxu0 0.0
    %559 = vmatpush1.xpose.msra.mxu0 0.0
    %560 = vmatprep.subr.mxu0 0.0
    %561 = vmatpush1.xpose.msra.mxu0 0.0
    %562 = vmatprep.subr.mxu0 0.0
    %563 = vmatpush1.xpose.msra.mxu0 0.0
    %564 = vmatprep.subr.mxu0 0.0
    %565 = vmatpush1.xpose.msra.mxu0 0.0
    %566 = vmatprep.subr.mxu0 0.0
    %567 = vmatpush1.xpose.msra.mxu0 0.0
    %568 = vmatprep.subr.mxu0 0.0
    %569 = vmatpush1.xpose.msra.mxu0 0.0
    %570 = vmatprep.mubr.f32.mxu0 0.0
    %571 = vmatmul.mubr.f32.gmra.mrb[0].mxu0 %v501
    %v572 = vpop.f32.mrb[0].mxu0
    %v573 = vadd.f32 0.0, %v572
    %v574 = vpop.f32.mrb[0].mxu0
    %575 = vdwg.mxu0
    %v577 = vsel %vm195, %v174, 0
    %v580 = vsel %vm195, %v192, 0
    %582 = vmatprep.subr.mxu0 0.0
    %583 = vmatpush1.xpose.msra.mxu0 %v580
    %584 = vmatprep.subr.mxu0 0.0
    %585 = vmatpush1.xpose.msra.mxu0 0.0
    %586 = vmatprep.subr.mxu0 0.0
    %587 = vmatpush1.xpose.msra.mxu0 0.0
    %588 = vmatprep.subr.mxu0 0.0
    %589 = vmatpush1.xpose.msra.mxu0 0.0
    %590 = vmatprep.subr.mxu0 0.0
    %591 = vmatpush1.xpose.msra.mxu0 0.0
    %592 = vmatprep.subr.mxu0 0.0
    %593 = vmatpush1.xpose.msra.mxu0 0.0
    %594 = vmatprep.subr.mxu0 0.0
    %595 = vmatpush1.xpose.msra.mxu0 0.0
    %596 = vmatprep.subr.mxu0 0.0
    %597 = vmatpush1.xpose.msra.mxu0 0.0
    %598 = vmatprep.subr.mxu0 0.0
    %599 = vmatpush1.xpose.msra.mxu0 0.0
    %600 = vmatprep.subr.mxu0 0.0
    %601 = vmatpush1.xpose.msra.mxu0 0.0
    %602 = vmatprep.subr.mxu0 0.0
    %603 = vmatpush1.xpose.msra.mxu0 0.0
    %604 = vmatprep.subr.mxu0 0.0
    %605 = vmatpush1.xpose.msra.mxu0 0.0
    %606 = vmatprep.subr.mxu0 0.0
    %607 = vmatpush1.xpose.msra.mxu0 0.0
    %608 = vmatprep.subr.mxu0 0.0
    %609 = vmatpush1.xpose.msra.mxu0 0.0
    %610 = vmatprep.subr.mxu0 0.0
    %611 = vmatpush1.xpose.msra.mxu0 0.0
    %612 = vmatprep.subr.mxu0 0.0
    %613 = vmatpush1.xpose.msra.mxu0 0.0
    %614 = vmatprep.subr.mxu0 0.0
    %615 = vmatpush1.xpose.msra.mxu0 0.0
    %616 = vmatprep.subr.mxu0 0.0
    %617 = vmatpush1.xpose.msra.mxu0 0.0
    %618 = vmatprep.subr.mxu0 0.0
    %619 = vmatpush1.xpose.msra.mxu0 0.0
    %620 = vmatprep.subr.mxu0 0.0
    %621 = vmatpush1.xpose.msra.mxu0 0.0
    %622 = vmatprep.subr.mxu0 0.0
    %623 = vmatpush1.xpose.msra.mxu0 0.0
    %624 = vmatprep.subr.mxu0 0.0
    %625 = vmatpush1.xpose.msra.mxu0 0.0
    %626 = vmatprep.subr.mxu0 0.0
    %627 = vmatpush1.xpose.msra.mxu0 0.0
    %628 = vmatprep.subr.mxu0 0.0
    %629 = vmatpush1.xpose.msra.mxu0 0.0
    %630 = vmatprep.subr.mxu0 0.0
    %631 = vmatpush1.xpose.msra.mxu0 0.0
    %632 = vmatprep.subr.mxu0 0.0
    %633 = vmatpush1.xpose.msra.mxu0 0.0
    %634 = vmatprep.subr.mxu0 0.0
    %635 = vmatpush1.xpose.msra.mxu0 0.0
    %636 = vmatprep.subr.mxu0 0.0
    %637 = vmatpush1.xpose.msra.mxu0 0.0
    %638 = vmatprep.subr.mxu0 0.0
    %639 = vmatpush1.xpose.msra.mxu0 0.0
    %640 = vmatprep.subr.mxu0 0.0
    %641 = vmatpush1.xpose.msra.mxu0 0.0
    %642 = vmatprep.subr.mxu0 0.0
    %643 = vmatpush1.xpose.msra.mxu0 0.0
    %644 = vmatprep.subr.mxu0 0.0
    %645 = vmatpush1.xpose.msra.mxu0 0.0
    %646 = vmatprep.mubr.f32.mxu0 0.0
    %647 = vmatmul.mubr.f32.gmra.mrb[0].mxu0 %v577
    %v648 = vpop.f32.mrb[0].mxu0
    %v649 = vadd.f32 0.0, %v648
    %v650 = vpop.f32.mrb[0].mxu0
    %651 = vdwg.mxu0
    %v653 = vsel %vm195, %v179, 0
    %v656 = vsel %vm195, %v193, 0
    %658 = vmatprep.subr.mxu0 0.0
    %659 = vmatpush1.xpose.msra.mxu0 %v656
    %660 = vmatprep.subr.mxu0 0.0
    %661 = vmatpush1.xpose.msra.mxu0 0.0
    %662 = vmatprep.subr.mxu0 0.0
    %663 = vmatpush1.xpose.msra.mxu0 0.0
    %664 = vmatprep.subr.mxu0 0.0
    %665 = vmatpush1.xpose.msra.mxu0 0.0
    %666 = vmatprep.subr.mxu0 0.0
    %667 = vmatpush1.xpose.msra.mxu0 0.0
    %668 = vmatprep.subr.mxu0 0.0
    %669 = vmatpush1.xpose.msra.mxu0 0.0
    %670 = vmatprep.subr.mxu0 0.0
    %671 = vmatpush1.xpose.msra.mxu0 0.0
    %672 = vmatprep.subr.mxu0 0.0
    %673 = vmatpush1.xpose.msra.mxu0 0.0
    %674 = vmatprep.subr.mxu0 0.0
    %675 = vmatpush1.xpose.msra.mxu0 0.0
    %676 = vmatprep.subr.mxu0 0.0
    %677 = vmatpush1.xpose.msra.mxu0 0.0
    %678 = vmatprep.subr.mxu0 0.0
    %679 = vmatpush1.xpose.msra.mxu0 0.0
    %680 = vmatprep.subr.mxu0 0.0
    %681 = vmatpush1.xpose.msra.mxu0 0.0
    %682 = vmatprep.subr.mxu0 0.0
    %683 = vmatpush1.xpose.msra.mxu0 0.0
    %684 = vmatprep.subr.mxu0 0.0
    %685 = vmatpush1.xpose.msra.mxu0 0.0
    %686 = vmatprep.subr.mxu0 0.0
    %687 = vmatpush1.xpose.msra.mxu0 0.0
    %688 = vmatprep.subr.mxu0 0.0
    %689 = vmatpush1.xpose.msra.mxu0 0.0
    %690 = vmatprep.subr.mxu0 0.0
    %691 = vmatpush1.xpose.msra.mxu0 0.0
    %692 = vmatprep.subr.mxu0 0.0
    %693 = vmatpush1.xpose.msra.mxu0 0.0
    %694 = vmatprep.subr.mxu0 0.0
    %695 = vmatpush1.xpose.msra.mxu0 0.0
    %696 = vmatprep.subr.mxu0 0.0
    %697 = vmatpush1.xpose.msra.mxu0 0.0
    %698 = vmatprep.subr.mxu0 0.0
    %699 = vmatpush1.xpose.msra.mxu0 0.0
    %700 = vmatprep.subr.mxu0 0.0
    %701 = vmatpush1.xpose.msra.mxu0 0.0
    %702 = vmatprep.subr.mxu0 0.0
    %703 = vmatpush1.xpose.msra.mxu0 0.0
    %704 = vmatprep.subr.mxu0 0.0
    %705 = vmatpush1.xpose.msra.mxu0 0.0
    %706 = vmatprep.subr.mxu0 0.0
    %707 = vmatpush1.xpose.msra.mxu0 0.0
    %708 = vmatprep.subr.mxu0 0.0
    %709 = vmatpush1.xpose.msra.mxu0 0.0
    %710 = vmatprep.subr.mxu0 0.0
    %711 = vmatpush1.xpose.msra.mxu0 0.0
    %712 = vmatprep.subr.mxu0 0.0
    %713 = vmatpush1.xpose.msra.mxu0 0.0
    %714 = vmatprep.subr.mxu0 0.0
    %715 = vmatpush1.xpose.msra.mxu0 0.0
    %716 = vmatprep.subr.mxu0 0.0
    %717 = vmatpush1.xpose.msra.mxu0 0.0
    %718 = vmatprep.subr.mxu0 0.0
    %719 = vmatpush1.xpose.msra.mxu0 0.0
    %720 = vmatprep.subr.mxu0 0.0
    %721 = vmatpush1.xpose.msra.mxu0 0.0
    %722 = vmatprep.mubr.f32.mxu0 0.0
    %723 = vmatmul.mubr.f32.gmra.mrb[0].mxu0 %v653
    %v724 = vpop.f32.mrb[0].mxu0
    %v725 = vadd.f32 0.0, %v724
    %v726 = vpop.f32.mrb[0].mxu0
    %727 = vdwg.mxu0
    %v729 = vsel %vm195, %v184, 0
    %v732 = vsel %vm195, %v194, 0
    %734 = vmatprep.subr.mxu0 0.0
    %735 = vmatpush1.xpose.msra.mxu0 %v732
    %736 = vmatprep.subr.mxu0 0.0
    %737 = vmatpush1.xpose.msra.mxu0 0.0
    %738 = vmatprep.subr.mxu0 0.0
    %739 = vmatpush1.xpose.msra.mxu0 0.0
    %740 = vmatprep.subr.mxu0 0.0
    %741 = vmatpush1.xpose.msra.mxu0 0.0
    %742 = vmatprep.subr.mxu0 0.0
    %743 = vmatpush1.xpose.msra.mxu0 0.0
    %744 = vmatprep.subr.mxu0 0.0
    %745 = vmatpush1.xpose.msra.mxu0 0.0
    %746 = vmatprep.subr.mxu0 0.0
    %747 = vmatpush1.xpose.msra.mxu0 0.0
    %748 = vmatprep.subr.mxu0 0.0
    %749 = vmatpush1.xpose.msra.mxu0 0.0
    %750 = vmatprep.subr.mxu0 0.0
    %751 = vmatpush1.xpose.msra.mxu0 0.0
    %752 = vmatprep.subr.mxu0 0.0
    %753 = vmatpush1.xpose.msra.mxu0 0.0
    %754 = vmatprep.subr.mxu0 0.0
    %755 = vmatpush1.xpose.msra.mxu0 0.0
    %756 = vmatprep.subr.mxu0 0.0
    %757 = vmatpush1.xpose.msra.mxu0 0.0
    %758 = vmatprep.subr.mxu0 0.0
    %759 = vmatpush1.xpose.msra.mxu0 0.0
    %760 = vmatprep.subr.mxu0 0.0
    %761 = vmatpush1.xpose.msra.mxu0 0.0
    %762 = vmatprep.subr.mxu0 0.0
    %763 = vmatpush1.xpose.msra.mxu0 0.0
    %764 = vmatprep.subr.mxu0 0.0
    %765 = vmatpush1.xpose.msra.mxu0 0.0
    %766 = vmatprep.subr.mxu0 0.0
    %767 = vmatpush1.xpose.msra.mxu0 0.0
    %768 = vmatprep.subr.mxu0 0.0
    %769 = vmatpush1.xpose.msra.mxu0 0.0
    %770 = vmatprep.subr.mxu0 0.0
    %771 = vmatpush1.xpose.msra.mxu0 0.0
    %772 = vmatprep.subr.mxu0 0.0
    %773 = vmatpush1.xpose.msra.mxu0 0.0
    %774 = vmatprep.subr.mxu0 0.0
    %775 = vmatpush1.xpose.msra.mxu0 0.0
    %776 = vmatprep.subr.mxu0 0.0
    %777 = vmatpush1.xpose.msra.mxu0 0.0
    %778 = vmatprep.subr.mxu0 0.0
    %779 = vmatpush1.xpose.msra.mxu0 0.0
    %780 = vmatprep.subr.mxu0 0.0
    %781 = vmatpush1.xpose.msra.mxu0 0.0
    %782 = vmatprep.subr.mxu0 0.0
    %783 = vmatpush1.xpose.msra.mxu0 0.0
    %784 = vmatprep.subr.mxu0 0.0
    %785 = vmatpush1.xpose.msra.mxu0 0.0
    %786 = vmatprep.subr.mxu0 0.0
    %787 = vmatpush1.xpose.msra.mxu0 0.0
    %788 = vmatprep.subr.mxu0 0.0
    %789 = vmatpush1.xpose.msra.mxu0 0.0
    %790 = vmatprep.subr.mxu0 0.0
    %791 = vmatpush1.xpose.msra.mxu0 0.0
    %792 = vmatprep.subr.mxu0 0.0
    %793 = vmatpush1.xpose.msra.mxu0 0.0
    %794 = vmatprep.subr.mxu0 0.0
    %795 = vmatpush1.xpose.msra.mxu0 0.0
    %796 = vmatprep.subr.mxu0 0.0
    %797 = vmatpush1.xpose.msra.mxu0 0.0
    %798 = vmatprep.mubr.f32.mxu0 0.0
    %799 = vmatmul.mubr.f32.gmra.mrb[0].mxu0 %v729
    %v800 = vpop.f32.mrb[0].mxu0
    %v801 = vadd.f32 0.0, %v800
    %v802 = vpop.f32.mrb[0].mxu0
    %803 = vdwg.mxu0
    %v804 = vld [vmem:[%s0] sm:$0x1]
    %v805 = vld [vmem:[%s0 + $0x1] sm:$0x1]
    %v806 = vld [vmem:[%s0 + $0x2] sm:$0x1]
    %v807 = vld [vmem:[%s0 + $0x3] sm:$0x1]
    %v808 = vld [vmem:[%s0 + $0x4] sm:$0x1]
    %v809 = vld [vmem:[%s0 + $0x5] sm:$0x1]
    %v810 = vld [vmem:[%s0 + $0x6] sm:$0x1]
    %v811 = vld [vmem:[%s0 + $0x7] sm:$0x1]
    %v812 = vlaneseq
    %v813 = vand.u32 %v812, 127
    %814 = vset.pattern.permute.xlu0 0
    %815 = vperm.xlu0 %814, %v804
    %v816 = vpop.permute.xlu0 %815
    %v817 = vlaneseq
    %v818 = vshrl.u32 %v817, 7
    %v819 = vsub.s32 0, %v818
    %v820 = vrot.slane %v816, %v819
    %821 = vset.pattern.permute.xlu0 0
    %822 = vperm.xlu0 %821, %v805
    %v823 = vpop.permute.xlu0 %822
    %v824 = vlaneseq
    %v825 = vshrl.u32 %v824, 7
    %v826 = vsub.s32 0, %v825
    %v827 = vrot.slane %v823, %v826
    %828 = vset.pattern.permute.xlu0 0
    %829 = vperm.xlu0 %828, %v806
    %v830 = vpop.permute.xlu0 %829
    %v831 = vlaneseq
    %v832 = vshrl.u32 %v831, 7
    %v833 = vsub.s32 0, %v832
    %v834 = vrot.slane %v830, %v833
    %835 = vset.pattern.permute.xlu0 0
    %836 = vperm.xlu0 %835, %v807
    %v837 = vpop.permute.xlu0 %836
    %v838 = vlaneseq
    %v839 = vshrl.u32 %v838, 7
    %v840 = vsub.s32 0, %v839
    %v841 = vrot.slane %v837, %v840
    %842 = vset.pattern.permute.xlu0 0
    %843 = vperm.xlu0 %842, %v808
    %v844 = vpop.permute.xlu0 %843
    %v845 = vlaneseq
    %v846 = vshrl.u32 %v845, 7
    %v847 = vsub.s32 0, %v846
    %v848 = vrot.slane %v844, %v847
    %849 = vset.pattern.permute.xlu0 0
    %850 = vperm.xlu0 %849, %v809
    %v851 = vpop.permute.xlu0 %850
    %v852 = vlaneseq
    %v853 = vshrl.u32 %v852, 7
    %v854 = vsub.s32 0, %v853
    %v855 = vrot.slane %v851, %v854
    %856 = vset.pattern.permute.xlu0 0
    %857 = vperm.xlu0 %856, %v810
    %v858 = vpop.permute.xlu0 %857
    %v859 = vlaneseq
    %v860 = vshrl.u32 %v859, 7
    %v861 = vsub.s32 0, %v860
    %v862 = vrot.slane %v858, %v861
    %863 = vset.pattern.permute.xlu0 0
    %864 = vperm.xlu0 %863, %v811
    %v865 = vpop.permute.xlu0 %864
    %v866 = vlaneseq
    %v867 = vshrl.u32 %v866, 7
    %v868 = vsub.s32 0, %v867
    %v869 = vrot.slane %v865, %v868
    %vm870 = vcmp.lt.s32.totalorder %v813, %v820
    %vm871 = vcmp.lt.s32.totalorder %v813, %v827
    %vm872 = vcmp.lt.s32.totalorder %v813, %v834
    %vm873 = vcmp.lt.s32.totalorder %v813, %v841
    %vm874 = vcmp.lt.s32.totalorder %v813, %v848
    %vm875 = vcmp.lt.s32.totalorder %v813, %v855
    %vm876 = vcmp.lt.s32.totalorder %v813, %v862
    %vm877 = vcmp.lt.s32.totalorder %v813, %v869
    %v878 = vsel %vm870, 1, 0
    %v879 = vsel %vm871, 1, 0
    %v880 = vsel %vm872, 1, 0
    %v881 = vsel %vm873, 1, 0
    %v882 = vsel %vm874, 1, 0
    %v883 = vsel %vm875, 1, 0
    %v884 = vsel %vm876, 1, 0
    %v885 = vsel %vm877, 1, 0
    %vm886 = vcmp.eq.s32.totalorder %v878, 1
    %vm887 = vcmp.eq.s32.totalorder %v879, 1
    %vm888 = vcmp.eq.s32.totalorder %v880, 1
    %vm889 = vcmp.eq.s32.totalorder %v881, 1
    %vm890 = vcmp.eq.s32.totalorder %v882, 1
    %vm891 = vcmp.eq.s32.totalorder %v883, 1
    %vm892 = vcmp.eq.s32.totalorder %v884, 1
    %vm893 = vcmp.eq.s32.totalorder %v885, 1
    %v894 = vsel %vm886, %v269, -3e+38
    %v895 = vsel %vm887, %v345, -3e+38
    %v896 = vsel %vm888, %v421, -3e+38
    %v897 = vsel %vm889, %v497, -3e+38
    %v898 = vsel %vm890, %v573, -3e+38
    %v899 = vsel %vm891, %v649, -3e+38
    %v900 = vsel %vm892, %v725, -3e+38
    %v901 = vsel %vm893, %v801, -3e+38
    %vm902 = vcmask 64512
    %v903 = vsel %vm902, %v894, -inf
    %904 = vmax.xlane.f32.xlu0 %v903
    %v905 = vpop.xlane.xlu0 %904
    %v906 = vsel %vm902, %v895, -inf
    %907 = vmax.xlane.f32.xlu0 %v906
    %v908 = vpop.xlane.xlu0 %907
    %v909 = vsel %vm902, %v896, -inf
    %910 = vmax.xlane.f32.xlu0 %v909
    %v911 = vpop.xlane.xlu0 %910
    %v912 = vsel %vm902, %v897, -inf
    %913 = vmax.xlane.f32.xlu0 %v912
    %v914 = vpop.xlane.xlu0 %913
    %v915 = vsel %vm902, %v898, -inf
    %916 = vmax.xlane.f32.xlu0 %v915
    %v917 = vpop.xlane.xlu0 %916
    %v918 = vsel %vm902, %v899, -inf
    %919 = vmax.xlane.f32.xlu0 %v918
    %v920 = vpop.xlane.xlu0 %919
    %v921 = vsel %vm902, %v900, -inf
    %922 = vmax.xlane.f32.xlu0 %v921
    %v923 = vpop.xlane.xlu0 %922
    %v924 = vsel %vm902, %v901, -inf
    %925 = vmax.xlane.f32.xlu0 %v924
    %v926 = vpop.xlane.xlu0 %925
    %v927 = vsub.f32 %v269, %v905
    %v928 = vsub.f32 %v345, %v908
    %v929 = vsub.f32 %v421, %v911
    %v930 = vsub.f32 %v497, %v914
    %v931 = vsub.f32 %v573, %v917
    %v932 = vsub.f32 %v649, %v920
    %v933 = vsub.f32 %v725, %v923
    %v934 = vsub.f32 %v801, %v926
    %v935 = vmul.f32 %v927, 1.442695
    %v936 = vpow.pop %v935
    %v937 = vmul.f32 %v928, 1.442695
    %v938 = vpow.pop %v937
    %v939 = vmul.f32 %v929, 1.442695
    %v940 = vpow.pop %v939
    %v941 = vmul.f32 %v930, 1.442695
    %v942 = vpow.pop %v941
    %v943 = vmul.f32 %v931, 1.442695
    %v944 = vpow.pop %v943
    %v945 = vmul.f32 %v932, 1.442695
    %v946 = vpow.pop %v945
    %v947 = vmul.f32 %v933, 1.442695
    %v948 = vpow.pop %v947
    %v949 = vmul.f32 %v934, 1.442695
    %v950 = vpow.pop %v949
    %v951 = vsel %vm886, %v936, 0.0
    %v952 = vsel %vm887, %v938, 0.0
    %v953 = vsel %vm888, %v940, 0.0
    %v954 = vsel %vm889, %v942, 0.0
    %v955 = vsel %vm890, %v944, 0.0
    %v956 = vsel %vm891, %v946, 0.0
    %v957 = vsel %vm892, %v948, 0.0
    %v958 = vsel %vm893, %v950, 0.0
    %v959 = vsel %vm902, %v951, 0.0
    %960 = vadd.xlane.f32.xlu0 %v959
    %v961 = vpop.xlane.xlu0 %960
    %v962 = vsel %vm902, %v952, 0.0
    %963 = vadd.xlane.f32.xlu0 %v962
    %v964 = vpop.xlane.xlu0 %963
    %v965 = vsel %vm902, %v953, 0.0
    %966 = vadd.xlane.f32.xlu0 %v965
    %v967 = vpop.xlane.xlu0 %966
    %v968 = vsel %vm902, %v954, 0.0
    %969 = vadd.xlane.f32.xlu0 %v968
    %v970 = vpop.xlane.xlu0 %969
    %v971 = vsel %vm902, %v955, 0.0
    %972 = vadd.xlane.f32.xlu0 %v971
    %v973 = vpop.xlane.xlu0 %972
    %v974 = vsel %vm902, %v956, 0.0
    %975 = vadd.xlane.f32.xlu0 %v974
    %v976 = vpop.xlane.xlu0 %975
    %v977 = vsel %vm902, %v957, 0.0
    %978 = vadd.xlane.f32.xlu0 %v977
    %v979 = vpop.xlane.xlu0 %978
    %v980 = vsel %vm902, %v958, 0.0
    %981 = vadd.xlane.f32.xlu0 %v980
    %v982 = vpop.xlane.xlu0 %981
    %v983 = vrcp.pop %v961
    %v984 = vrcp.pop %v964
    %v985 = vrcp.pop %v967
    %v986 = vrcp.pop %v970
    %v987 = vrcp.pop %v973
    %v988 = vrcp.pop %v976
    %v989 = vrcp.pop %v979
    %v990 = vrcp.pop %v982
    %v991 = vmul.f32 %v951, %v983
    %v992 = vmul.f32 %v952, %v984
    %v993 = vmul.f32 %v953, %v985
    %v994 = vmul.f32 %v954, %v986
    %v995 = vmul.f32 %v955, %v987
    %v996 = vmul.f32 %v956, %v988
    %v997 = vmul.f32 %v957, %v989
    %v998 = vmul.f32 %v958, %v990
    %v1000 = vsel %vm902, %v991, 0
    %1002 = vmatprep.subr.mxu0 0.0
    %1003 = vmatpush1.msra.mxu0 %v187
    %1004 = vmatprep.subr.mxu0 0.0
    %1005 = vmatpush1.msra.mxu0 0.0
    %1006 = vmatprep.subr.mxu0 0.0
    %1007 = vmatpush1.msra.mxu0 0.0
    %1008 = vmatprep.subr.mxu0 0.0
    %1009 = vmatpush1.msra.mxu0 0.0
    %1010 = vmatprep.subr.mxu0 0.0
    %1011 = vmatpush1.msra.mxu0 0.0
    %1012 = vmatprep.subr.mxu0 0.0
    %1013 = vmatpush1.msra.mxu0 0.0
    %1014 = vmatprep.subr.mxu0 0.0
    %1015 = vmatpush1.msra.mxu0 0.0
    %1016 = vmatprep.subr.mxu0 0.0
    %1017 = vmatpush1.msra.mxu0 0.0
    %1018 = vmatprep.subr.mxu0 0.0
    %1019 = vmatpush1.msra.mxu0 0.0
    %1020 = vmatprep.subr.mxu0 0.0
    %1021 = vmatpush1.msra.mxu0 0.0
    %1022 = vmatprep.subr.mxu0 0.0
    %1023 = vmatpush1.msra.mxu0 0.0
    %1024 = vmatprep.subr.mxu0 0.0
    %1025 = vmatpush1.msra.mxu0 0.0
    %1026 = vmatprep.subr.mxu0 0.0
    %1027 = vmatpush1.msra.mxu0 0.0
    %1028 = vmatprep.subr.mxu0 0.0
    %1029 = vmatpush1.msra.mxu0 0.0
    %1030 = vmatprep.subr.mxu0 0.0
    %1031 = vmatpush1.msra.mxu0 0.0
    %1032 = vmatprep.subr.mxu0 0.0
    %1033 = vmatpush1.msra.mxu0 0.0
    %1034 = vmatprep.subr.mxu0 0.0
    %1035 = vmatpush1.msra.mxu0 0.0
    %1036 = vmatprep.subr.mxu0 0.0
    %1037 = vmatpush1.msra.mxu0 0.0
    %1038 = vmatprep.subr.mxu0 0.0
    %1039 = vmatpush1.msra.mxu0 0.0
    %1040 = vmatprep.subr.mxu0 0.0
    %1041 = vmatpush1.msra.mxu0 0.0
    %1042 = vmatprep.subr.mxu0 0.0
    %1043 = vmatpush1.msra.mxu0 0.0
    %1044 = vmatprep.subr.mxu0 0.0
    %1045 = vmatpush1.msra.mxu0 0.0
    %1046 = vmatprep.subr.mxu0 0.0
    %1047 = vmatpush1.msra.mxu0 0.0
    %1048 = vmatprep.subr.mxu0 0.0
    %1049 = vmatpush1.msra.mxu0 0.0
    %1050 = vmatprep.subr.mxu0 0.0
    %1051 = vmatpush1.msra.mxu0 0.0
    %1052 = vmatprep.subr.mxu0 0.0
    %1053 = vmatpush1.msra.mxu0 0.0
    %1054 = vmatprep.subr.mxu0 0.0
    %1055 = vmatpush1.msra.mxu0 0.0
    %1056 = vmatprep.subr.mxu0 0.0
    %1057 = vmatpush1.msra.mxu0 0.0
    %1058 = vmatprep.subr.mxu0 0.0
    %1059 = vmatpush1.msra.mxu0 0.0
    %1060 = vmatprep.subr.mxu0 0.0
    %1061 = vmatpush1.msra.mxu0 0.0
    %1062 = vmatprep.subr.mxu0 0.0
    %1063 = vmatpush1.msra.mxu0 0.0
    %1064 = vmatprep.subr.mxu0 0.0
    %1065 = vmatpush1.msra.mxu0 0.0
    %1066 = vmatprep.mubr.f32.mxu0 0.0
    %1067 = vmatmul.mubr.f32.gmra.mrb[0].mxu0 %v1000
    %v1068 = vpop.f32.mrb[0].mxu0
    %v1069 = vadd.f32 0.0, %v1068
    %v1070 = vpop.f32.mrb[0].mxu0
    %1071 = vdwg.mxu0
    %v1073 = vsel %vm902, %v992, 0
    %1075 = vmatprep.subr.mxu0 0.0
    %1076 = vmatpush1.msra.mxu0 %v188
    %1077 = vmatprep.subr.mxu0 0.0
    %1078 = vmatpush1.msra.mxu0 0.0
    %1079 = vmatprep.subr.mxu0 0.0
    %1080 = vmatpush1.msra.mxu0 0.0
    %1081 = vmatprep.subr.mxu0 0.0
    %1082 = vmatpush1.msra.mxu0 0.0
    %1083 = vmatprep.subr.mxu0 0.0
    %1084 = vmatpush1.msra.mxu0 0.0
    %1085 = vmatprep.subr.mxu0 0.0
    %1086 = vmatpush1.msra.mxu0 0.0
    %1087 = vmatprep.subr.mxu0 0.0
    %1088 = vmatpush1.msra.mxu0 0.0
    %1089 = vmatprep.subr.mxu0 0.0
    %1090 = vmatpush1.msra.mxu0 0.0
    %1091 = vmatprep.subr.mxu0 0.0
    %1092 = vmatpush1.msra.mxu0 0.0
    %1093 = vmatprep.subr.mxu0 0.0
    %1094 = vmatpush1.msra.mxu0 0.0
    %1095 = vmatprep.subr.mxu0 0.0
    %1096 = vmatpush1.msra.mxu0 0.0
    %1097 = vmatprep.subr.mxu0 0.0
    %1098 = vmatpush1.msra.mxu0 0.0
    %1099 = vmatprep.subr.mxu0 0.0
    %1100 = vmatpush1.msra.mxu0 0.0
    %1101 = vmatprep.subr.mxu0 0.0
    %1102 = vmatpush1.msra.mxu0 0.0
    %1103 = vmatprep.subr.mxu0 0.0
    %1104 = vmatpush1.msra.mxu0 0.0
    %1105 = vmatprep.subr.mxu0 0.0
    %1106 = vmatpush1.msra.mxu0 0.0
    %1107 = vmatprep.subr.mxu0 0.0
    %1108 = vmatpush1.msra.mxu0 0.0
    %1109 = vmatprep.subr.mxu0 0.0
    %1110 = vmatpush1.msra.mxu0 0.0
    %1111 = vmatprep.subr.mxu0 0.0
    %1112 = vmatpush1.msra.mxu0 0.0
    %1113 = vmatprep.subr.mxu0 0.0
    %1114 = vmatpush1.msra.mxu0 0.0
    %1115 = vmatprep.subr.mxu0 0.0
    %1116 = vmatpush1.msra.mxu0 0.0
    %1117 = vmatprep.subr.mxu0 0.0
    %1118 = vmatpush1.msra.mxu0 0.0
    %1119 = vmatprep.subr.mxu0 0.0
    %1120 = vmatpush1.msra.mxu0 0.0
    %1121 = vmatprep.subr.mxu0 0.0
    %1122 = vmatpush1.msra.mxu0 0.0
    %1123 = vmatprep.subr.mxu0 0.0
    %1124 = vmatpush1.msra.mxu0 0.0
    %1125 = vmatprep.subr.mxu0 0.0
    %1126 = vmatpush1.msra.mxu0 0.0
    %1127 = vmatprep.subr.mxu0 0.0
    %1128 = vmatpush1.msra.mxu0 0.0
    %1129 = vmatprep.subr.mxu0 0.0
    %1130 = vmatpush1.msra.mxu0 0.0
    %1131 = vmatprep.subr.mxu0 0.0
    %1132 = vmatpush1.msra.mxu0 0.0
    %1133 = vmatprep.subr.mxu0 0.0
    %1134 = vmatpush1.msra.mxu0 0.0
    %1135 = vmatprep.subr.mxu0 0.0
    %1136 = vmatpush1.msra.mxu0 0.0
    %1137 = vmatprep.subr.mxu0 0.0
    %1138 = vmatpush1.msra.mxu0 0.0
    %1139 = vmatprep.mubr.f32.mxu0 0.0
    %1140 = vmatmul.mubr.f32.gmra.mrb[0].mxu0 %v1073
    %v1141 = vpop.f32.mrb[0].mxu0
    %v1142 = vadd.f32 0.0, %v1141
    %v1143 = vpop.f32.mrb[0].mxu0
    %1144 = vdwg.mxu0
    %v1146 = vsel %vm902, %v993, 0
    %1148 = vmatprep.subr.mxu0 0.0
    %1149 = vmatpush1.msra.mxu0 %v189
    %1150 = vmatprep.subr.mxu0 0.0
    %1151 = vmatpush1.msra.mxu0 0.0
    %1152 = vmatprep.subr.mxu0 0.0
    %1153 = vmatpush1.msra.mxu0 0.0
    %1154 = vmatprep.subr.mxu0 0.0
    %1155 = vmatpush1.msra.mxu0 0.0
    %1156 = vmatprep.subr.mxu0 0.0
    %1157 = vmatpush1.msra.mxu0 0.0
    %1158 = vmatprep.subr.mxu0 0.0
    %1159 = vmatpush1.msra.mxu0 0.0
    %1160 = vmatprep.subr.mxu0 0.0
    %1161 = vmatpush1.msra.mxu0 0.0
    %1162 = vmatprep.subr.mxu0 0.0
    %1163 = vmatpush1.msra.mxu0 0.0
    %1164 = vmatprep.subr.mxu0 0.0
    %1165 = vmatpush1.msra.mxu0 0.0
    %1166 = vmatprep.subr.mxu0 0.0
    %1167 = vmatpush1.msra.mxu0 0.0
    %1168 = vmatprep.subr.mxu0 0.0
    %1169 = vmatpush1.msra.mxu0 0.0
    %1170 = vmatprep.subr.mxu0 0.0
    %1171 = vmatpush1.msra.mxu0 0.0
    %1172 = vmatprep.subr.mxu0 0.0
    %1173 = vmatpush1.msra.mxu0 0.0
    %1174 = vmatprep.subr.mxu0 0.0
    %1175 = vmatpush1.msra.mxu0 0.0
    %1176 = vmatprep.subr.mxu0 0.0
    %1177 = vmatpush1.msra.mxu0 0.0
    %1178 = vmatprep.subr.mxu0 0.0
    %1179 = vmatpush1.msra.mxu0 0.0
    %1180 = vmatprep.subr.mxu0 0.0
    %1181 = vmatpush1.msra.mxu0 0.0
    %1182 = vmatprep.subr.mxu0 0.0
    %1183 = vmatpush1.msra.mxu0 0.0
    %1184 = vmatprep.subr.mxu0 0.0
    %1185 = vmatpush1.msra.mxu0 0.0
    %1186 = vmatprep.subr.mxu0 0.0
    %1187 = vmatpush1.msra.mxu0 0.0
    %1188 = vmatprep.subr.mxu0 0.0
    %1189 = vmatpush1.msra.mxu0 0.0
    %1190 = vmatprep.subr.mxu0 0.0
    %1191 = vmatpush1.msra.mxu0 0.0
    %1192 = vmatprep.subr.mxu0 0.0
    %1193 = vmatpush1.msra.mxu0 0.0
    %1194 = vmatprep.subr.mxu0 0.0
    %1195 = vmatpush1.msra.mxu0 0.0
    %1196 = vmatprep.subr.mxu0 0.0
    %1197 = vmatpush1.msra.mxu0 0.0
    %1198 = vmatprep.subr.mxu0 0.0
    %1199 = vmatpush1.msra.mxu0 0.0
    %1200 = vmatprep.subr.mxu0 0.0
    %1201 = vmatpush1.msra.mxu0 0.0
    %1202 = vmatprep.subr.mxu0 0.0
    %1203 = vmatpush1.msra.mxu0 0.0
    %1204 = vmatprep.subr.mxu0 0.0
    %1205 = vmatpush1.msra.mxu0 0.0
    %1206 = vmatprep.subr.mxu0 0.0
    %1207 = vmatpush1.msra.mxu0 0.0
    %1208 = vmatprep.subr.mxu0 0.0
    %1209 = vmatpush1.msra.mxu0 0.0
    %1210 = vmatprep.subr.mxu0 0.0
    %1211 = vmatpush1.msra.mxu0 0.0
    %1212 = vmatprep.mubr.f32.mxu0 0.0
    %1213 = vmatmul.mubr.f32.gmra.mrb[0].mxu0 %v1146
    %v1214 = vpop.f32.mrb[0].mxu0
    %v1215 = vadd.f32 0.0, %v1214
    %v1216 = vpop.f32.mrb[0].mxu0
    %1217 = vdwg.mxu0
    %v1219 = vsel %vm902, %v994, 0
    %1221 = vmatprep.subr.mxu0 0.0
    %1222 = vmatpush1.msra.mxu0 %v190
    %1223 = vmatprep.subr.mxu0 0.0
    %1224 = vmatpush1.msra.mxu0 0.0
    %1225 = vmatprep.subr.mxu0 0.0
    %1226 = vmatpush1.msra.mxu0 0.0
    %1227 = vmatprep.subr.mxu0 0.0
    %1228 = vmatpush1.msra.mxu0 0.0
    %1229 = vmatprep.subr.mxu0 0.0
    %1230 = vmatpush1.msra.mxu0 0.0
    %1231 = vmatprep.subr.mxu0 0.0
    %1232 = vmatpush1.msra.mxu0 0.0
    %1233 = vmatprep.subr.mxu0 0.0
    %1234 = vmatpush1.msra.mxu0 0.0
    %1235 = vmatprep.subr.mxu0 0.0
    %1236 = vmatpush1.msra.mxu0 0.0
    %1237 = vmatprep.subr.mxu0 0.0
    %1238 = vmatpush1.msra.mxu0 0.0
    %1239 = vmatprep.subr.mxu0 0.0
    %1240 = vmatpush1.msra.mxu0 0.0
    %1241 = vmatprep.subr.mxu0 0.0
    %1242 = vmatpush1.msra.mxu0 0.0
    %1243 = vmatprep.subr.mxu0 0.0
    %1244 = vmatpush1.msra.mxu0 0.0
    %1245 = vmatprep.subr.mxu0 0.0
    %1246 = vmatpush1.msra.mxu0 0.0
    %1247 = vmatprep.subr.mxu0 0.0
    %1248 = vmatpush1.msra.mxu0 0.0
    %1249 = vmatprep.subr.mxu0 0.0
    %1250 = vmatpush1.msra.mxu0 0.0
    %1251 = vmatprep.subr.mxu0 0.0
    %1252 = vmatpush1.msra.mxu0 0.0
    %1253 = vmatprep.subr.mxu0 0.0
    %1254 = vmatpush1.msra.mxu0 0.0
    %1255 = vmatprep.subr.mxu0 0.0
    %1256 = vmatpush1.msra.mxu0 0.0
    %1257 = vmatprep.subr.mxu0 0.0
    %1258 = vmatpush1.msra.mxu0 0.0
    %1259 = vmatprep.subr.mxu0 0.0
    %1260 = vmatpush1.msra.mxu0 0.0
    %1261 = vmatprep.subr.mxu0 0.0
    %1262 = vmatpush1.msra.mxu0 0.0
    %1263 = vmatprep.subr.mxu0 0.0
    %1264 = vmatpush1.msra.mxu0 0.0
    %1265 = vmatprep.subr.mxu0 0.0
    %1266 = vmatpush1.msra.mxu0 0.0
    %1267 = vmatprep.subr.mxu0 0.0
    %1268 = vmatpush1.msra.mxu0 0.0
    %1269 = vmatprep.subr.mxu0 0.0
    %1270 = vmatpush1.msra.mxu0 0.0
    %1271 = vmatprep.subr.mxu0 0.0
    %1272 = vmatpush1.msra.mxu0 0.0
    %1273 = vmatprep.subr.mxu0 0.0
    %1274 = vmatpush1.msra.mxu0 0.0
    %1275 = vmatprep.subr.mxu0 0.0
    %1276 = vmatpush1.msra.mxu0 0.0
    %1277 = vmatprep.subr.mxu0 0.0
    %1278 = vmatpush1.msra.mxu0 0.0
    %1279 = vmatprep.subr.mxu0 0.0
    %1280 = vmatpush1.msra.mxu0 0.0
    %1281 = vmatprep.subr.mxu0 0.0
    %1282 = vmatpush1.msra.mxu0 0.0
    %1283 = vmatprep.subr.mxu0 0.0
    %1284 = vmatpush1.msra.mxu0 0.0
    %1285 = vmatprep.mubr.f32.mxu0 0.0
    %1286 = vmatmul.mubr.f32.gmra.mrb[0].mxu0 %v1219
    %v1287 = vpop.f32.mrb[0].mxu0
    %v1288 = vadd.f32 0.0, %v1287
    %v1289 = vpop.f32.mrb[0].mxu0
    %1290 = vdwg.mxu0
    %v1292 = vsel %vm902, %v995, 0
    %1294 = vmatprep.subr.mxu0 0.0
    %1295 = vmatpush1.msra.mxu0 %v191
    %1296 = vmatprep.subr.mxu0 0.0
    %1297 = vmatpush1.msra.mxu0 0.0
    %1298 = vmatprep.subr.mxu0 0.0
    %1299 = vmatpush1.msra.mxu0 0.0
    %1300 = vmatprep.subr.mxu0 0.0
    %1301 = vmatpush1.msra.mxu0 0.0
    %1302 = vmatprep.subr.mxu0 0.0
    %1303 = vmatpush1.msra.mxu0 0.0
    %1304 = vmatprep.subr.mxu0 0.0
    %1305 = vmatpush1.msra.mxu0 0.0
    %1306 = vmatprep.subr.mxu0 0.0
    %1307 = vmatpush1.msra.mxu0 0.0
    %1308 = vmatprep.subr.mxu0 0.0
    %1309 = vmatpush1.msra.mxu0 0.0
    %1310 = vmatprep.subr.mxu0 0.0
    %1311 = vmatpush1.msra.mxu0 0.0
    %1312 = vmatprep.subr.mxu0 0.0
    %1313 = vmatpush1.msra.mxu0 0.0
    %1314 = vmatprep.subr.mxu0 0.0
    %1315 = vmatpush1.msra.mxu0 0.0
    %1316 = vmatprep.subr.mxu0 0.0
    %1317 = vmatpush1.msra.mxu0 0.0
    %1318 = vmatprep.subr.mxu0 0.0
    %1319 = vmatpush1.msra.mxu0 0.0
    %1320 = vmatprep.subr.mxu0 0.0
    %1321 = vmatpush1.msra.mxu0 0.0
    %1322 = vmatprep.subr.mxu0 0.0
    %1323 = vmatpush1.msra.mxu0 0.0
    %1324 = vmatprep.subr.mxu0 0.0
    %1325 = vmatpush1.msra.mxu0 0.0
    %1326 = vmatprep.subr.mxu0 0.0
    %1327 = vmatpush1.msra.mxu0 0.0
    %1328 = vmatprep.subr.mxu0 0.0
    %1329 = vmatpush1.msra.mxu0 0.0
    %1330 = vmatprep.subr.mxu0 0.0
    %1331 = vmatpush1.msra.mxu0 0.0
    %1332 = vmatprep.subr.mxu0 0.0
    %1333 = vmatpush1.msra.mxu0 0.0
    %1334 = vmatprep.subr.mxu0 0.0
    %1335 = vmatpush1.msra.mxu0 0.0
    %1336 = vmatprep.subr.mxu0 0.0
    %1337 = vmatpush1.msra.mxu0 0.0
    %1338 = vmatprep.subr.mxu0 0.0
    %1339 = vmatpush1.msra.mxu0 0.0
    %1340 = vmatprep.subr.mxu0 0.0
    %1341 = vmatpush1.msra.mxu0 0.0
    %1342 = vmatprep.subr.mxu0 0.0
    %1343 = vmatpush1.msra.mxu0 0.0
    %1344 = vmatprep.subr.mxu0 0.0
    %1345 = vmatpush1.msra.mxu0 0.0
    %1346 = vmatprep.subr.mxu0 0.0
    %1347 = vmatpush1.msra.mxu0 0.0
    %1348 = vmatprep.subr.mxu0 0.0
    %1349 = vmatpush1.msra.mxu0 0.0
    %1350 = vmatprep.subr.mxu0 0.0
    %1351 = vmatpush1.msra.mxu0 0.0
    %1352 = vmatprep.subr.mxu0 0.0
    %1353 = vmatpush1.msra.mxu0 0.0
    %1354 = vmatprep.subr.mxu0 0.0
    %1355 = vmatpush1.msra.mxu0 0.0
    %1356 = vmatprep.subr.mxu0 0.0
    %1357 = vmatpush1.msra.mxu0 0.0
    %1358 = vmatprep.mubr.f32.mxu0 0.0
    %1359 = vmatmul.mubr.f32.gmra.mrb[0].mxu0 %v1292
    %v1360 = vpop.f32.mrb[0].mxu0
    %v1361 = vadd.f32 0.0, %v1360
    %v1362 = vpop.f32.mrb[0].mxu0
    %1363 = vdwg.mxu0
    %v1365 = vsel %vm902, %v996, 0
    %1367 = vmatprep.subr.mxu0 0.0
    %1368 = vmatpush1.msra.mxu0 %v192
    %1369 = vmatprep.subr.mxu0 0.0
    %1370 = vmatpush1.msra.mxu0 0.0
    %1371 = vmatprep.subr.mxu0 0.0
    %1372 = vmatpush1.msra.mxu0 0.0
    %1373 = vmatprep.subr.mxu0 0.0
    %1374 = vmatpush1.msra.mxu0 0.0
    %1375 = vmatprep.subr.mxu0 0.0
    %1376 = vmatpush1.msra.mxu0 0.0
    %1377 = vmatprep.subr.mxu0 0.0
    %1378 = vmatpush1.msra.mxu0 0.0
    %1379 = vmatprep.subr.mxu0 0.0
    %1380 = vmatpush1.msra.mxu0 0.0
    %1381 = vmatprep.subr.mxu0 0.0
    %1382 = vmatpush1.msra.mxu0 0.0
    %1383 = vmatprep.subr.mxu0 0.0
    %1384 = vmatpush1.msra.mxu0 0.0
    %1385 = vmatprep.subr.mxu0 0.0
    %1386 = vmatpush1.msra.mxu0 0.0
    %1387 = vmatprep.subr.mxu0 0.0
    %1388 = vmatpush1.msra.mxu0 0.0
    %1389 = vmatprep.subr.mxu0 0.0
    %1390 = vmatpush1.msra.mxu0 0.0
    %1391 = vmatprep.subr.mxu0 0.0
    %1392 = vmatpush1.msra.mxu0 0.0
    %1393 = vmatprep.subr.mxu0 0.0
    %1394 = vmatpush1.msra.mxu0 0.0
    %1395 = vmatprep.subr.mxu0 0.0
    %1396 = vmatpush1.msra.mxu0 0.0
    %1397 = vmatprep.subr.mxu0 0.0
    %1398 = vmatpush1.msra.mxu0 0.0
    %1399 = vmatprep.subr.mxu0 0.0
    %1400 = vmatpush1.msra.mxu0 0.0
    %1401 = vmatprep.subr.mxu0 0.0
    %1402 = vmatpush1.msra.mxu0 0.0
    %1403 = vmatprep.subr.mxu0 0.0
    %1404 = vmatpush1.msra.mxu0 0.0
    %1405 = vmatprep.subr.mxu0 0.0
    %1406 = vmatpush1.msra.mxu0 0.0
    %1407 = vmatprep.subr.mxu0 0.0
    %1408 = vmatpush1.msra.mxu0 0.0
    %1409 = vmatprep.subr.mxu0 0.0
    %1410 = vmatpush1.msra.mxu0 0.0
    %1411 = vmatprep.subr.mxu0 0.0
    %1412 = vmatpush1.msra.mxu0 0.0
    %1413 = vmatprep.subr.mxu0 0.0
    %1414 = vmatpush1.msra.mxu0 0.0
    %1415 = vmatprep.subr.mxu0 0.0
    %1416 = vmatpush1.msra.mxu0 0.0
    %1417 = vmatprep.subr.mxu0 0.0
    %1418 = vmatpush1.msra.mxu0 0.0
    %1419 = vmatprep.subr.mxu0 0.0
    %1420 = vmatpush1.msra.mxu0 0.0
    %1421 = vmatprep.subr.mxu0 0.0
    %1422 = vmatpush1.msra.mxu0 0.0
    %1423 = vmatprep.subr.mxu0 0.0
    %1424 = vmatpush1.msra.mxu0 0.0
    %1425 = vmatprep.subr.mxu0 0.0
    %1426 = vmatpush1.msra.mxu0 0.0
    %1427 = vmatprep.subr.mxu0 0.0
    %1428 = vmatpush1.msra.mxu0 0.0
    %1429 = vmatprep.subr.mxu0 0.0
    %1430 = vmatpush1.msra.mxu0 0.0
    %1431 = vmatprep.mubr.f32.mxu0 0.0
    %1432 = vmatmul.mubr.f32.gmra.mrb[0].mxu0 %v1365
    %v1433 = vpop.f32.mrb[0].mxu0
    %v1434 = vadd.f32 0.0, %v1433
    %v1435 = vpop.f32.mrb[0].mxu0
    %1436 = vdwg.mxu0
    %v1438 = vsel %vm902, %v997, 0
    %1440 = vmatprep.subr.mxu0 0.0
    %1441 = vmatpush1.msra.mxu0 %v193
    %1442 = vmatprep.subr.mxu0 0.0
    %1443 = vmatpush1.msra.mxu0 0.0
    %1444 = vmatprep.subr.mxu0 0.0
    %1445 = vmatpush1.msra.mxu0 0.0
    %1446 = vmatprep.subr.mxu0 0.0
    %1447 = vmatpush1.msra.mxu0 0.0
    %1448 = vmatprep.subr.mxu0 0.0
    %1449 = vmatpush1.msra.mxu0 0.0
    %1450 = vmatprep.subr.mxu0 0.0
    %1451 = vmatpush1.msra.mxu0 0.0
    %1452 = vmatprep.subr.mxu0 0.0
    %1453 = vmatpush1.msra.mxu0 0.0
    %1454 = vmatprep.subr.mxu0 0.0
    %1455 = vmatpush1.msra.mxu0 0.0
    %1456 = vmatprep.subr.mxu0 0.0
    %1457 = vmatpush1.msra.mxu0 0.0
    %1458 = vmatprep.subr.mxu0 0.0
    %1459 = vmatpush1.msra.mxu0 0.0
    %1460 = vmatprep.subr.mxu0 0.0
    %1461 = vmatpush1.msra.mxu0 0.0
    %1462 = vmatprep.subr.mxu0 0.0
    %1463 = vmatpush1.msra.mxu0 0.0
    %1464 = vmatprep.subr.mxu0 0.0
    %1465 = vmatpush1.msra.mxu0 0.0
    %1466 = vmatprep.subr.mxu0 0.0
    %1467 = vmatpush1.msra.mxu0 0.0
    %1468 = vmatprep.subr.mxu0 0.0
    %1469 = vmatpush1.msra.mxu0 0.0
    %1470 = vmatprep.subr.mxu0 0.0
    %1471 = vmatpush1.msra.mxu0 0.0
    %1472 = vmatprep.subr.mxu0 0.0
    %1473 = vmatpush1.msra.mxu0 0.0
    %1474 = vmatprep.subr.mxu0 0.0
    %1475 = vmatpush1.msra.mxu0 0.0
    %1476 = vmatprep.subr.mxu0 0.0
    %1477 = vmatpush1.msra.mxu0 0.0
    %1478 = vmatprep.subr.mxu0 0.0
    %1479 = vmatpush1.msra.mxu0 0.0
    %1480 = vmatprep.subr.mxu0 0.0
    %1481 = vmatpush1.msra.mxu0 0.0
    %1482 = vmatprep.subr.mxu0 0.0
    %1483 = vmatpush1.msra.mxu0 0.0
    %1484 = vmatprep.subr.mxu0 0.0
    %1485 = vmatpush1.msra.mxu0 0.0
    %1486 = vmatprep.subr.mxu0 0.0
    %1487 = vmatpush1.msra.mxu0 0.0
    %1488 = vmatprep.subr.mxu0 0.0
    %1489 = vmatpush1.msra.mxu0 0.0
    %1490 = vmatprep.subr.mxu0 0.0
    %1491 = vmatpush1.msra.mxu0 0.0
    %1492 = vmatprep.subr.mxu0 0.0
    %1493 = vmatpush1.msra.mxu0 0.0
    %1494 = vmatprep.subr.mxu0 0.0
    %1495 = vmatpush1.msra.mxu0 0.0
    %1496 = vmatprep.subr.mxu0 0.0
    %1497 = vmatpush1.msra.mxu0 0.0
    %1498 = vmatprep.subr.mxu0 0.0
    %1499 = vmatpush1.msra.mxu0 0.0
    %1500 = vmatprep.subr.mxu0 0.0
    %1501 = vmatpush1.msra.mxu0 0.0
    %1502 = vmatprep.subr.mxu0 0.0
    %1503 = vmatpush1.msra.mxu0 0.0
    %1504 = vmatprep.mubr.f32.mxu0 0.0
    %1505 = vmatmul.mubr.f32.gmra.mrb[0].mxu0 %v1438
    %v1506 = vpop.f32.mrb[0].mxu0
    %v1507 = vadd.f32 0.0, %v1506
    %v1508 = vpop.f32.mrb[0].mxu0
    %1509 = vdwg.mxu0
    %v1511 = vsel %vm902, %v998, 0
    %1513 = vmatprep.subr.mxu0 0.0
    %1514 = vmatpush1.msra.mxu0 %v194
    %1515 = vmatprep.subr.mxu0 0.0
    %1516 = vmatpush1.msra.mxu0 0.0
    %1517 = vmatprep.subr.mxu0 0.0
    %1518 = vmatpush1.msra.mxu0 0.0
    %1519 = vmatprep.subr.mxu0 0.0
    %1520 = vmatpush1.msra.mxu0 0.0
    %1521 = vmatprep.subr.mxu0 0.0
    %1522 = vmatpush1.msra.mxu0 0.0
    %1523 = vmatprep.subr.mxu0 0.0
    %1524 = vmatpush1.msra.mxu0 0.0
    %1525 = vmatprep.subr.mxu0 0.0
    %1526 = vmatpush1.msra.mxu0 0.0
    %1527 = vmatprep.subr.mxu0 0.0
    %1528 = vmatpush1.msra.mxu0 0.0
    %1529 = vmatprep.subr.mxu0 0.0
    %1530 = vmatpush1.msra.mxu0 0.0
    %1531 = vmatprep.subr.mxu0 0.0
    %1532 = vmatpush1.msra.mxu0 0.0
    %1533 = vmatprep.subr.mxu0 0.0
    %1534 = vmatpush1.msra.mxu0 0.0
    %1535 = vmatprep.subr.mxu0 0.0
    %1536 = vmatpush1.msra.mxu0 0.0
    %1537 = vmatprep.subr.mxu0 0.0
    %1538 = vmatpush1.msra.mxu0 0.0
    %1539 = vmatprep.subr.mxu0 0.0
    %1540 = vmatpush1.msra.mxu0 0.0
    %1541 = vmatprep.subr.mxu0 0.0
    %1542 = vmatpush1.msra.mxu0 0.0
    %1543 = vmatprep.subr.mxu0 0.0
    %1544 = vmatpush1.msra.mxu0 0.0
    %1545 = vmatprep.subr.mxu0 0.0
    %1546 = vmatpush1.msra.mxu0 0.0
    %1547 = vmatprep.subr.mxu0 0.0
    %1548 = vmatpush1.msra.mxu0 0.0
    %1549 = vmatprep.subr.mxu0 0.0
    %1550 = vmatpush1.msra.mxu0 0.0
    %1551 = vmatprep.subr.mxu0 0.0
    %1552 = vmatpush1.msra.mxu0 0.0
    %1553 = vmatprep.subr.mxu0 0.0
    %1554 = vmatpush1.msra.mxu0 0.0
    %1555 = vmatprep.subr.mxu0 0.0
    %1556 = vmatpush1.msra.mxu0 0.0
    %1557 = vmatprep.subr.mxu0 0.0
    %1558 = vmatpush1.msra.mxu0 0.0
    %1559 = vmatprep.subr.mxu0 0.0
    %1560 = vmatpush1.msra.mxu0 0.0
    %1561 = vmatprep.subr.mxu0 0.0
    %1562 = vmatpush1.msra.mxu0 0.0
    %1563 = vmatprep.subr.mxu0 0.0
    %1564 = vmatpush1.msra.mxu0 0.0
    %1565 = vmatprep.subr.mxu0 0.0
    %1566 = vmatpush1.msra.mxu0 0.0
    %1567 = vmatprep.subr.mxu0 0.0
    %1568 = vmatpush1.msra.mxu0 0.0
    %1569 = vmatprep.subr.mxu0 0.0
    %1570 = vmatpush1.msra.mxu0 0.0
    %1571 = vmatprep.subr.mxu0 0.0
    %1572 = vmatpush1.msra.mxu0 0.0
    %1573 = vmatprep.subr.mxu0 0.0
    %1574 = vmatpush1.msra.mxu0 0.0
    %1575 = vmatprep.subr.mxu0 0.0
    %1576 = vmatpush1.msra.mxu0 0.0
    %1577 = vmatprep.mubr.f32.mxu0 0.0
    %1578 = vmatmul.mubr.f32.gmra.mrb[0].mxu0 %v1511
    %v1579 = vpop.f32.mrb[0].mxu0
    %v1580 = vadd.f32 0.0, %v1579
    %v1581 = vpop.f32.mrb[0].mxu0
    %1582 = vdwg.mxu0
    %1583 = vst.msk [vmem:[#allocation6] sm:$0xff] %vm902, %v991
    %1584 = vst.msk [vmem:[#allocation6 + $0x8] sm:$0xff] %vm902, %v992
    %1585 = vst.msk [vmem:[#allocation6 + $0x10] sm:$0xff] %vm902, %v993
    %1586 = vst.msk [vmem:[#allocation6 + $0x18] sm:$0xff] %vm902, %v994
    %1587 = vst.msk [vmem:[#allocation6 + $0x20] sm:$0xff] %vm902, %v995
    %1588 = vst.msk [vmem:[#allocation6 + $0x28] sm:$0xff] %vm902, %v996
    %1589 = vst.msk [vmem:[#allocation6 + $0x30] sm:$0xff] %vm902, %v997
    %1590 = vst.msk [vmem:[#allocation6 + $0x38] sm:$0xff] %vm902, %v998
    %1591 = vst.msk [vmem:[#allocation5] sm:$0xff] %vm195, %v1069
    %1592 = vst.msk [vmem:[#allocation5 + $0x8] sm:$0xff] %vm195, %v1142
    %1593 = vst.msk [vmem:[#allocation5 + $0x10] sm:$0xff] %vm195, %v1215
    %1594 = vst.msk [vmem:[#allocation5 + $0x18] sm:$0xff] %vm195, %v1288
    %1595 = vst.msk [vmem:[#allocation5 + $0x20] sm:$0xff] %vm195, %v1361
    %1596 = vst.msk [vmem:[#allocation5 + $0x28] sm:$0xff] %vm195, %v1434
    %1597 = vst.msk [vmem:[#allocation5 + $0x30] sm:$0xff] %vm195, %v1507
    %1598 = vst.msk [vmem:[#allocation5 + $0x38] sm:$0xff] %vm195, %v1580
    // Predicated region
    $region26: #{tpu_custom_call.1} parent=1 // pred_check
      _
    $region27: #{tpu_custom_call.1} parent=1 // pred_check_branch
      %1600 = sbr.rel (0) target = $region29
    $region28: #{tpu_custom_call.1} parent=1 // pred_region
      %s1602 = ssub.s32 1024, 1024
      %1603 = vsyncadd [#allocation4], %s1602
      %s1604 = sshll.u32 [#allocation5], 4
      %s1605 = int_to_ptr.vmem [resolvable:$true] %s1604
      %1610 = dma.vmem_to_hbm [thread:$0]  %s1605, 1024, %s5, [#allocation4], 128, 128, 8
    $region29: #{tpu_custom_call.1} parent=1 // pred_fallthru
      _
    // Predicated region
    $region30: #{tpu_custom_call.1} parent=1 // pred_check
      _
    $region31: #{tpu_custom_call.1} parent=1 // pred_check_branch
      %1612 = sbr.rel (0) target = $region33
    $region32: #{tpu_custom_call.1} parent=1 // pred_region
      %s1614 = ssub.s32 1024, 1024
      %1615 = vsyncadd [#allocation7], %s1614
      %s1616 = sshll.u32 [#allocation6], 4
      %s1617 = int_to_ptr.vmem [resolvable:$true] %s1616
      %1622 = dma.vmem_to_hbm [thread:$0]  %s1617, 1024, %s6, [#allocation7], 128, 128, 8
    $region33: #{tpu_custom_call.1} parent=1 // pred_fallthru
      _
    // Predicated region
    $region34: #{tpu_custom_call.1} parent=1 // pred_check
      _
    $region35: #{tpu_custom_call.1} parent=1 // pred_check_branch
      %1624 = sbr.rel (0) target = $region37
    $region36: #{tpu_custom_call.1} parent=1 // pred_region
      %1625 = dma.done [#allocation4], 1024
    $region37: #{tpu_custom_call.1} parent=1 // pred_fallthru
      _
    // Predicated region
    $region38: #{tpu_custom_call.1} parent=1 // pred_check
      _
    $region39: #{tpu_custom_call.1} parent=1 // pred_check_branch
      %1627 = sbr.rel (0) target = $region41
    $region40: #{tpu_custom_call.1} parent=1 // pred_region
      %1628 = dma.done [#allocation7], 1024
    $region41: #{tpu_custom_call.1} parent=1 // pred_fallthru
      _
    %1629 = vsyncpa [#allocation3], 1
    %1630 = vsyncpa [#allocation4], 1
    %1631 = vsyncpa [#allocation7], 1

// kernel: tpu_custom_call.1
$region0: #{tpu_custom_call.1}
  #allocation0 [shape = 'u32[]', space=smem, size = 0x4, offset = 0x4, fixed_abs, tag = 'smem constant byte address 0x4 - core index']
  #allocation1 [shape = 'u32[144,128]{1,0:T(1,128)}', space=vmem, size = 0x12000, scoped, tag = 'internal scratch']
  %s0 = inlined_call_operand.vmem [shape: s32[8,1,1], index: 0, kind: input, shape index: {}]
  %s1 = inlined_call_operand.hbm [shape: f32[8,8,32], index: 1, kind: input, shape index: {}]
  %s2 = inlined_call_operand.vmem [shape: f32[32,16], index: 2, kind: input, shape index: {}]
  %s3 = inlined_call_operand.vmem [shape: f32[1,16], index: 3, kind: input, shape index: {}]
  %s4 = inlined_call_operand.vmem [shape: f32[8,8,16], index: 4, kind: input, shape index: {}]
  %s5 = inlined_call_operand.hbm [shape: f32[8,8,16], index: 5, kind: output, shape index: {0}]
  %s6 = inlined_call_operand.hbm [shape: f32[8,8,8], index: 6, kind: output, shape index: {1}]
  %7 = xla_tuple %s5, %s6
  %s8 = sld [smem:[#allocation0]]
  $region42: #{tpu_custom_call.1} parent=0
    _
  %s10 = ssub.s32 1, %s8
  %s11 = scalar_select 0, %s10, %s8
  $region1: #{tpu_custom_call.1} parent=0
    #allocation2 [shape = 'u8[32768]{0}', space=vmem, size = 0x8000, scoped, tag = 'input window, operand 1, single buffered']
    #allocation3 [shape = 's32[1]{0}', space=sflag, size = 0x4, scoped, tag = 'scoped memory for tpu_custom_call.1']
    #allocation4 [shape = 's32[1]{0}', space=sflag, size = 0x4, scoped, tag = 'scoped memory for tpu_custom_call.1']
    #allocation5 [shape = 'u8[32768]{0}', space=vmem, size = 0x8000, scoped, tag = 'output window, operand 0, single buffered']
    #allocation6 [shape = 'u8[32768]{0}', space=vmem, size = 0x8000, scoped, tag = 'output window, operand 1, single buffered']
    #allocation7 [shape = 's32[1]{0}', space=sflag, size = 0x4, scoped, tag = 'scoped memory for tpu_custom_call.1']
    %12 = vsyncpa [#allocation3], 0
    %13 = vsyncpa [#allocation4], 0
    %14 = vsyncpa [#allocation7], 0
    // Predicated region
    $region2: #{tpu_custom_call.1} parent=1 // pred_check
      _
    $region3: #{tpu_custom_call.1} parent=1 // pred_check_branch
      %16 = sbr.rel (0) target = $region5
    $region4: #{tpu_custom_call.1} parent=1 // pred_region
      _
    $region5: #{tpu_custom_call.1} parent=1 // pred_fallthru
      _
    // Predicated region
    $region6: #{tpu_custom_call.1} parent=1 // pred_check
      _
    $region7: #{tpu_custom_call.1} parent=1 // pred_check_branch
      %18 = sbr.rel (0) target = $region9
    $region8: #{tpu_custom_call.1} parent=1 // pred_region
      %s20 = ssub.s32 1024, 1024
      %21 = vsyncadd [#allocation3], %s20
      %s22 = sshll.u32 [#allocation2], 4
      %s23 = int_to_ptr.vmem [resolvable:$true] %s22
      %28 = dma.hbm_to_vmem [thread:$0]  %s1, 1024, %s23, [#allocation3], 128, 128, 8
    $region9: #{tpu_custom_call.1} parent=1 // pred_fallthru
      _
    // Predicated region
    $region10: #{tpu_custom_call.1} parent=1 // pred_check
      _
    $region11: #{tpu_custom_call.1} parent=1 // pred_check_branch
      %30 = sbr.rel (0) target = $region13
    $region12: #{tpu_custom_call.1} parent=1 // pred_region
      _
    $region13: #{tpu_custom_call.1} parent=1 // pred_fallthru
      _
    // Predicated region
    $region14: #{tpu_custom_call.1} parent=1 // pred_check
      _
    $region15: #{tpu_custom_call.1} parent=1 // pred_check_branch
      %32 = sbr.rel (0) target = $region17
    $region16: #{tpu_custom_call.1} parent=1 // pred_region
      _
    $region17: #{tpu_custom_call.1} parent=1 // pred_fallthru
      _
    // Predicated region
    $region18: #{tpu_custom_call.1} parent=1 // pred_check
      _
    $region19: #{tpu_custom_call.1} parent=1 // pred_check_branch
      %34 = sbr.rel (0) target = $region21
    $region20: #{tpu_custom_call.1} parent=1 // pred_region
      _
    $region21: #{tpu_custom_call.1} parent=1 // pred_fallthru
      _
    // Predicated region
    $region22: #{tpu_custom_call.1} parent=1 // pred_check
      _
    $region23: #{tpu_custom_call.1} parent=1 // pred_check_branch
      %36 = sbr.rel (0) target = $region25
    $region24: #{tpu_custom_call.1} parent=1 // pred_region
      %37 = dma.done [#allocation3], 1024
    $region25: #{tpu_custom_call.1} parent=1 // pred_fallthru
      _
    %v38 = vld [vmem:[#allocation2] sm:$0xff]
    %v39 = vld [vmem:[#allocation2 + $0x8] sm:$0xff]
    %v40 = vld [vmem:[#allocation2 + $0x10] sm:$0xff]
    %v41 = vld [vmem:[#allocation2 + $0x18] sm:$0xff]
    %v42 = vld [vmem:[#allocation2 + $0x20] sm:$0xff]
    %v43 = vld [vmem:[#allocation2 + $0x28] sm:$0xff]
    %v44 = vld [vmem:[#allocation2 + $0x30] sm:$0xff]
    %v45 = vld [vmem:[#allocation2 + $0x38] sm:$0xff]
    %v46 = vld [vmem:[%s2] sm:$0xff]
    %v47 = vld [vmem:[%s2 + $0x8] sm:$0xff]
    %v48 = vld [vmem:[%s2 + $0x10] sm:$0xff]
    %v49 = vld [vmem:[%s2 + $0x18] sm:$0xff]
    %v50 = vld [vmem:[%s3] sm:$0x1]
    %v52 = vlaneseq
    %v53 = vshrl.u32 %v52, 7
    %v54 = vsub.s32 0, %v53
    %v55 = vrot.slane %v50, %v54
    %vm57 = vcmask 261120
    %v59 = vsel %vm57, %v38, 0
    %v62 = vsel %vm57, %v39, 0
    %v65 = vsel %vm57, %v40, 0
    %v68 = vsel %vm57, %v41, 0
    %v71 = vsel %vm57, %v42, 0
    %v74 = vsel %vm57, %v43, 0
    %v77 = vsel %vm57, %v44, 0
    %v80 = vsel %vm57, %v45, 0
    %82 = vmatprep.subr.mxu0 0.0
    %83 = vmatpush1.msra.mxu0 %v46
    %84 = vmatprep.subr.mxu0 0.0
    %85 = vmatpush1.msra.mxu0 %v47
    %86 = vmatprep.subr.mxu0 0.0
    %87 = vmatpush1.msra.mxu0 %v48
    %88 = vmatprep.subr.mxu0 0.0
    %89 = vmatpush1.msra.mxu0 %v49
    %90 = vmatprep.subr.mxu0 0.0
    %91 = vmatpush1.msra.mxu0 0.0
    %92 = vmatprep.subr.mxu0 0.0
    %93 = vmatpush1.msra.mxu0 0.0
    %94 = vmatprep.subr.mxu0 0.0
    %95 = vmatpush1.msra.mxu0 0.0
    %96 = vmatprep.subr.mxu0 0.0
    %97 = vmatpush1.msra.mxu0 0.0
    %98 = vmatprep.subr.mxu0 0.0
    %99 = vmatpush1.msra.mxu0 0.0
    %100 = vmatprep.subr.mxu0 0.0
    %101 = vmatpush1.msra.mxu0 0.0
    %102 = vmatprep.subr.mxu0 0.0
    %103 = vmatpush1.msra.mxu0 0.0
    %104 = vmatprep.subr.mxu0 0.0
    %105 = vmatpush1.msra.mxu0 0.0
    %106 = vmatprep.subr.mxu0 0.0
    %107 = vmatpush1.msra.mxu0 0.0
    %108 = vmatprep.subr.mxu0 0.0
    %109 = vmatpush1.msra.mxu0 0.0
    %110 = vmatprep.subr.mxu0 0.0
    %111 = vmatpush1.msra.mxu0 0.0
    %112 = vmatprep.subr.mxu0 0.0
    %113 = vmatpush1.msra.mxu0 0.0
    %114 = vmatprep.subr.mxu0 0.0
    %115 = vmatpush1.msra.mxu0 0.0
    %116 = vmatprep.subr.mxu0 0.0
    %117 = vmatpush1.msra.mxu0 0.0
    %118 = vmatprep.subr.mxu0 0.0
    %119 = vmatpush1.msra.mxu0 0.0
    %120 = vmatprep.subr.mxu0 0.0
    %121 = vmatpush1.msra.mxu0 0.0
    %122 = vmatprep.subr.mxu0 0.0
    %123 = vmatpush1.msra.mxu0 0.0
    %124 = vmatprep.subr.mxu0 0.0
    %125 = vmatpush1.msra.mxu0 0.0
    %126 = vmatprep.subr.mxu0 0.0
    %127 = vmatpush1.msra.mxu0 0.0
    %128 = vmatprep.subr.mxu0 0.0
    %129 = vmatpush1.msra.mxu0 0.0
    %130 = vmatprep.subr.mxu0 0.0
    %131 = vmatpush1.msra.mxu0 0.0
    %132 = vmatprep.subr.mxu0 0.0
    %133 = vmatpush1.msra.mxu0 0.0
    %134 = vmatprep.subr.mxu0 0.0
    %135 = vmatpush1.msra.mxu0 0.0
    %136 = vmatprep.subr.mxu0 0.0
    %137 = vmatpush1.msra.mxu0 0.0
    %138 = vmatprep.subr.mxu0 0.0
    %139 = vmatpush1.msra.mxu0 0.0
    %140 = vmatprep.subr.mxu0 0.0
    %141 = vmatpush1.msra.mxu0 0.0
    %142 = vmatprep.subr.mxu0 0.0
    %143 = vmatpush1.msra.mxu0 0.0
    %144 = vmatprep.subr.mxu0 0.0
    %145 = vmatpush1.msra.mxu0 0.0
    %146 = vmatprep.mubr.f32.mxu0 0.0
    %147 = vmatmul.mubr.f32.gmra.mrb[0].mxu0 %v59
    %v148 = vpop.f32.mrb[0].mxu0
    %v149 = vadd.f32 %v55, %v148
    %v150 = vpop.f32.mrb[0].mxu0
    %151 = vmatprep.mubr.f32.mxu0 0.0
    %152 = vmatmul.mubr.f32.gmra.mrb[0].mxu0 %v62
    %v153 = vpop.f32.mrb[0].mxu0
    %v154 = vadd.f32 %v55, %v153
    %v155 = vpop.f32.mrb[0].mxu0
    %156 = vmatprep.mubr.f32.mxu0 0.0
    %157 = vmatmul.mubr.f32.gmra.mrb[0].mxu0 %v65
    %v158 = vpop.f32.mrb[0].mxu0
    %v159 = vadd.f32 %v55, %v158
    %v160 = vpop.f32.mrb[0].mxu0
    %161 = vmatprep.mubr.f32.mxu0 0.0
    %162 = vmatmul.mubr.f32.gmra.mrb[0].mxu0 %v68
    %v163 = vpop.f32.mrb[0].mxu0
    %v164 = vadd.f32 %v55, %v163
    %v165 = vpop.f32.mrb[0].mxu0
    %166 = vmatprep.mubr.f32.mxu0 0.0
    %167 = vmatmul.mubr.f32.gmra.mrb[0].mxu0 %v71
    %v168 = vpop.f32.mrb[0].mxu0
    %v169 = vadd.f32 %v55, %v168
    %v170 = vpop.f32.mrb[0].mxu0
    %171 = vmatprep.mubr.f32.mxu0 0.0
    %172 = vmatmul.mubr.f32.gmra.mrb[0].mxu0 %v74
    %v173 = vpop.f32.mrb[0].mxu0
    %v174 = vadd.f32 %v55, %v173
    %v175 = vpop.f32.mrb[0].mxu0
    %176 = vmatprep.mubr.f32.mxu0 0.0
    %177 = vmatmul.mubr.f32.gmra.mrb[0].mxu0 %v77
    %v178 = vpop.f32.mrb[0].mxu0
    %v179 = vadd.f32 %v55, %v178
    %v180 = vpop.f32.mrb[0].mxu0
    %181 = vmatprep.mubr.f32.mxu0 0.0
    %182 = vmatmul.mubr.f32.gmra.mrb[0].mxu0 %v80
    %v183 = vpop.f32.mrb[0].mxu0
    %v184 = vadd.f32 %v55, %v183
    %v185 = vpop.f32.mrb[0].mxu0
    %186 = vdwg.mxu0
    %v187 = vld [vmem:[%s4] sm:$0xff]
    %v188 = vld [vmem:[%s4 + $0x8] sm:$0xff]
    %v189 = vld [vmem:[%s4 + $0x10] sm:$0xff]
    %v190 = vld [vmem:[%s4 + $0x18] sm:$0xff]
    %v191 = vld [vmem:[%s4 + $0x20] sm:$0xff]
    %v192 = vld [vmem:[%s4 + $0x28] sm:$0xff]
    %v193 = vld [vmem:[%s4 + $0x30] sm:$0xff]
    %v194 = vld [vmem:[%s4 + $0x38] sm:$0xff]
    %vm195 = vcmask 130048
    %v197 = vsel %vm195, %v149, 0
    %v200 = vsel %vm195, %v187, 0
    %202 = vmatprep.subr.mxu0 0.0
    %203 = vmatpush1.xpose.msra.mxu0 %v200
    %204 = vmatprep.subr.mxu0 0.0
    %205 = vmatpush1.xpose.msra.mxu0 0.0
    %206 = vmatprep.subr.mxu0 0.0
    %207 = vmatpush1.xpose.msra.mxu0 0.0
    %208 = vmatprep.subr.mxu0 0.0
    %209 = vmatpush1.xpose.msra.mxu0 0.0
    %210 = vmatprep.subr.mxu0 0.0
    %211 = vmatpush1.xpose.msra.mxu0 0.0
    %212 = vmatprep.subr.mxu0 0.0
    %213 = vmatpush1.xpose.msra.mxu0 0.0
    %214 = vmatprep.subr.mxu0 0.0
    %215 = vmatpush1.xpose.msra.mxu0 0.0
    %216 = vmatprep.subr.mxu0 0.0
    %217 = vmatpush1.xpose.msra.mxu0 0.0
    %218 = vmatprep.subr.mxu0 0.0
    %219 = vmatpush1.xpose.msra.mxu0 0.0
    %220 = vmatprep.subr.mxu0 0.0
    %221 = vmatpush1.xpose.msra.mxu0 0.0
    %222 = vmatprep.subr.mxu0 0.0
    %223 = vmatpush1.xpose.msra.mxu0 0.0
    %224 = vmatprep.subr.mxu0 0.0
    %225 = vmatpush1.xpose.msra.mxu0 0.0
    %226 = vmatprep.subr.mxu0 0.0
    %227 = vmatpush1.xpose.msra.mxu0 0.0
    %228 = vmatprep.subr.mxu0 0.0
    %229 = vmatpush1.xpose.msra.mxu0 0.0
    %230 = vmatprep.subr.mxu0 0.0
    %231 = vmatpush1.xpose.msra.mxu0 0.0
    %232 = vmatprep.subr.mxu0 0.0
    %233 = vmatpush1.xpose.msra.mxu0 0.0
    %234 = vmatprep.subr.mxu0 0.0
    %235 = vmatpush1.xpose.msra.mxu0 0.0
    %236 = vmatprep.subr.mxu0 0.0
    %237 = vmatpush1.xpose.msra.mxu0 0.0
    %238 = vmatprep.subr.mxu0 0.0
    %239 = vmatpush1.xpose.msra.mxu0 0.0
    %240 = vmatprep.subr.mxu0 0.0
    %241 = vmatpush1.xpose.msra.mxu0 0.0
    %242 = vmatprep.subr.mxu0 0.0
    %243 = vmatpush1.xpose.msra.mxu0 0.0
    %244 = vmatprep.subr.mxu0 0.0
    %245 = vmatpush1.xpose.msra.mxu0 0.0
    %246 = vmatprep.subr.mxu0 0.0
    %247 = vmatpush1.xpose.msra.mxu0 0.0
    %248 = vmatprep.subr.mxu0 0.0
    %249 = vmatpush1.xpose.msra.mxu0 0.0
    %250 = vmatprep.subr.mxu0 0.0
    %251 = vmatpush1.xpose.msra.mxu0 0.0
    %252 = vmatprep.subr.mxu0 0.0
    %253 = vmatpush1.xpose.msra.mxu0 0.0
    %254 = vmatprep.subr.mxu0 0.0
    %255 = vmatpush1.xpose.msra.mxu0 0.0
    %256 = vmatprep.subr.mxu0 0.0
    %257 = vmatpush1.xpose.msra.mxu0 0.0
    %258 = vmatprep.subr.mxu0 0.0
    %259 = vmatpush1.xpose.msra.mxu0 0.0
    %260 = vmatprep.subr.mxu0 0.0
    %261 = vmatpush1.xpose.msra.mxu0 0.0
    %262 = vmatprep.subr.mxu0 0.0
    %263 = vmatpush1.xpose.msra.mxu0 0.0
    %264 = vmatprep.subr.mxu0 0.0
    %265 = vmatpush1.xpose.msra.mxu0 0.0
    %266 = vmatprep.mubr.f32.mxu0 0.0
    %267 = vmatmul.mubr.f32.gmra.mrb[0].mxu0 %v197
    %v268 = vpop.f32.mrb[0].mxu0
    %v269 = vadd.f32 0.0, %v268
    %v270 = vpop.f32.mrb[0].mxu0
    %271 = vdwg.mxu0
    %v273 = vsel %vm195, %v154, 0
    %v276 = vsel %vm195, %v188, 0
    %278 = vmatprep.subr.mxu0 0.0
    %279 = vmatpush1.xpose.msra.mxu0 %v276
    %280 = vmatprep.subr.mxu0 0.0
    %281 = vmatpush1.xpose.msra.mxu0 0.0
    %282 = vmatprep.subr.mxu0 0.0
    %283 = vmatpush1.xpose.msra.mxu0 0.0
    %284 = vmatprep.subr.mxu0 0.0
    %285 = vmatpush1.xpose.msra.mxu0 0.0
    %286 = vmatprep.subr.mxu0 0.0
    %287 = vmatpush1.xpose.msra.mxu0 0.0
    %288 = vmatprep.subr.mxu0 0.0
    %289 = vmatpush1.xpose.msra.mxu0 0.0
    %290 = vmatprep.subr.mxu0 0.0
    %291 = vmatpush1.xpose.msra.mxu0 0.0
    %292 = vmatprep.subr.mxu0 0.0
    %293 = vmatpush1.xpose.msra.mxu0 0.0
    %294 = vmatprep.subr.mxu0 0.0
    %295 = vmatpush1.xpose.msra.mxu0 0.0
    %296 = vmatprep.subr.mxu0 0.0
    %297 = vmatpush1.xpose.msra.mxu0 0.0
    %298 = vmatprep.subr.mxu0 0.0
    %299 = vmatpush1.xpose.msra.mxu0 0.0
    %300 = vmatprep.subr.mxu0 0.0
    %301 = vmatpush1.xpose.msra.mxu0 0.0
    %302 = vmatprep.subr.mxu0 0.0
    %303 = vmatpush1.xpose.msra.mxu0 0.0
    %304 = vmatprep.subr.mxu0 0.0
    %305 = vmatpush1.xpose.msra.mxu0 0.0
    %306 = vmatprep.subr.mxu0 0.0
    %307 = vmatpush1.xpose.msra.mxu0 0.0
    %308 = vmatprep.subr.mxu0 0.0
    %309 = vmatpush1.xpose.msra.mxu0 0.0
    %310 = vmatprep.subr.mxu0 0.0
    %311 = vmatpush1.xpose.msra.mxu0 0.0
    %312 = vmatprep.subr.mxu0 0.0
    %313 = vmatpush1.xpose.msra.mxu0 0.0
    %314 = vmatprep.subr.mxu0 0.0
    %315 = vmatpush1.xpose.msra.mxu0 0.0
    %316 = vmatprep.subr.mxu0 0.0
    %317 = vmatpush1.xpose.msra.mxu0 0.0
    %318 = vmatprep.subr.mxu0 0.0
    %319 = vmatpush1.xpose.msra.mxu0 0.0
    %320 = vmatprep.subr.mxu0 0.0
    %321 = vmatpush1.xpose.msra.mxu0 0.0
    %322 = vmatprep.subr.mxu0 0.0
    %323 = vmatpush1.xpose.msra.mxu0 0.0
    %324 = vmatprep.subr.mxu0 0.0
    %325 = vmatpush1.xpose.msra.mxu0 0.0
    %326 = vmatprep.subr.mxu0 0.0
    %327 = vmatpush1.xpose.msra.mxu0 0.0
    %328 = vmatprep.subr.mxu0 0.0
    %329 = vmatpush1.xpose.msra.mxu0 0.0
    %330 = vmatprep.subr.mxu0 0.0
    %331 = vmatpush1.xpose.msra.mxu0 0.0
    %332 = vmatprep.subr.mxu0 0.0
    %333 = vmatpush1.xpose.msra.mxu0 0.0
    %334 = vmatprep.subr.mxu0 0.0
    %335 = vmatpush1.xpose.msra.mxu0 0.0
    %336 = vmatprep.subr.mxu0 0.0
    %337 = vmatpush1.xpose.msra.mxu0 0.0
    %338 = vmatprep.subr.mxu0 0.0
    %339 = vmatpush1.xpose.msra.mxu0 0.0
    %340 = vmatprep.subr.mxu0 0.0
    %341 = vmatpush1.xpose.msra.mxu0 0.0
    %342 = vmatprep.mubr.f32.mxu0 0.0
    %343 = vmatmul.mubr.f32.gmra.mrb[0].mxu0 %v273
    %v344 = vpop.f32.mrb[0].mxu0
    %v345 = vadd.f32 0.0, %v344
    %v346 = vpop.f32.mrb[0].mxu0
    %347 = vdwg.mxu0
    %v349 = vsel %vm195, %v159, 0
    %v352 = vsel %vm195, %v189, 0
    %354 = vmatprep.subr.mxu0 0.0
    %355 = vmatpush1.xpose.msra.mxu0 %v352
    %356 = vmatprep.subr.mxu0 0.0
    %357 = vmatpush1.xpose.msra.mxu0 0.0
    %358 = vmatprep.subr.mxu0 0.0
    %359 = vmatpush1.xpose.msra.mxu0 0.0
    %360 = vmatprep.subr.mxu0 0.0
    %361 = vmatpush1.xpose.msra.mxu0 0.0
    %362 = vmatprep.subr.mxu0 0.0
    %363 = vmatpush1.xpose.msra.mxu0 0.0
    %364 = vmatprep.subr.mxu0 0.0
    %365 = vmatpush1.xpose.msra.mxu0 0.0
    %366 = vmatprep.subr.mxu0 0.0
    %367 = vmatpush1.xpose.msra.mxu0 0.0
    %368 = vmatprep.subr.mxu0 0.0
    %369 = vmatpush1.xpose.msra.mxu0 0.0
    %370 = vmatprep.subr.mxu0 0.0
    %371 = vmatpush1.xpose.msra.mxu0 0.0
    %372 = vmatprep.subr.mxu0 0.0
    %373 = vmatpush1.xpose.msra.mxu0 0.0
    %374 = vmatprep.subr.mxu0 0.0
    %375 = vmatpush1.xpose.msra.mxu0 0.0
    %376 = vmatprep.subr.mxu0 0.0
    %377 = vmatpush1.xpose.msra.mxu0 0.0
    %378 = vmatprep.subr.mxu0 0.0
    %379 = vmatpush1.xpose.msra.mxu0 0.0
    %380 = vmatprep.subr.mxu0 0.0
    %381 = vmatpush1.xpose.msra.mxu0 0.0
    %382 = vmatprep.subr.mxu0 0.0
    %383 = vmatpush1.xpose.msra.mxu0 0.0
    %384 = vmatprep.subr.mxu0 0.0
    %385 = vmatpush1.xpose.msra.mxu0 0.0
    %386 = vmatprep.subr.mxu0 0.0
    %387 = vmatpush1.xpose.msra.mxu0 0.0
    %388 = vmatprep.subr.mxu0 0.0
    %389 = vmatpush1.xpose.msra.mxu0 0.0
    %390 = vmatprep.subr.mxu0 0.0
    %391 = vmatpush1.xpose.msra.mxu0 0.0
    %392 = vmatprep.subr.mxu0 0.0
    %393 = vmatpush1.xpose.msra.mxu0 0.0
    %394 = vmatprep.subr.mxu0 0.0
    %395 = vmatpush1.xpose.msra.mxu0 0.0
    %396 = vmatprep.subr.mxu0 0.0
    %397 = vmatpush1.xpose.msra.mxu0 0.0
    %398 = vmatprep.subr.mxu0 0.0
    %399 = vmatpush1.xpose.msra.mxu0 0.0
    %400 = vmatprep.subr.mxu0 0.0
    %401 = vmatpush1.xpose.msra.mxu0 0.0
    %402 = vmatprep.subr.mxu0 0.0
    %403 = vmatpush1.xpose.msra.mxu0 0.0
    %404 = vmatprep.subr.mxu0 0.0
    %405 = vmatpush1.xpose.msra.mxu0 0.0
    %406 = vmatprep.subr.mxu0 0.0
    %407 = vmatpush1.xpose.msra.mxu0 0.0
    %408 = vmatprep.subr.mxu0 0.0
    %409 = vmatpush1.xpose.msra.mxu0 0.0
    %410 = vmatprep.subr.mxu0 0.0
    %411 = vmatpush1.xpose.msra.mxu0 0.0
    %412 = vmatprep.subr.mxu0 0.0
    %413 = vmatpush1.xpose.msra.mxu0 0.0
    %414 = vmatprep.subr.mxu0 0.0
    %415 = vmatpush1.xpose.msra.mxu0 0.0
    %416 = vmatprep.subr.mxu0 0.0
    %417 = vmatpush1.xpose.msra.mxu0 0.0
    %418 = vmatprep.mubr.f32.mxu0 0.0
    %419 = vmatmul.mubr.f32.gmra.mrb[0].mxu0 %v349
    %v420 = vpop.f32.mrb[0].mxu0
    %v421 = vadd.f32 0.0, %v420
    %v422 = vpop.f32.mrb[0].mxu0
    %423 = vdwg.mxu0
    %v425 = vsel %vm195, %v164, 0
    %v428 = vsel %vm195, %v190, 0
    %430 = vmatprep.subr.mxu0 0.0
    %431 = vmatpush1.xpose.msra.mxu0 %v428
    %432 = vmatprep.subr.mxu0 0.0
    %433 = vmatpush1.xpose.msra.mxu0 0.0
    %434 = vmatprep.subr.mxu0 0.0
    %435 = vmatpush1.xpose.msra.mxu0 0.0
    %436 = vmatprep.subr.mxu0 0.0
    %437 = vmatpush1.xpose.msra.mxu0 0.0
    %438 = vmatprep.subr.mxu0 0.0
    %439 = vmatpush1.xpose.msra.mxu0 0.0
    %440 = vmatprep.subr.mxu0 0.0
    %441 = vmatpush1.xpose.msra.mxu0 0.0
    %442 = vmatprep.subr.mxu0 0.0
    %443 = vmatpush1.xpose.msra.mxu0 0.0
    %444 = vmatprep.subr.mxu0 0.0
    %445 = vmatpush1.xpose.msra.mxu0 0.0
    %446 = vmatprep.subr.mxu0 0.0
    %447 = vmatpush1.xpose.msra.mxu0 0.0
    %448 = vmatprep.subr.mxu0 0.0
    %449 = vmatpush1.xpose.msra.mxu0 0.0
    %450 = vmatprep.subr.mxu0 0.0
    %451 = vmatpush1.xpose.msra.mxu0 0.0
    %452 = vmatprep.subr.mxu0 0.0
    %453 = vmatpush1.xpose.msra.mxu0 0.0
    %454 = vmatprep.subr.mxu0 0.0
    %455 = vmatpush1.xpose.msra.mxu0 0.0
    %456 = vmatprep.subr.mxu0 0.0
    %457 = vmatpush1.xpose.msra.mxu0 0.0
    %458 = vmatprep.subr.mxu0 0.0
    %459 = vmatpush1.xpose.msra.mxu0 0.0
    %460 = vmatprep.subr.mxu0 0.0
    %461 = vmatpush1.xpose.msra.mxu0 0.0
    %462 = vmatprep.subr.mxu0 0.0
    %463 = vmatpush1.xpose.msra.mxu0 0.0
    %464 = vmatprep.subr.mxu0 0.0
    %465 = vmatpush1.xpose.msra.mxu0 0.0
    %466 = vmatprep.subr.mxu0 0.0
    %467 = vmatpush1.xpose.msra.mxu0 0.0
    %468 = vmatprep.subr.mxu0 0.0
    %469 = vmatpush1.xpose.msra.mxu0 0.0
    %470 = vmatprep.subr.mxu0 0.0
    %471 = vmatpush1.xpose.msra.mxu0 0.0
    %472 = vmatprep.subr.mxu0 0.0
    %473 = vmatpush1.xpose.msra.mxu0 0.0
    %474 = vmatprep.subr.mxu0 0.0
    %475 = vmatpush1.xpose.msra.mxu0 0.0
    %476 = vmatprep.subr.mxu0 0.0
    %477 = vmatpush1.xpose.msra.mxu0 0.0
    %478 = vmatprep.subr.mxu0 0.0
    %479 = vmatpush1.xpose.msra.mxu0 0.0
    %480 = vmatprep.subr.mxu0 0.0
    %481 = vmatpush1.xpose.msra.mxu0 0.0
    %482 = vmatprep.subr.mxu0 0.0
    %483 = vmatpush1.xpose.msra.mxu0 0.0
    %484 = vmatprep.subr.mxu0 0.0
    %485 = vmatpush1.xpose.msra.mxu0 0.0
    %486 = vmatprep.subr.mxu0 0.0
    %487 = vmatpush1.xpose.msra.mxu0 0.0
    %488 = vmatprep.subr.mxu0 0.0
    %489 = vmatpush1.xpose.msra.mxu0 0.0
    %490 = vmatprep.subr.mxu0 0.0
    %491 = vmatpush1.xpose.msra.mxu0 0.0
    %492 = vmatprep.subr.mxu0 0.0
    %493 = vmatpush1.xpose.msra.mxu0 0.0
    %494 = vmatprep.mubr.f32.mxu0 0.0
    %495 = vmatmul.mubr.f32.gmra.mrb[0].mxu0 %v425
    %v496 = vpop.f32.mrb[0].mxu0
    %v497 = vadd.f32 0.0, %v496
    %v498 = vpop.f32.mrb[0].mxu0
    %499 = vdwg.mxu0
    %v501 = vsel %vm195, %v169, 0
    %v504 = vsel %vm195, %v191, 0
    %506 = vmatprep.subr.mxu0 0.0
    %507 = vmatpush1.xpose.msra.mxu0 %v504
    %508 = vmatprep.subr.mxu0 0.0
    %509 = vmatpush1.xpose.msra.mxu0 0.0
    %510 = vmatprep.subr.mxu0 0.0
    %511 = vmatpush1.xpose.msra.mxu0 0.0
    %512 = vmatprep.subr.mxu0 0.0
    %513 = vmatpush1.xpose.msra.mxu0 0.0
    %514 = vmatprep.subr.mxu0 0.0
    %515 = vmatpush1.xpose.msra.mxu0 0.0
    %516 = vmatprep.subr.mxu0 0.0
    %517 = vmatpush1.xpose.msra.mxu0 0.0
    %518 = vmatprep.subr.mxu0 0.0
    %519 = vmatpush1.xpose.msra.mxu0 0.0
    %520 = vmatprep.subr.mxu0 0.0
    %521 = vmatpush1.xpose.msra.mxu0 0.0
    %522 = vmatprep.subr.mxu0 0.0
    %523 = vmatpush1.xpose.msra.mxu0 0.0
    %524 = vmatprep.subr.mxu0 0.0
    %525 = vmatpush1.xpose.msra.mxu0 0.0
    %526 = vmatprep.subr.mxu0 0.0
    %527 = vmatpush1.xpose.msra.mxu0 0.0
    %528 = vmatprep.subr.mxu0 0.0
    %529 = vmatpush1.xpose.msra.mxu0 0.0
    %530 = vmatprep.subr.mxu0 0.0
    %531 = vmatpush1.xpose.msra.mxu0 0.0
    %532 = vmatprep.subr.mxu0 0.0
    %533 = vmatpush1.xpose.msra.mxu0 0.0
    %534 = vmatprep.subr.mxu0 0.0
    %535 = vmatpush1.xpose.msra.mxu0 0.0
    %536 = vmatprep.subr.mxu0 0.0
    %537 = vmatpush1.xpose.msra.mxu0 0.0
    %538 = vmatprep.subr.mxu0 0.0
    %539 = vmatpush1.xpose.msra.mxu0 0.0
    %540 = vmatprep.subr.mxu0 0.0
    %541 = vmatpush1.xpose.msra.mxu0 0.0
    %542 = vmatprep.subr.mxu0 0.0
    %543 = vmatpush1.xpose.msra.mxu0 0.0
    %544 = vmatprep.subr.mxu0 0.0
    %545 = vmatpush1.xpose.msra.mxu0 0.0
    %546 = vmatprep.subr.mxu0 0.0
    %547 = vmatpush1.xpose.msra.mxu0 0.0
    %548 = vmatprep.subr.mxu0 0.0
    %549 = vmatpush1.xpose.msra.mxu0 0.0
    %550 = vmatprep.subr.mxu0 0.0
    %551 = vmatpush1.xpose.msra.mxu0 0.0
    %552 = vmatprep.subr.mxu0 0.0
    %553 = vmatpush1.xpose.msra.mxu0 0.0
    %554 = vmatprep.subr.mxu0 0.0
    %555 = vmatpush1.xpose.msra.mxu0 0.0
    %556 = vmatprep.subr.mxu0 0.0
    %557 = vmatpush1.xpose.msra.mxu0 0.0
    %558 = vmatprep.subr.mxu0 0.0
    %559 = vmatpush1.xpose.msra.mxu0 0.0
    %560 = vmatprep.subr.mxu0 0.0
    %561 = vmatpush1.xpose.msra.mxu0 0.0
    %562 = vmatprep.subr.mxu0 0.0
    %563 = vmatpush1.xpose.msra.mxu0 0.0
    %564 = vmatprep.subr.mxu0 0.0
    %565 = vmatpush1.xpose.msra.mxu0 0.0
    %566 = vmatprep.subr.mxu0 0.0
    %567 = vmatpush1.xpose.msra.mxu0 0.0
    %568 = vmatprep.subr.mxu0 0.0
    %569 = vmatpush1.xpose.msra.mxu0 0.0
    %570 = vmatprep.mubr.f32.mxu0 0.0
    %571 = vmatmul.mubr.f32.gmra.mrb[0].mxu0 %v501
    %v572 = vpop.f32.mrb[0].mxu0
    %v573 = vadd.f32 0.0, %v572
    %v574 = vpop.f32.mrb[0].mxu0
    %575 = vdwg.mxu0
    %v577 = vsel %vm195, %v174, 0
    %v580 = vsel %vm195, %v192, 0
    %582 = vmatprep.subr.mxu0 0.0
    %583 = vmatpush1.xpose.msra.mxu0 %v580
    %584 = vmatprep.subr.mxu0 0.0
    %585 = vmatpush1.xpose.msra.mxu0 0.0
    %586 = vmatprep.subr.mxu0 0.0
    %587 = vmatpush1.xpose.msra.mxu0 0.0
    %588 = vmatprep.subr.mxu0 0.0
    %589 = vmatpush1.xpose.msra.mxu0 0.0
    %590 = vmatprep.subr.mxu0 0.0
    %591 = vmatpush1.xpose.msra.mxu0 0.0
    %592 = vmatprep.subr.mxu0 0.0
    %593 = vmatpush1.xpose.msra.mxu0 0.0
    %594 = vmatprep.subr.mxu0 0.0
    %595 = vmatpush1.xpose.msra.mxu0 0.0
    %596 = vmatprep.subr.mxu0 0.0
    %597 = vmatpush1.xpose.msra.mxu0 0.0
    %598 = vmatprep.subr.mxu0 0.0
    %599 = vmatpush1.xpose.msra.mxu0 0.0
    %600 = vmatprep.subr.mxu0 0.0
    %601 = vmatpush1.xpose.msra.mxu0 0.0
    %602 = vmatprep.subr.mxu0 0.0
    %603 = vmatpush1.xpose.msra.mxu0 0.0
    %604 = vmatprep.subr.mxu0 0.0
    %605 = vmatpush1.xpose.msra.mxu0 0.0
    %606 = vmatprep.subr.mxu0 0.0
    %607 = vmatpush1.xpose.msra.mxu0 0.0
    %608 = vmatprep.subr.mxu0 0.0
    %609 = vmatpush1.xpose.msra.mxu0 0.0
    %610 = vmatprep.subr.mxu0 0.0
    %611 = vmatpush1.xpose.msra.mxu0 0.0
    %612 = vmatprep.subr.mxu0 0.0
    %613 = vmatpush1.xpose.msra.mxu0 0.0
    %614 = vmatprep.subr.mxu0 0.0
    %615 = vmatpush1.xpose.msra.mxu0 0.0
    %616 = vmatprep.subr.mxu0 0.0
    %617 = vmatpush1.xpose.msra.mxu0 0.0
    %618 = vmatprep.subr.mxu0 0.0
    %619 = vmatpush1.xpose.msra.mxu0 0.0
    %620 = vmatprep.subr.mxu0 0.0
    %621 = vmatpush1.xpose.msra.mxu0 0.0
    %622 = vmatprep.subr.mxu0 0.0
    %623 = vmatpush1.xpose.msra.mxu0 0.0
    %624 = vmatprep.subr.mxu0 0.0
    %625 = vmatpush1.xpose.msra.mxu0 0.0
    %626 = vmatprep.subr.mxu0 0.0
    %627 = vmatpush1.xpose.msra.mxu0 0.0
    %628 = vmatprep.subr.mxu0 0.0
    %629 = vmatpush1.xpose.msra.mxu0 0.0
    %630 = vmatprep.subr.mxu0 0.0
    %631 = vmatpush1.xpose.msra.mxu0 0.0
    %632 = vmatprep.subr.mxu0 0.0
    %633 = vmatpush1.xpose.msra.mxu0 0.0
    %634 = vmatprep.subr.mxu0 0.0
    %635 = vmatpush1.xpose.msra.mxu0 0.0
    %636 = vmatprep.subr.mxu0 0.0
    %637 = vmatpush1.xpose.msra.mxu0 0.0
    %638 = vmatprep.subr.mxu0 0.0
    %639 = vmatpush1.xpose.msra.mxu0 0.0
    %640 = vmatprep.subr.mxu0 0.0
    %641 = vmatpush1.xpose.msra.mxu0 0.0
    %642 = vmatprep.subr.mxu0 0.0
    %643 = vmatpush1.xpose.msra.mxu0 0.0
    %644 = vmatprep.subr.mxu0 0.0
    %645 = vmatpush1.xpose.msra.mxu0 0.0
    %646 = vmatprep.mubr.f32.mxu0 0.0
    %647 = vmatmul.mubr.f32.gmra.mrb[0].mxu0 %v577
    %v648 = vpop.f32.mrb[0].mxu0
    %v649 = vadd.f32 0.0, %v648
    %v650 = vpop.f32.mrb[0].mxu0
    %651 = vdwg.mxu0
    %v653 = vsel %vm195, %v179, 0
    %v656 = vsel %vm195, %v193, 0
    %658 = vmatprep.subr.mxu0 0.0
    %659 = vmatpush1.xpose.msra.mxu0 %v656
    %660 = vmatprep.subr.mxu0 0.0
    %661 = vmatpush1.xpose.msra.mxu0 0.0
    %662 = vmatprep.subr.mxu0 0.0
    %663 = vmatpush1.xpose.msra.mxu0 0.0
    %664 = vmatprep.subr.mxu0 0.0
    %665 = vmatpush1.xpose.msra.mxu0 0.0
    %666 = vmatprep.subr.mxu0 0.0
    %667 = vmatpush1.xpose.msra.mxu0 0.0
    %668 = vmatprep.subr.mxu0 0.0
    %669 = vmatpush1.xpose.msra.mxu0 0.0
    %670 = vmatprep.subr.mxu0 0.0
    %671 = vmatpush1.xpose.msra.mxu0 0.0
    %672 = vmatprep.subr.mxu0 0.0
    %673 = vmatpush1.xpose.msra.mxu0 0.0
    %674 = vmatprep.subr.mxu0 0.0
    %675 = vmatpush1.xpose.msra.mxu0 0.0
    %676 = vmatprep.subr.mxu0 0.0
    %677 = vmatpush1.xpose.msra.mxu0 0.0
    %678 = vmatprep.subr.mxu0 0.0
    %679 = vmatpush1.xpose.msra.mxu0 0.0
    %680 = vmatprep.subr.mxu0 0.0
    %681 = vmatpush1.xpose.msra.mxu0 0.0
    %682 = vmatprep.subr.mxu0 0.0
    %683 = vmatpush1.xpose.msra.mxu0 0.0
    %684 = vmatprep.subr.mxu0 0.0
    %685 = vmatpush1.xpose.msra.mxu0 0.0
    %686 = vmatprep.subr.mxu0 0.0
    %687 = vmatpush1.xpose.msra.mxu0 0.0
    %688 = vmatprep.subr.mxu0 0.0
    %689 = vmatpush1.xpose.msra.mxu0 0.0
    %690 = vmatprep.subr.mxu0 0.0
    %691 = vmatpush1.xpose.msra.mxu0 0.0
    %692 = vmatprep.subr.mxu0 0.0
    %693 = vmatpush1.xpose.msra.mxu0 0.0
    %694 = vmatprep.subr.mxu0 0.0
    %695 = vmatpush1.xpose.msra.mxu0 0.0
    %696 = vmatprep.subr.mxu0 0.0
    %697 = vmatpush1.xpose.msra.mxu0 0.0
    %698 = vmatprep.subr.mxu0 0.0
    %699 = vmatpush1.xpose.msra.mxu0 0.0
    %700 = vmatprep.subr.mxu0 0.0
    %701 = vmatpush1.xpose.msra.mxu0 0.0
    %702 = vmatprep.subr.mxu0 0.0
    %703 = vmatpush1.xpose.msra.mxu0 0.0
    %704 = vmatprep.subr.mxu0 0.0
    %705 = vmatpush1.xpose.msra.mxu0 0.0
    %706 = vmatprep.subr.mxu0 0.0
    %707 = vmatpush1.xpose.msra.mxu0 0.0
    %708 = vmatprep.subr.mxu0 0.0
    %709 = vmatpush1.xpose.msra.mxu0 0.0
    %710 = vmatprep.subr.mxu0 0.0
    %711 = vmatpush1.xpose.msra.mxu0 0.0
    %712 = vmatprep.subr.mxu0 0.0
    %713 = vmatpush1.xpose.msra.mxu0 0.0
    %714 = vmatprep.subr.mxu0 0.0
    %715 = vmatpush1.xpose.msra.mxu0 0.0
    %716 = vmatprep.subr.mxu0 0.0
    %717 = vmatpush1.xpose.msra.mxu0 0.0
    %718 = vmatprep.subr.mxu0 0.0
    %719 = vmatpush1.xpose.msra.mxu0 0.0
    %720 = vmatprep.subr.mxu0 0.0
    %721 = vmatpush1.xpose.msra.mxu0 0.0
    %722 = vmatprep.mubr.f32.mxu0 0.0
    %723 = vmatmul.mubr.f32.gmra.mrb[0].mxu0 %v653
    %v724 = vpop.f32.mrb[0].mxu0
    %v725 = vadd.f32 0.0, %v724
    %v726 = vpop.f32.mrb[0].mxu0
    %727 = vdwg.mxu0
    %v729 = vsel %vm195, %v184, 0
    %v732 = vsel %vm195, %v194, 0
    %734 = vmatprep.subr.mxu0 0.0
    %735 = vmatpush1.xpose.msra.mxu0 %v732
    %736 = vmatprep.subr.mxu0 0.0
    %737 = vmatpush1.xpose.msra.mxu0 0.0
    %738 = vmatprep.subr.mxu0 0.0
    %739 = vmatpush1.xpose.msra.mxu0 0.0
    %740 = vmatprep.subr.mxu0 0.0
    %741 = vmatpush1.xpose.msra.mxu0 0.0
    %742 = vmatprep.subr.mxu0 0.0
    %743 = vmatpush1.xpose.msra.mxu0 0.0
    %744 = vmatprep.subr.mxu0 0.0
    %745 = vmatpush1.xpose.msra.mxu0 0.0
    %746 = vmatprep.subr.mxu0 0.0
    %747 = vmatpush1.xpose.msra.mxu0 0.0
    %748 = vmatprep.subr.mxu0 0.0
    %749 = vmatpush1.xpose.msra.mxu0 0.0
    %750 = vmatprep.subr.mxu0 0.0
    %751 = vmatpush1.xpose.msra.mxu0 0.0
    %752 = vmatprep.subr.mxu0 0.0
    %753 = vmatpush1.xpose.msra.mxu0 0.0
    %754 = vmatprep.subr.mxu0 0.0
    %755 = vmatpush1.xpose.msra.mxu0 0.0
    %756 = vmatprep.subr.mxu0 0.0
    %757 = vmatpush1.xpose.msra.mxu0 0.0
    %758 = vmatprep.subr.mxu0 0.0
    %759 = vmatpush1.xpose.msra.mxu0 0.0
    %760 = vmatprep.subr.mxu0 0.0
    %761 = vmatpush1.xpose.msra.mxu0 0.0
    %762 = vmatprep.subr.mxu0 0.0
    %763 = vmatpush1.xpose.msra.mxu0 0.0
    %764 = vmatprep.subr.mxu0 0.0
    %765 = vmatpush1.xpose.msra.mxu0 0.0
    %766 = vmatprep.subr.mxu0 0.0
    %767 = vmatpush1.xpose.msra.mxu0 0.0
    %768 = vmatprep.subr.mxu0 0.0
    %769 = vmatpush1.xpose.msra.mxu0 0.0
    %770 = vmatprep.subr.mxu0 0.0
    %771 = vmatpush1.xpose.msra.mxu0 0.0
    %772 = vmatprep.subr.mxu0 0.0
    %773 = vmatpush1.xpose.msra.mxu0 0.0
    %774 = vmatprep.subr.mxu0 0.0
    %775 = vmatpush1.xpose.msra.mxu0 0.0
    %776 = vmatprep.subr.mxu0 0.0
    %777 = vmatpush1.xpose.msra.mxu0 0.0
    %778 = vmatprep.subr.mxu0 0.0
    %779 = vmatpush1.xpose.msra.mxu0 0.0
    %780 = vmatprep.subr.mxu0 0.0
    %781 = vmatpush1.xpose.msra.mxu0 0.0
    %782 = vmatprep.subr.mxu0 0.0
    %783 = vmatpush1.xpose.msra.mxu0 0.0
    %784 = vmatprep.subr.mxu0 0.0
    %785 = vmatpush1.xpose.msra.mxu0 0.0
    %786 = vmatprep.subr.mxu0 0.0
    %787 = vmatpush1.xpose.msra.mxu0 0.0
    %788 = vmatprep.subr.mxu0 0.0
    %789 = vmatpush1.xpose.msra.mxu0 0.0
    %790 = vmatprep.subr.mxu0 0.0
    %791 = vmatpush1.xpose.msra.mxu0 0.0
    %792 = vmatprep.subr.mxu0 0.0
    %793 = vmatpush1.xpose.msra.mxu0 0.0
    %794 = vmatprep.subr.mxu0 0.0
    %795 = vmatpush1.xpose.msra.mxu0 0.0
    %796 = vmatprep.subr.mxu0 0.0
    %797 = vmatpush1.xpose.msra.mxu0 0.0
    %798 = vmatprep.mubr.f32.mxu0 0.0
    %799 = vmatmul.mubr.f32.gmra.mrb[0].mxu0 %v729
    %v800 = vpop.f32.mrb[0].mxu0
    %v801 = vadd.f32 0.0, %v800
    %v802 = vpop.f32.mrb[0].mxu0
    %803 = vdwg.mxu0
    %v804 = vld [vmem:[%s0] sm:$0x1]
    %v805 = vld [vmem:[%s0 + $0x1] sm:$0x1]
    %v806 = vld [vmem:[%s0 + $0x2] sm:$0x1]
    %v807 = vld [vmem:[%s0 + $0x3] sm:$0x1]
    %v808 = vld [vmem:[%s0 + $0x4] sm:$0x1]
    %v809 = vld [vmem:[%s0 + $0x5] sm:$0x1]
    %v810 = vld [vmem:[%s0 + $0x6] sm:$0x1]
    %v811 = vld [vmem:[%s0 + $0x7] sm:$0x1]
    %v812 = vlaneseq
    %v813 = vand.u32 %v812, 127
    %814 = vset.pattern.permute.xlu0 0
    %815 = vperm.xlu0 %814, %v804
    %v816 = vpop.permute.xlu0 %815
    %v817 = vlaneseq
    %v818 = vshrl.u32 %v817, 7
    %v819 = vsub.s32 0, %v818
    %v820 = vrot.slane %v816, %v819
    %821 = vset.pattern.permute.xlu0 0
    %822 = vperm.xlu0 %821, %v805
    %v823 = vpop.permute.xlu0 %822
    %v824 = vlaneseq
    %v825 = vshrl.u32 %v824, 7
    %v826 = vsub.s32 0, %v825
    %v827 = vrot.slane %v823, %v826
    %828 = vset.pattern.permute.xlu0 0
    %829 = vperm.xlu0 %828, %v806
    %v830 = vpop.permute.xlu0 %829
    %v831 = vlaneseq
    %v832 = vshrl.u32 %v831, 7
    %v833 = vsub.s32 0, %v832
    %v834 = vrot.slane %v830, %v833
    %835 = vset.pattern.permute.xlu0 0
    %836 = vperm.xlu0 %835, %v807
    %v837 = vpop.permute.xlu0 %836
    %v838 = vlaneseq
    %v839 = vshrl.u32 %v838, 7
    %v840 = vsub.s32 0, %v839
    %v841 = vrot.slane %v837, %v840
    %842 = vset.pattern.permute.xlu0 0
    %843 = vperm.xlu0 %842, %v808
    %v844 = vpop.permute.xlu0 %843
    %v845 = vlaneseq
    %v846 = vshrl.u32 %v845, 7
    %v847 = vsub.s32 0, %v846
    %v848 = vrot.slane %v844, %v847
    %849 = vset.pattern.permute.xlu0 0
    %850 = vperm.xlu0 %849, %v809
    %v851 = vpop.permute.xlu0 %850
    %v852 = vlaneseq
    %v853 = vshrl.u32 %v852, 7
    %v854 = vsub.s32 0, %v853
    %v855 = vrot.slane %v851, %v854
    %856 = vset.pattern.permute.xlu0 0
    %857 = vperm.xlu0 %856, %v810
    %v858 = vpop.permute.xlu0 %857
    %v859 = vlaneseq
    %v860 = vshrl.u32 %v859, 7
    %v861 = vsub.s32 0, %v860
    %v862 = vrot.slane %v858, %v861
    %863 = vset.pattern.permute.xlu0 0
    %864 = vperm.xlu0 %863, %v811
    %v865 = vpop.permute.xlu0 %864
    %v866 = vlaneseq
    %v867 = vshrl.u32 %v866, 7
    %v868 = vsub.s32 0, %v867
    %v869 = vrot.slane %v865, %v868
    %vm870 = vcmp.lt.s32.totalorder %v813, %v820
    %vm871 = vcmp.lt.s32.totalorder %v813, %v827
    %vm872 = vcmp.lt.s32.totalorder %v813, %v834
    %vm873 = vcmp.lt.s32.totalorder %v813, %v841
    %vm874 = vcmp.lt.s32.totalorder %v813, %v848
    %vm875 = vcmp.lt.s32.totalorder %v813, %v855
    %vm876 = vcmp.lt.s32.totalorder %v813, %v862
    %vm877 = vcmp.lt.s32.totalorder %v813, %v869
    %v878 = vsel %vm870, 1, 0
    %v879 = vsel %vm871, 1, 0
    %v880 = vsel %vm872, 1, 0
    %v881 = vsel %vm873, 1, 0
    %v882 = vsel %vm874, 1, 0
    %v883 = vsel %vm875, 1, 0
    %v884 = vsel %vm876, 1, 0
    %v885 = vsel %vm877, 1, 0
    %vm886 = vcmp.eq.s32.totalorder %v878, 1
    %vm887 = vcmp.eq.s32.totalorder %v879, 1
    %vm888 = vcmp.eq.s32.totalorder %v880, 1
    %vm889 = vcmp.eq.s32.totalorder %v881, 1
    %vm890 = vcmp.eq.s32.totalorder %v882, 1
    %vm891 = vcmp.eq.s32.totalorder %v883, 1
    %vm892 = vcmp.eq.s32.totalorder %v884, 1
    %vm893 = vcmp.eq.s32.totalorder %v885, 1
    %v894 = vsel %vm886, %v269, -3e+38
    %v895 = vsel %vm887, %v345, -3e+38
    %v896 = vsel %vm888, %v421, -3e+38
    %v897 = vsel %vm889, %v497, -3e+38
    %v898 = vsel %vm890, %v573, -3e+38
    %v899 = vsel %vm891, %v649, -3e+38
    %v900 = vsel %vm892, %v725, -3e+38
    %v901 = vsel %vm893, %v801, -3e+38
    %vm902 = vcmask 64512
    %v903 = vsel %vm902, %v894, -inf
    %904 = vmax.xlane.f32.xlu0 %v903
    %v905 = vpop.xlane.xlu0 %904
    %v906 = vsel %vm902, %v895, -inf
    %907 = vmax.xlane.f32.xlu0 %v906
    %v908 = vpop.xlane.xlu0 %907
    %v909 = vsel %vm902, %v896, -inf
    %910 = vmax.xlane.f32.xlu0 %v909
    %v911 = vpop.xlane.xlu0 %910
    %v912 = vsel %vm902, %v897, -inf
    %913 = vmax.xlane.f32.xlu0 %v912
    %v914 = vpop.xlane.xlu0 %913
    %v915 = vsel %vm902, %v898, -inf
    %916 = vmax.xlane.f32.xlu0 %v915
    %v917 = vpop.xlane.xlu0 %916
    %v918 = vsel %vm902, %v899, -inf
    %919 = vmax.xlane.f32.xlu0 %v918
    %v920 = vpop.xlane.xlu0 %919
    %v921 = vsel %vm902, %v900, -inf
    %922 = vmax.xlane.f32.xlu0 %v921
    %v923 = vpop.xlane.xlu0 %922
    %v924 = vsel %vm902, %v901, -inf
    %925 = vmax.xlane.f32.xlu0 %v924
    %v926 = vpop.xlane.xlu0 %925
    %v927 = vsub.f32 %v269, %v905
    %v928 = vsub.f32 %v345, %v908
    %v929 = vsub.f32 %v421, %v911
    %v930 = vsub.f32 %v497, %v914
    %v931 = vsub.f32 %v573, %v917
    %v932 = vsub.f32 %v649, %v920
    %v933 = vsub.f32 %v725, %v923
    %v934 = vsub.f32 %v801, %v926
    %v935 = vmul.f32 %v927, 1.442695
    %v936 = vpow.pop %v935
    %v937 = vmul.f32 %v928, 1.442695
    %v938 = vpow.pop %v937
    %v939 = vmul.f32 %v929, 1.442695
    %v940 = vpow.pop %v939
    %v941 = vmul.f32 %v930, 1.442695
    %v942 = vpow.pop %v941
    %v943 = vmul.f32 %v931, 1.442695
    %v944 = vpow.pop %v943
    %v945 = vmul.f32 %v932, 1.442695
    %v946 = vpow.pop %v945
    %v947 = vmul.f32 %v933, 1.442695
    %v948 = vpow.pop %v947
    %v949 = vmul.f32 %v934, 1.442695
    %v950 = vpow.pop %v949
    %v951 = vsel %vm886, %v936, 0.0
    %v952 = vsel %vm887, %v938, 0.0
    %v953 = vsel %vm888, %v940, 0.0
    %v954 = vsel %vm889, %v942, 0.0
    %v955 = vsel %vm890, %v944, 0.0
    %v956 = vsel %vm891, %v946, 0.0
    %v957 = vsel %vm892, %v948, 0.0
    %v958 = vsel %vm893, %v950, 0.0
    %v959 = vsel %vm902, %v951, 0.0
    %960 = vadd.xlane.f32.xlu0 %v959
    %v961 = vpop.xlane.xlu0 %960
    %v962 = vsel %vm902, %v952, 0.0
    %963 = vadd.xlane.f32.xlu0 %v962
    %v964 = vpop.xlane.xlu0 %963
    %v965 = vsel %vm902, %v953, 0.0
    %966 = vadd.xlane.f32.xlu0 %v965
    %v967 = vpop.xlane.xlu0 %966
    %v968 = vsel %vm902, %v954, 0.0
    %969 = vadd.xlane.f32.xlu0 %v968
    %v970 = vpop.xlane.xlu0 %969
    %v971 = vsel %vm902, %v955, 0.0
    %972 = vadd.xlane.f32.xlu0 %v971
    %v973 = vpop.xlane.xlu0 %972
    %v974 = vsel %vm902, %v956, 0.0
    %975 = vadd.xlane.f32.xlu0 %v974
    %v976 = vpop.xlane.xlu0 %975
    %v977 = vsel %vm902, %v957, 0.0
    %978 = vadd.xlane.f32.xlu0 %v977
    %v979 = vpop.xlane.xlu0 %978
    %v980 = vsel %vm902, %v958, 0.0
    %981 = vadd.xlane.f32.xlu0 %v980
    %v982 = vpop.xlane.xlu0 %981
    %v983 = vrcp.pop %v961
    %v984 = vrcp.pop %v964
    %v985 = vrcp.pop %v967
    %v986 = vrcp.pop %v970
    %v987 = vrcp.pop %v973
    %v988 = vrcp.pop %v976
    %v989 = vrcp.pop %v979
    %v990 = vrcp.pop %v982
    %v991 = vmul.f32 %v951, %v983
    %v992 = vmul.f32 %v952, %v984
    %v993 = vmul.f32 %v953, %v985
    %v994 = vmul.f32 %v954, %v986
    %v995 = vmul.f32 %v955, %v987
    %v996 = vmul.f32 %v956, %v988
    %v997 = vmul.f32 %v957, %v989
    %v998 = vmul.f32 %v958, %v990
    %v1000 = vsel %vm902, %v991, 0
    %1002 = vmatprep.subr.mxu0 0.0
    %1003 = vmatpush1.msra.mxu0 %v187
    %1004 = vmatprep.subr.mxu0 0.0
    %1005 = vmatpush1.msra.mxu0 0.0
    %1006 = vmatprep.subr.mxu0 0.0
    %1007 = vmatpush1.msra.mxu0 0.0
    %1008 = vmatprep.subr.mxu0 0.0
    %1009 = vmatpush1.msra.mxu0 0.0
    %1010 = vmatprep.subr.mxu0 0.0
    %1011 = vmatpush1.msra.mxu0 0.0
    %1012 = vmatprep.subr.mxu0 0.0
    %1013 = vmatpush1.msra.mxu0 0.0
    %1014 = vmatprep.subr.mxu0 0.0
    %1015 = vmatpush1.msra.mxu0 0.0
    %1016 = vmatprep.subr.mxu0 0.0
    %1017 = vmatpush1.msra.mxu0 0.0
    %1018 = vmatprep.subr.mxu0 0.0
    %1019 = vmatpush1.msra.mxu0 0.0
    %1020 = vmatprep.subr.mxu0 0.0
    %1021 = vmatpush1.msra.mxu0 0.0
    %1022 = vmatprep.subr.mxu0 0.0
    %1023 = vmatpush1.msra.mxu0 0.0
    %1024 = vmatprep.subr.mxu0 0.0
    %1025 = vmatpush1.msra.mxu0 0.0
    %1026 = vmatprep.subr.mxu0 0.0
    %1027 = vmatpush1.msra.mxu0 0.0
    %1028 = vmatprep.subr.mxu0 0.0
    %1029 = vmatpush1.msra.mxu0 0.0
    %1030 = vmatprep.subr.mxu0 0.0
    %1031 = vmatpush1.msra.mxu0 0.0
    %1032 = vmatprep.subr.mxu0 0.0
    %1033 = vmatpush1.msra.mxu0 0.0
    %1034 = vmatprep.subr.mxu0 0.0
    %1035 = vmatpush1.msra.mxu0 0.0
    %1036 = vmatprep.subr.mxu0 0.0
    %1037 = vmatpush1.msra.mxu0 0.0
    %1038 = vmatprep.subr.mxu0 0.0
    %1039 = vmatpush1.msra.mxu0 0.0
    %1040 = vmatprep.subr.mxu0 0.0
    %1041 = vmatpush1.msra.mxu0 0.0
    %1042 = vmatprep.subr.mxu0 0.0
    %1043 = vmatpush1.msra.mxu0 0.0
    %1044 = vmatprep.subr.mxu0 0.0
    %1045 = vmatpush1.msra.mxu0 0.0
    %1046 = vmatprep.subr.mxu0 0.0
    %1047 = vmatpush1.msra.mxu0 0.0
    %1048 = vmatprep.subr.mxu0 0.0
    %1049 = vmatpush1.msra.mxu0 0.0
    %1050 = vmatprep.subr.mxu0 0.0
    %1051 = vmatpush1.msra.mxu0 0.0
    %1052 = vmatprep.subr.mxu0 0.0
    %1053 = vmatpush1.msra.mxu0 0.0
    %1054 = vmatprep.subr.mxu0 0.0
    %1055 = vmatpush1.msra.mxu0 0.0
    %1056 = vmatprep.subr.mxu0 0.0
    %1057 = vmatpush1.msra.mxu0 0.0
    %1058 = vmatprep.subr.mxu0 0.0
    %1059 = vmatpush1.msra.mxu0 0.0
    %1060 = vmatprep.subr.mxu0 0.0
    %1061 = vmatpush1.msra.mxu0 0.0
    %1062 = vmatprep.subr.mxu0 0.0
    %1063 = vmatpush1.msra.mxu0 0.0
    %1064 = vmatprep.subr.mxu0 0.0
    %1065 = vmatpush1.msra.mxu0 0.0
    %1066 = vmatprep.mubr.f32.mxu0 0.0
    %1067 = vmatmul.mubr.f32.gmra.mrb[0].mxu0 %v1000
    %v1068 = vpop.f32.mrb[0].mxu0
    %v1069 = vadd.f32 0.0, %v1068
    %v1070 = vpop.f32.mrb[0].mxu0
    %1071 = vdwg.mxu0
    %v1073 = vsel %vm902, %v992, 0
    %1075 = vmatprep.subr.mxu0 0.0
    %1076 = vmatpush1.msra.mxu0 %v188
    %1077 = vmatprep.subr.mxu0 0.0
    %1078 = vmatpush1.msra.mxu0 0.0
    %1079 = vmatprep.subr.mxu0 0.0
    %1080 = vmatpush1.msra.mxu0 0.0
    %1081 = vmatprep.subr.mxu0 0.0
    %1082 = vmatpush1.msra.mxu0 0.0
    %1083 = vmatprep.subr.mxu0 0.0
    %1084 = vmatpush1.msra.mxu0 0.0
    %1085 = vmatprep.subr.mxu0 0.0
    %1086 = vmatpush1.msra.mxu0 0.0
    %1087 = vmatprep.subr.mxu0 0.0
    %1088 = vmatpush1.msra.mxu0 0.0
    %1089 = vmatprep.subr.mxu0 0.0
    %1090 = vmatpush1.msra.mxu0 0.0
    %1091 = vmatprep.subr.mxu0 0.0
    %1092 = vmatpush1.msra.mxu0 0.0
    %1093 = vmatprep.subr.mxu0 0.0
    %1094 = vmatpush1.msra.mxu0 0.0
    %1095 = vmatprep.subr.mxu0 0.0
    %1096 = vmatpush1.msra.mxu0 0.0
    %1097 = vmatprep.subr.mxu0 0.0
    %1098 = vmatpush1.msra.mxu0 0.0
    %1099 = vmatprep.subr.mxu0 0.0
    %1100 = vmatpush1.msra.mxu0 0.0
    %1101 = vmatprep.subr.mxu0 0.0
    %1102 = vmatpush1.msra.mxu0 0.0
    %1103 = vmatprep.subr.mxu0 0.0
    %1104 = vmatpush1.msra.mxu0 0.0
    %1105 = vmatprep.subr.mxu0 0.0
    %1106 = vmatpush1.msra.mxu0 0.0
    %1107 = vmatprep.subr.mxu0 0.0
    %1108 = vmatpush1.msra.mxu0 0.0
    %1109 = vmatprep.subr.mxu0 0.0
    %1110 = vmatpush1.msra.mxu0 0.0
    %1111 = vmatprep.subr.mxu0 0.0
    %1112 = vmatpush1.msra.mxu0 0.0
    %1113 = vmatprep.subr.mxu0 0.0
    %1114 = vmatpush1.msra.mxu0 0.0
    %1115 = vmatprep.subr.mxu0 0.0
    %1116 = vmatpush1.msra.mxu0 0.0
    %1117 = vmatprep.subr.mxu0 0.0
    %1118 = vmatpush1.msra.mxu0 0.0
    %1119 = vmatprep.subr.mxu0 0.0
    %1120 = vmatpush1.msra.mxu0 0.0
    %1121 = vmatprep.subr.mxu0 0.0
    %1122 = vmatpush1.msra.mxu0 0.0
    %1123 = vmatprep.subr.mxu0 0.0
    %1124 = vmatpush1.msra.mxu0 0.0
    %1125 = vmatprep.subr.mxu0 0.0
    %1126 = vmatpush1.msra.mxu0 0.0
    %1127 = vmatprep.subr.mxu0 0.0
    %1128 = vmatpush1.msra.mxu0 0.0
    %1129 = vmatprep.subr.mxu0 0.0
    %1130 = vmatpush1.msra.mxu0 0.0
    %1131 = vmatprep.subr.mxu0 0.0
    %1132 = vmatpush1.msra.mxu0 0.0
    %1133 = vmatprep.subr.mxu0 0.0
    %1134 = vmatpush1.msra.mxu0 0.0
    %1135 = vmatprep.subr.mxu0 0.0
    %1136 = vmatpush1.msra.mxu0 0.0
    %1137 = vmatprep.subr.mxu0 0.0
    %1138 = vmatpush1.msra.mxu0 0.0
    %1139 = vmatprep.mubr.f32.mxu0 0.0
    %1140 = vmatmul.mubr.f32.gmra.mrb[0].mxu0 %v1073
    %v1141 = vpop.f32.mrb[0].mxu0
    %v1142 = vadd.f32 0.0, %v1141
    %v1143 = vpop.f32.mrb[0].mxu0
    %1144 = vdwg.mxu0
    %v1146 = vsel %vm902, %v993, 0
    %1148 = vmatprep.subr.mxu0 0.0
    %1149 = vmatpush1.msra.mxu0 %v189
    %1150 = vmatprep.subr.mxu0 0.0
    %1151 = vmatpush1.msra.mxu0 0.0
    %1152 = vmatprep.subr.mxu0 0.0
    %1153 = vmatpush1.msra.mxu0 0.0
    %1154 = vmatprep.subr.mxu0 0.0
    %1155 = vmatpush1.msra.mxu0 0.0
    %1156 = vmatprep.subr.mxu0 0.0
    %1157 = vmatpush1.msra.mxu0 0.0
    %1158 = vmatprep.subr.mxu0 0.0
    %1159 = vmatpush1.msra.mxu0 0.0
    %1160 = vmatprep.subr.mxu0 0.0
    %1161 = vmatpush1.msra.mxu0 0.0
    %1162 = vmatprep.subr.mxu0 0.0
    %1163 = vmatpush1.msra.mxu0 0.0
    %1164 = vmatprep.subr.mxu0 0.0
    %1165 = vmatpush1.msra.mxu0 0.0
    %1166 = vmatprep.subr.mxu0 0.0
    %1167 = vmatpush1.msra.mxu0 0.0
    %1168 = vmatprep.subr.mxu0 0.0
    %1169 = vmatpush1.msra.mxu0 0.0
    %1170 = vmatprep.subr.mxu0 0.0
    %1171 = vmatpush1.msra.mxu0 0.0
    %1172 = vmatprep.subr.mxu0 0.0
    %1173 = vmatpush1.msra.mxu0 0.0
    %1174 = vmatprep.subr.mxu0 0.0
    %1175 = vmatpush1.msra.mxu0 0.0
    %1176 = vmatprep.subr.mxu0 0.0
    %1177 = vmatpush1.msra.mxu0 0.0
    %1178 = vmatprep.subr.mxu0 0.0
    %1179 = vmatpush1.msra.mxu0 0.0
    %1180 = vmatprep.subr.mxu0 0.0
    %1181 = vmatpush1.msra.mxu0 0.0
    %1182 = vmatprep.subr.mxu0 0.0
    %1183 = vmatpush1.msra.mxu0 0.0
    %1184 = vmatprep.subr.mxu0 0.0
    %1185 = vmatpush1.msra.mxu0 0.0
    %1186 = vmatprep.subr.mxu0 0.0
    %1187 = vmatpush1.msra.mxu0 0.0
    %1188 = vmatprep.subr.mxu0 0.0
    %1189 = vmatpush1.msra.mxu0 0.0
    %1190 = vmatprep.subr.mxu0 0.0
    %1191 = vmatpush1.msra.mxu0 0.0
    %1192 = vmatprep.subr.mxu0 0.0
    %1193 = vmatpush1.msra.mxu0 0.0
    %1194 = vmatprep.subr.mxu0 0.0
    %1195 = vmatpush1.msra.mxu0 0.0
    %1196 = vmatprep.subr.mxu0 0.0
    %1197 = vmatpush1.msra.mxu0 0.0
    %1198 = vmatprep.subr.mxu0 0.0
    %1199 = vmatpush1.msra.mxu0 0.0
    %1200 = vmatprep.subr.mxu0 0.0
    %1201 = vmatpush1.msra.mxu0 0.0
    %1202 = vmatprep.subr.mxu0 0.0
    %1203 = vmatpush1.msra.mxu0 0.0
    %1204 = vmatprep.subr.mxu0 0.0
    %1205 = vmatpush1.msra.mxu0 0.0
    %1206 = vmatprep.subr.mxu0 0.0
    %1207 = vmatpush1.msra.mxu0 0.0
    %1208 = vmatprep.subr.mxu0 0.0
    %1209 = vmatpush1.msra.mxu0 0.0
    %1210 = vmatprep.subr.mxu0 0.0
    %1211 = vmatpush1.msra.mxu0 0.0
    %1212 = vmatprep.mubr.f32.mxu0 0.0
    %1213 = vmatmul.mubr.f32.gmra.mrb[0].mxu0 %v1146
    %v1214 = vpop.f32.mrb[0].mxu0
    %v1215 = vadd.f32 0.0, %v1214
    %v1216 = vpop.f32.mrb[0].mxu0
    %1217 = vdwg.mxu0
    %v1219 = vsel %vm902, %v994, 0
    %1221 = vmatprep.subr.mxu0 0.0
    %1222 = vmatpush1.msra.mxu0 %v190
    %1223 = vmatprep.subr.mxu0 0.0
    %1224 = vmatpush1.msra.mxu0 0.0
    %1225 = vmatprep.subr.mxu0 0.0
    %1226 = vmatpush1.msra.mxu0 0.0
    %1227 = vmatprep.subr.mxu0 0.0
    %1228 = vmatpush1.msra.mxu0 0.0
    %1229 = vmatprep.subr.mxu0 0.0
    %1230 = vmatpush1.msra.mxu0 0.0
    %1231 = vmatprep.subr.mxu0 0.0
    %1232 = vmatpush1.msra.mxu0 0.0
    %1233 = vmatprep.subr.mxu0 0.0
    %1234 = vmatpush1.msra.mxu0 0.0
    %1235 = vmatprep.subr.mxu0 0.0
    %1236 = vmatpush1.msra.mxu0 0.0
    %1237 = vmatprep.subr.mxu0 0.0
    %1238 = vmatpush1.msra.mxu0 0.0
    %1239 = vmatprep.subr.mxu0 0.0
    %1240 = vmatpush1.msra.mxu0 0.0
    %1241 = vmatprep.subr.mxu0 0.0
    %1242 = vmatpush1.msra.mxu0 0.0
    %1243 = vmatprep.subr.mxu0 0.0
    %1244 = vmatpush1.msra.mxu0 0.0
    %1245 = vmatprep.subr.mxu0 0.0
    %1246 = vmatpush1.msra.mxu0 0.0
    %1247 = vmatprep.subr.mxu0 0.0
    %1248 = vmatpush1.msra.mxu0 0.0
    %1249 = vmatprep.subr.mxu0 0.0
    %1250 = vmatpush1.msra.mxu0 0.0
    %1251 = vmatprep.subr.mxu0 0.0
    %1252 = vmatpush1.msra.mxu0 0.0
    %1253 = vmatprep.subr.mxu0 0.0
    %1254 = vmatpush1.msra.mxu0 0.0
    %1255 = vmatprep.subr.mxu0 0.0
    %1256 = vmatpush1.msra.mxu0 0.0
    %1257 = vmatprep.subr.mxu0 0.0
    %1258 = vmatpush1.msra.mxu0 0.0
    %1259 = vmatprep.subr.mxu0 0.0
    %1260 = vmatpush1.msra.mxu0 0.0
    %1261 = vmatprep.subr.mxu0 0.0
    %1262 = vmatpush1.msra.mxu0 0.0
    %1263 = vmatprep.subr.mxu0 0.0
    %1264 = vmatpush1.msra.mxu0 0.0
    %1265 = vmatprep.subr.mxu0 0.0
    %1266 = vmatpush1.msra.mxu0 0.0
    %1267 = vmatprep.subr.mxu0 0.0
    %1268 = vmatpush1.msra.mxu0 0.0
    %1269 = vmatprep.subr.mxu0 0.0
    %1270 = vmatpush1.msra.mxu0 0.0
    %1271 = vmatprep.subr.mxu0 0.0
    %1272 = vmatpush1.msra.mxu0 0.0
    %1273 = vmatprep.subr.mxu0 0.0
    %1274 = vmatpush1.msra.mxu0 0.0
    %1275 = vmatprep.subr.mxu0 0.0
    %1276 = vmatpush1.msra.mxu0 0.0
    %1277 = vmatprep.subr.mxu0 0.0
    %1278 = vmatpush1.msra.mxu0 0.0
    %1279 = vmatprep.subr.mxu0 0.0
    %1280 = vmatpush1.msra.mxu0 0.0
    %1281 = vmatprep.subr.mxu0 0.0
    %1282 = vmatpush1.msra.mxu0 0.0
    %1283 = vmatprep.subr.mxu0 0.0
    %1284 = vmatpush1.msra.mxu0 0.0
    %1285 = vmatprep.mubr.f32.mxu0 0.0
    %1286 = vmatmul.mubr.f32.gmra.mrb[0].mxu0 %v1219
    %v1287 = vpop.f32.mrb[0].mxu0
    %v1288 = vadd.f32 0.0, %v1287
    %v1289 = vpop.f32.mrb[0].mxu0
    %1290 = vdwg.mxu0
    %v1292 = vsel %vm902, %v995, 0
    %1294 = vmatprep.subr.mxu0 0.0
    %1295 = vmatpush1.msra.mxu0 %v191
    %1296 = vmatprep.subr.mxu0 0.0
    %1297 = vmatpush1.msra.mxu0 0.0
    %1298 = vmatprep.subr.mxu0 0.0
    %1299 = vmatpush1.msra.mxu0 0.0
    %1300 = vmatprep.subr.mxu0 0.0
    %1301 = vmatpush1.msra.mxu0 0.0
    %1302 = vmatprep.subr.mxu0 0.0
    %1303 = vmatpush1.msra.mxu0 0.0
    %1304 = vmatprep.subr.mxu0 0.0
    %1305 = vmatpush1.msra.mxu0 0.0
    %1306 = vmatprep.subr.mxu0 0.0
    %1307 = vmatpush1.msra.mxu0 0.0
    %1308 = vmatprep.subr.mxu0 0.0
    %1309 = vmatpush1.msra.mxu0 0.0
    %1310 = vmatprep.subr.mxu0 0.0
    %1311 = vmatpush1.msra.mxu0 0.0
    %1312 = vmatprep.subr.mxu0 0.0
    %1313 = vmatpush1.msra.mxu0 0.0
    %1314 = vmatprep.subr.mxu0 0.0
    %1315 = vmatpush1.msra.mxu0 0.0
    %1316 = vmatprep.subr.mxu0 0.0
    %1317 = vmatpush1.msra.mxu0 0.0
    %1318 = vmatprep.subr.mxu0 0.0
    %1319 = vmatpush1.msra.mxu0 0.0
    %1320 = vmatprep.subr.mxu0 0.0
    %1321 = vmatpush1.msra.mxu0 0.0
    %1322 = vmatprep.subr.mxu0 0.0
    %1323 = vmatpush1.msra.mxu0 0.0
    %1324 = vmatprep.subr.mxu0 0.0
    %1325 = vmatpush1.msra.mxu0 0.0
    %1326 = vmatprep.subr.mxu0 0.0
    %1327 = vmatpush1.msra.mxu0 0.0
    %1328 = vmatprep.subr.mxu0 0.0
    %1329 = vmatpush1.msra.mxu0 0.0
    %1330 = vmatprep.subr.mxu0 0.0
    %1331 = vmatpush1.msra.mxu0 0.0
    %1332 = vmatprep.subr.mxu0 0.0
    %1333 = vmatpush1.msra.mxu0 0.0
    %1334 = vmatprep.subr.mxu0 0.0
    %1335 = vmatpush1.msra.mxu0 0.0
    %1336 = vmatprep.subr.mxu0 0.0
    %1337 = vmatpush1.msra.mxu0 0.0
    %1338 = vmatprep.subr.mxu0 0.0
    %1339 = vmatpush1.msra.mxu0 0.0
    %1340 = vmatprep.subr.mxu0 0.0
    %1341 = vmatpush1.msra.mxu0 0.0
    %1342 = vmatprep.subr.mxu0 0.0
    %1343 = vmatpush1.msra.mxu0 0.0
    %1344 = vmatprep.subr.mxu0 0.0
    %1345 = vmatpush1.msra.mxu0 0.0
    %1346 = vmatprep.subr.mxu0 0.0
    %1347 = vmatpush1.msra.mxu0 0.0
    %1348 = vmatprep.subr.mxu0 0.0
    %1349 = vmatpush1.msra.mxu0 0.0
    %1350 = vmatprep.subr.mxu0 0.0
    %1351 = vmatpush1.msra.mxu0 0.0
    %1352 = vmatprep.subr.mxu0 0.0
    %1353 = vmatpush1.msra.mxu0 0.0
    %1354 = vmatprep.subr.mxu0 0.0
    %1355 = vmatpush1.msra.mxu0 0.0
    %1356 = vmatprep.subr.mxu0 0.0
    %1357 = vmatpush1.msra.mxu0 0.0
    %1358 = vmatprep.mubr.f32.mxu0 0.0
    %1359 = vmatmul.mubr.f32.gmra.mrb[0].mxu0 %v1292
    %v1360 = vpop.f32.mrb[0].mxu0
    %v1361 = vadd.f32 0.0, %v1360
    %v1362 = vpop.f32.mrb[0].mxu0
    %1363 = vdwg.mxu0
    %v1365 = vsel %vm902, %v996, 0
    %1367 = vmatprep.subr.mxu0 0.0
    %1368 = vmatpush1.msra.mxu0 %v192
    %1369 = vmatprep.subr.mxu0 0.0
    %1370 = vmatpush1.msra.mxu0 0.0
    %1371 = vmatprep.subr.mxu0 0.0
    %1372 = vmatpush1.msra.mxu0 0.0
    %1373 = vmatprep.subr.mxu0 0.0
    %1374 = vmatpush1.msra.mxu0 0.0
    %1375 = vmatprep.subr.mxu0 0.0
    %1376 = vmatpush1.msra.mxu0 0.0
    %1377 = vmatprep.subr.mxu0 0.0
    %1378 = vmatpush1.msra.mxu0 0.0
    %1379 = vmatprep.subr.mxu0 0.0
    %1380 = vmatpush1.msra.mxu0 0.0
    %1381 = vmatprep.subr.mxu0 0.0
    %1382 = vmatpush1.msra.mxu0 0.0
    %1383 = vmatprep.subr.mxu0 0.0
    %1384 = vmatpush1.msra.mxu0 0.0
    %1385 = vmatprep.subr.mxu0 0.0
    %1386 = vmatpush1.msra.mxu0 0.0
    %1387 = vmatprep.subr.mxu0 0.0
    %1388 = vmatpush1.msra.mxu0 0.0
    %1389 = vmatprep.subr.mxu0 0.0
    %1390 = vmatpush1.msra.mxu0 0.0
    %1391 = vmatprep.subr.mxu0 0.0
    %1392 = vmatpush1.msra.mxu0 0.0
    %1393 = vmatprep.subr.mxu0 0.0
    %1394 = vmatpush1.msra.mxu0 0.0
    %1395 = vmatprep.subr.mxu0 0.0
    %1396 = vmatpush1.msra.mxu0 0.0
    %1397 = vmatprep.subr.mxu0 0.0
    %1398 = vmatpush1.msra.mxu0 0.0
    %1399 = vmatprep.subr.mxu0 0.0
    %1400 = vmatpush1.msra.mxu0 0.0
    %1401 = vmatprep.subr.mxu0 0.0
    %1402 = vmatpush1.msra.mxu0 0.0
    %1403 = vmatprep.subr.mxu0 0.0
    %1404 = vmatpush1.msra.mxu0 0.0
    %1405 = vmatprep.subr.mxu0 0.0
    %1406 = vmatpush1.msra.mxu0 0.0
    %1407 = vmatprep.subr.mxu0 0.0
    %1408 = vmatpush1.msra.mxu0 0.0
    %1409 = vmatprep.subr.mxu0 0.0
    %1410 = vmatpush1.msra.mxu0 0.0
    %1411 = vmatprep.subr.mxu0 0.0
    %1412 = vmatpush1.msra.mxu0 0.0
    %1413 = vmatprep.subr.mxu0 0.0
    %1414 = vmatpush1.msra.mxu0 0.0
    %1415 = vmatprep.subr.mxu0 0.0
    %1416 = vmatpush1.msra.mxu0 0.0
    %1417 = vmatprep.subr.mxu0 0.0
    %1418 = vmatpush1.msra.mxu0 0.0
    %1419 = vmatprep.subr.mxu0 0.0
    %1420 = vmatpush1.msra.mxu0 0.0
    %1421 = vmatprep.subr.mxu0 0.0
    %1422 = vmatpush1.msra.mxu0 0.0
    %1423 = vmatprep.subr.mxu0 0.0
    %1424 = vmatpush1.msra.mxu0 0.0
    %1425 = vmatprep.subr.mxu0 0.0
    %1426 = vmatpush1.msra.mxu0 0.0
    %1427 = vmatprep.subr.mxu0 0.0
    %1428 = vmatpush1.msra.mxu0 0.0
    %1429 = vmatprep.subr.mxu0 0.0
    %1430 = vmatpush1.msra.mxu0 0.0
    %1431 = vmatprep.mubr.f32.mxu0 0.0
    %1432 = vmatmul.mubr.f32.gmra.mrb[0].mxu0 %v1365
    %v1433 = vpop.f32.mrb[0].mxu0
    %v1434 = vadd.f32 0.0, %v1433
    %v1435 = vpop.f32.mrb[0].mxu0
    %1436 = vdwg.mxu0
    %v1438 = vsel %vm902, %v997, 0
    %1440 = vmatprep.subr.mxu0 0.0
    %1441 = vmatpush1.msra.mxu0 %v193
    %1442 = vmatprep.subr.mxu0 0.0
    %1443 = vmatpush1.msra.mxu0 0.0
    %1444 = vmatprep.subr.mxu0 0.0
    %1445 = vmatpush1.msra.mxu0 0.0
    %1446 = vmatprep.subr.mxu0 0.0
    %1447 = vmatpush1.msra.mxu0 0.0
    %1448 = vmatprep.subr.mxu0 0.0
    %1449 = vmatpush1.msra.mxu0 0.0
    %1450 = vmatprep.subr.mxu0 0.0
    %1451 = vmatpush1.msra.mxu0 0.0
    %1452 = vmatprep.subr.mxu0 0.0
    %1453 = vmatpush1.msra.mxu0 0.0
    %1454 = vmatprep.subr.mxu0 0.0
    %1455 = vmatpush1.msra.mxu0 0.0
    %1456 = vmatprep.subr.mxu0 0.0
    %1457 = vmatpush1.msra.mxu0 0.0
    %1458 = vmatprep.subr.mxu0 0.0
    %1459 = vmatpush1.msra.mxu0 0.0
    %1460 = vmatprep.subr.mxu0 0.0
    %1461 = vmatpush1.msra.mxu0 0.0
    %1462 = vmatprep.subr.mxu0 0.0
    %1463 = vmatpush1.msra.mxu0 0.0
    %1464 = vmatprep.subr.mxu0 0.0
    %1465 = vmatpush1.msra.mxu0 0.0
    %1466 = vmatprep.subr.mxu0 0.0
    %1467 = vmatpush1.msra.mxu0 0.0
    %1468 = vmatprep.subr.mxu0 0.0
    %1469 = vmatpush1.msra.mxu0 0.0
    %1470 = vmatprep.subr.mxu0 0.0
    %1471 = vmatpush1.msra.mxu0 0.0
    %1472 = vmatprep.subr.mxu0 0.0
    %1473 = vmatpush1.msra.mxu0 0.0
    %1474 = vmatprep.subr.mxu0 0.0
    %1475 = vmatpush1.msra.mxu0 0.0
    %1476 = vmatprep.subr.mxu0 0.0
    %1477 = vmatpush1.msra.mxu0 0.0
    %1478 = vmatprep.subr.mxu0 0.0
    %1479 = vmatpush1.msra.mxu0 0.0
    %1480 = vmatprep.subr.mxu0 0.0
    %1481 = vmatpush1.msra.mxu0 0.0
    %1482 = vmatprep.subr.mxu0 0.0
    %1483 = vmatpush1.msra.mxu0 0.0
    %1484 = vmatprep.subr.mxu0 0.0
    %1485 = vmatpush1.msra.mxu0 0.0
    %1486 = vmatprep.subr.mxu0 0.0
    %1487 = vmatpush1.msra.mxu0 0.0
    %1488 = vmatprep.subr.mxu0 0.0
    %1489 = vmatpush1.msra.mxu0 0.0
    %1490 = vmatprep.subr.mxu0 0.0
    %1491 = vmatpush1.msra.mxu0 0.0
    %1492 = vmatprep.subr.mxu0 0.0
    %1493 = vmatpush1.msra.mxu0 0.0
    %1494 = vmatprep.subr.mxu0 0.0
    %1495 = vmatpush1.msra.mxu0 0.0
    %1496 = vmatprep.subr.mxu0 0.0
    %1497 = vmatpush1.msra.mxu0 0.0
    %1498 = vmatprep.subr.mxu0 0.0
    %1499 = vmatpush1.msra.mxu0 0.0
    %1500 = vmatprep.subr.mxu0 0.0
    %1501 = vmatpush1.msra.mxu0 0.0
    %1502 = vmatprep.subr.mxu0 0.0
    %1503 = vmatpush1.msra.mxu0 0.0
    %1504 = vmatprep.mubr.f32.mxu0 0.0
    %1505 = vmatmul.mubr.f32.gmra.mrb[0].mxu0 %v1438
    %v1506 = vpop.f32.mrb[0].mxu0
    %v1507 = vadd.f32 0.0, %v1506
    %v1508 = vpop.f32.mrb[0].mxu0
    %1509 = vdwg.mxu0
    %v1511 = vsel %vm902, %v998, 0
    %1513 = vmatprep.subr.mxu0 0.0
    %1514 = vmatpush1.msra.mxu0 %v194
    %1515 = vmatprep.subr.mxu0 0.0
    %1516 = vmatpush1.msra.mxu0 0.0
    %1517 = vmatprep.subr.mxu0 0.0
    %1518 = vmatpush1.msra.mxu0 0.0
    %1519 = vmatprep.subr.mxu0 0.0
    %1520 = vmatpush1.msra.mxu0 0.0
    %1521 = vmatprep.subr.mxu0 0.0
    %1522 = vmatpush1.msra.mxu0 0.0
    %1523 = vmatprep.subr.mxu0 0.0
    %1524 = vmatpush1.msra.mxu0 0.0
    %1525 = vmatprep.subr.mxu0 0.0
    %1526 = vmatpush1.msra.mxu0 0.0
    %1527 = vmatprep.subr.mxu0 0.0
    %1528 = vmatpush1.msra.mxu0 0.0
    %1529 = vmatprep.subr.mxu0 0.0
    %1530 = vmatpush1.msra.mxu0 0.0
    %1531 = vmatprep.subr.mxu0 0.0
    %1532 = vmatpush1.msra.mxu0 0.0
    %1533 = vmatprep.subr.mxu0 0.0
    %1534 = vmatpush1.msra.mxu0 0.0
    %1535 = vmatprep.subr.mxu0 0.0
    %1536 = vmatpush1.msra.mxu0 0.0
    %1537 = vmatprep.subr.mxu0 0.0
    %1538 = vmatpush1.msra.mxu0 0.0
    %1539 = vmatprep.subr.mxu0 0.0
    %1540 = vmatpush1.msra.mxu0 0.0
    %1541 = vmatprep.subr.mxu0 0.0
    %1542 = vmatpush1.msra.mxu0 0.0
    %1543 = vmatprep.subr.mxu0 0.0
    %1544 = vmatpush1.msra.mxu0 0.0
    %1545 = vmatprep.subr.mxu0 0.0
    %1546 = vmatpush1.msra.mxu0 0.0
    %1547 = vmatprep.subr.mxu0 0.0
    %1548 = vmatpush1.msra.mxu0 0.0
    %1549 = vmatprep.subr.mxu0 0.0
    %1550 = vmatpush1.msra.mxu0 0.0
    %1551 = vmatprep.subr.mxu0 0.0
    %1552 = vmatpush1.msra.mxu0 0.0
    %1553 = vmatprep.subr.mxu0 0.0
    %1554 = vmatpush1.msra.mxu0 0.0
    %1555 = vmatprep.subr.mxu0 0.0
    %1556 = vmatpush1.msra.mxu0 0.0
    %1557 = vmatprep.subr.mxu0 0.0
    %1558 = vmatpush1.msra.mxu0 0.0
    %1559 = vmatprep.subr.mxu0 0.0
    %1560 = vmatpush1.msra.mxu0 0.0
    %1561 = vmatprep.subr.mxu0 0.0
    %1562 = vmatpush1.msra.mxu0 0.0
    %1563 = vmatprep.subr.mxu0 0.0
    %1564 = vmatpush1.msra.mxu0 0.0
    %1565 = vmatprep.subr.mxu0 0.0
    %1566 = vmatpush1.msra.mxu0 0.0
    %1567 = vmatprep.subr.mxu0 0.0
    %1568 = vmatpush1.msra.mxu0 0.0
    %1569 = vmatprep.subr.mxu0 0.0
    %1570 = vmatpush1.msra.mxu0 0.0
    %1571 = vmatprep.subr.mxu0 0.0
    %1572 = vmatpush1.msra.mxu0 0.0
    %1573 = vmatprep.subr.mxu0 0.0
    %1574 = vmatpush1.msra.mxu0 0.0
    %1575 = vmatprep.subr.mxu0 0.0
    %1576 = vmatpush1.msra.mxu0 0.0
    %1577 = vmatprep.mubr.f32.mxu0 0.0
    %1578 = vmatmul.mubr.f32.gmra.mrb[0].mxu0 %v1511
    %v1579 = vpop.f32.mrb[0].mxu0
    %v1580 = vadd.f32 0.0, %v1579
    %v1581 = vpop.f32.mrb[0].mxu0
    %1582 = vdwg.mxu0
    %1583 = vst.msk [vmem:[#allocation6] sm:$0xff] %vm902, %v991
    %1584 = vst.msk [vmem:[#allocation6 + $0x8] sm:$0xff] %vm902, %v992
    %1585 = vst.msk [vmem:[#allocation6 + $0x10] sm:$0xff] %vm902, %v993
    %1586 = vst.msk [vmem:[#allocation6 + $0x18] sm:$0xff] %vm902, %v994
    %1587 = vst.msk [vmem:[#allocation6 + $0x20] sm:$0xff] %vm902, %v995
    %1588 = vst.msk [vmem:[#allocation6 + $0x28] sm:$0xff] %vm902, %v996
    %1589 = vst.msk [vmem:[#allocation6 + $0x30] sm:$0xff] %vm902, %v997
    %1590 = vst.msk [vmem:[#allocation6 + $0x38] sm:$0xff] %vm902, %v998
    %1591 = vst.msk [vmem:[#allocation5] sm:$0xff] %vm195, %v1069
    %1592 = vst.msk [vmem:[#allocation5 + $0x8] sm:$0xff] %vm195, %v1142
    %1593 = vst.msk [vmem:[#allocation5 + $0x10] sm:$0xff] %vm195, %v1215
    %1594 = vst.msk [vmem:[#allocation5 + $0x18] sm:$0xff] %vm195, %v1288
    %1595 = vst.msk [vmem:[#allocation5 + $0x20] sm:$0xff] %vm195, %v1361
    %1596 = vst.msk [vmem:[#allocation5 + $0x28] sm:$0xff] %vm195, %v1434
    %1597 = vst.msk [vmem:[#allocation5 + $0x30] sm:$0xff] %vm195, %v1507
    %1598 = vst.msk [vmem:[#allocation5 + $0x38] sm:$0xff] %vm195, %v1580
    // Predicated region
    $region26: #{tpu_custom_call.1} parent=1 // pred_check
      _
    $region27: #{tpu_custom_call.1} parent=1 // pred_check_branch
      %1600 = sbr.rel (0) target = $region29
    $region28: #{tpu_custom_call.1} parent=1 // pred_region
      %s1602 = ssub.s32 1024, 1024
      %1603 = vsyncadd [#allocation4], %s1602
      %s1604 = sshll.u32 [#allocation5], 4
      %s1605 = int_to_ptr.vmem [resolvable:$true] %s1604
      %1610 = dma.vmem_to_hbm [thread:$0]  %s1605, 1024, %s5, [#allocation4], 128, 128, 8
    $region29: #{tpu_custom_call.1} parent=1 // pred_fallthru
      _
    // Predicated region
    $region30: #{tpu_custom_call.1} parent=1 // pred_check
      _
    $region31: #{tpu_custom_call.1} parent=1 // pred_check_branch
      %1612 = sbr.rel (0) target = $region33
    $region32: #{tpu_custom_call.1} parent=1 // pred_region
      %s1614 = ssub.s32 1024, 1024
      %1615 = vsyncadd [#allocation7], %s1614
      %s1616 = sshll.u32 [#allocation6], 4
      %s1617 = int_to_ptr.vmem [resolvable:$true] %s1616
      %1622 = dma.vmem_to_hbm [thread:$0]  %s1617, 1024, %s6, [#allocation7], 128, 128, 8
    $region33: #{tpu_custom_call.1} parent=1 // pred_fallthru
      _
    // Predicated region
    $region34: #{tpu_custom_call.1} parent=1 // pred_check
      _
    $region35: #{tpu_custom_call.1} parent=1 // pred_check_branch
      %1624 = sbr.rel (0) target = $region37
    $region36: #{tpu_custom_call.1} parent=1 // pred_region
      %1625 = dma.done [#allocation4], 1024
    $region37: #{tpu_custom_call.1} parent=1 // pred_fallthru
      _
    // Predicated region
    $region38: #{tpu_custom_call.1} parent=1 // pred_check
      _
    $region39: #{tpu_custom_call.1} parent=1 // pred_check_branch
      %1627 = sbr.rel (0) target = $region41
    $region40: #{tpu_custom_call.1} parent=1 // pred_region
      %1628 = dma.done [#allocation7], 1024
    $region41: #{tpu_custom_call.1} parent=1 // pred_fallthru
      _
    %1629 = vsyncpa [#allocation3], 1
    %1630 = vsyncpa [#allocation4], 1
    %1631 = vsyncpa [#allocation7], 1

</llo_original>
